<compile_context>
chip_gen: v7x
topology: tpu7x:2x2x1
jax: 0.10.0
libtpu: 0.0.40
codegen_flags: <defaults>
</compile_context>

<pallas_src>
import functools

import jax
import jax.numpy as jnp
from jax.experimental import pallas as pl
from jax.experimental.pallas import tpu as pltpu

BN_EPS = 1e-5

# MXU operand dtype (f32 accumulation via preferred_element_type).  bf16 is the native
# MXU operand width on v5e / v6e / v7x; flip to float32 only for debugging.
_MM_DTYPE = jnp.bfloat16


def _mm(a, b):
    return jnp.dot(a.astype(_MM_DTYPE), b.astype(_MM_DTYPE),
                   preferred_element_type=jnp.float32)


def _silu(v):
    return v * jax.nn.sigmoid(v)


def _round_up(v, m):
    return (v + m - 1) // m * m


# ----------------------------- fused Pallas kernel ---------------------------

def _make_fused_kernel(n_bneck, Cy, hidden, H, W):
    """Build the fused DownsamplingBlock kernel for a static configuration."""
    M = H * W
    HALO = _round_up(W + 1, 8)        # sublane-aligned halo, covers the +/-(W+1) row shifts
    ROWS = M + 2 * HALO
    taps = [(dy, dx) for dy in (-1, 0, 1) for dx in (-1, 0, 1)]

    def kernel(*refs):
        # refs = (x4, yv, w12y, w12t, b12, [wc1, bc1, wc2, bc2] * n, w3a, w3b, b3,
        #         out, pad_scratch)
        x4_ref, yv_ref, w12y_ref, w12t_ref, b12_ref = refs[:5]
        bot = refs[5:5 + 4 * n_bneck]
        w3a_ref, w3b_ref, b3_ref = refs[5 + 4 * n_bneck:8 + 4 * n_bneck]
        o_ref = refs[8 + 4 * n_bneck]
        pad_ref = refs[9 + 4 * n_bneck]

        # ---- DownSampling: 2x2 stride-2 max-pool computed in-kernel from the free
        # (H, 2W, 2Cy) view of NHWC x (dim1 = dy*W + w, dim2 = dx*Cy + c).
        # TODO(synk): DownSampling(act) is not defined in the provided spec; assumed to
        # be a channel-preserving 2x2 stride-2 max-pool ('act' unused), which is what
        # the channel bookkeeping of the surrounding block implies.
        x4 = x4_ref[0]                                          # (H, 2W, 2Cy)
        rmax = jnp.maximum(x4[:, :W, :], x4[:, W:, :])          # max over the row pair
        y_t = jnp.maximum(rmax[:, :, :Cy], rmax[:, :, Cy:])     # max over the column pair
        y_t = y_t.reshape(M, Cy)                                # (M, Cy) pixel-major

        yv = yv_ref[0]                                          # (M, Cy)

        # ---- conv1 & conv2 (1x1 + BN + SiLU) fused, concat-free via split-K accumulate
        z = _silu(_mm(yv, w12y_ref[...]) + _mm(y_t, w12t_ref[...]) + b12_ref[...])
        x1 = z[:, :hidden]
        x2 = z[:, hidden:].astype(_MM_DTYPE)    # only ever a matmul operand; keep bf16

        # column masks: zero 3x3 contributions that would wrap across image rows
        col = jax.lax.broadcasted_iota(jnp.int32, (M, 1), 0) % W
        mask_l = (col >= 1).astype(_MM_DTYPE)        # a left neighbour exists
        mask_r = (col <= W - 2).astype(_MM_DTYPE)    # a right neighbour exists

        # zero the halo rows of the three staging slabs.  Done every grid step (only
        # 2*HALO rows per slab) because the grid axis is 'parallel': a core's first
        # local step is not guaranteed to be program_id == 0.
        zero_halo = jnp.zeros((HALO, hidden), _MM_DTYPE)
        for s in range(3):
            pad_ref[s, pl.ds(0, HALO), :] = zero_halo
            pad_ref[s, pl.ds(HALO + M, HALO), :] = zero_halo

        # ---- n x Bottleneck (1x1 then 3x3, shortcut=False)
        for i in range(n_bneck):
            wc1_ref, bc1_ref, wc2_ref, bc2_ref = bot[4 * i:4 * i + 4]
            h = _silu(_mm(x1, wc1_ref[...]) + bc1_ref[...])
            hb = h.astype(_MM_DTYPE)                # cast once, stage + taps stay bf16

            # Stage hb plus two pre-masked copies into the zero-haloed slabs.
            # Reading slab 1 (h*mask_r) at row offset dy*W-1 equals the dx=-1 tap with
            # its output-side mask already applied, and slab 2 (h*mask_l) at dy*W+1
            # equals the masked dx=+1 tap, so the 9-tap loop needs no per-tap masking.
            pad_ref[0, pl.ds(HALO, M), :] = hb
            pad_ref[1, pl.ds(HALO, M), :] = hb * mask_r      # feeds the dx = -1 taps
            pad_ref[2, pl.ds(HALO, M), :] = hb * mask_l      # feeds the dx = +1 taps

            # 3x3 conv as 9 row-shifted dots; centre tap straight from registers.
            # TODO(synk): for hidden < 128 a single K=9*hidden dot (tap slab in VMEM)
            # would fill the MXU better; kept as 9 dots to avoid lane-offset staging.
            acc = _mm(hb, wc2_ref[4])                        # (dy, dx) = (0, 0)
            for t, (dy, dx) in enumerate(taps):
                if dy == 0 and dx == 0:
                    continue
                slab = 0 if dx == 0 else (1 if dx == -1 else 2)
                tap = pad_ref[slab, pl.ds(HALO + dy * W + dx, M), :]
                acc = acc + _mm(tap, wc2_ref[t])
            x1 = _silu(acc + bc2_ref[...])

        # ---- conv3 (1x1) on concat([x1, x2]) via split-K accumulate
        o = _mm(x1, w3a_ref[...]) + _mm(x2, w3b_ref[...]) + b3_ref[...]
        # TODO(synk): emit bf16 (and a lane-dense >=128 last-dim layout when C < 128)
        # if the downstream consumer allows it; kept f32 here to compare against ref.
        o_ref[0] = _silu(o).astype(o_ref.dtype)

    return kernel, ROWS


# ----------------------------- parameter setup -------------------------------

def _fold_bn(gamma, beta, mean, var, eps=BN_EPS):
    scale = gamma / jnp.sqrt(var + eps)
    bias = beta - mean * scale
    return scale[None, :], bias[None, :]


def _make_conv(key, cin, cout, k):
    k1, k2, k3, k4, k5 = jax.random.split(key, 5)
    if k == 1:
        w = 0.2 * jax.random.normal(k1, (cin, cout), jnp.float32)
    else:
        w = 0.1 * jax.random.normal(k1, (k, k, cin, cout), jnp.float32)
    gamma = jax.random.uniform(k2, (cout,), jnp.float32, 0.8, 1.2)
    beta = 0.05 * jax.random.normal(k3, (cout,), jnp.float32)
    mean = 0.05 * jax.random.normal(k4, (cout,), jnp.float32)
    var = jax.random.uniform(k5, (cout,), jnp.float32, 0.5, 1.5)
    scale, bias = _fold_bn(gamma, beta, mean, var)
    return {"w": w, "scale": scale, "bias": bias}


def init_params(key, out_channels=16, width=1.0, depth=1.0):
    C = int(out_channels * width)       # channels after concat = CSP in/out channels
    hidden = int(C * 0.5)               # CSPLayer expansion = 0.5
    n = round(3 * depth)
    keys = jax.random.split(key, 3 + 2 * n)
    csp = {
        "conv1": _make_conv(keys[0], C, hidden, 1),
        "conv2": _make_conv(keys[1], C, hidden, 1),
        "conv3": _make_conv(keys[2], 2 * hidden, C, 1),
        "m": [
            {"c1": _make_conv(keys[3 + 2 * i], hidden, hidden, 1),   # Bottleneck expansion = 1.0
             "c2": _make_conv(keys[4 + 2 * i], hidden, hidden, 3)}
            for i in range(n)
        ],
    }
    return {"csp": csp}


def _prepare_fused_args(params, Cy, hidden):
    """Fold BN scale into the conv weights (stored bf16) and lay out the kernel args."""
    p = params["csp"]

    def fold1x1(cp):
        return (cp["w"] * cp["scale"]).astype(_MM_DTYPE), cp["bias"]

    w1, b1 = fold1x1(p["conv1"])                        # (2*Cy, hidden)
    w2, b2 = fold1x1(p["conv2"])
    # conv1+conv2 fused along N, split along K for the [y, y_t] concat
    w12y = jnp.concatenate([w1[:Cy], w2[:Cy]], axis=1)  # (Cy, 2*hidden)
    w12t = jnp.concatenate([w1[Cy:], w2[Cy:]], axis=1)  # (Cy, 2*hidden)
    b12 = jnp.concatenate([b1, b2], axis=1)             # (1, 2*hidden) f32

    args = [w12y, w12t, b12]
    for b in p["m"]:
        wc1, bc1 = fold1x1(b["c1"])                                   # (hidden, hidden)
        w3x3 = (b["c2"]["w"] * b["c2"]["scale"][0]).astype(_MM_DTYPE)  # (3,3,hidden,hidden)
        args += [wc1, bc1, w3x3.reshape(9, hidden, hidden), b["c2"]["bias"]]

    w3, b3 = fold1x1(p["conv3"])                        # (2*hidden, C), split K for [x1, x2]
    args += [w3[:hidden], w3[hidden:], b3]
    return args


# -------------------------------- forward pass -------------------------------

def downsampling_block_forward(params, x_nhwc, y_nhwc):
    """x: (N, 2H, 2W, Cy) NHWC, y: (N, H, W, Cy) NHWC -> (N, H, W, C) NHWC.

    NHWC is the kernel I/O contract so every wrapper-side layout change is a free
    row-major reshape (NCHW callers should transpose once upstream / fuse it into the
    producing op instead of paying an HBM round trip here).
    """
    N, H2, W2, Cy = x_nhwc.shape
    H, W = H2 // 2, W2 // 2
    M = H * W
    p = params["csp"]
    hidden = p["conv1"]["w"].shape[1]
    C = p["conv3"]["w"].shape[1]
    n_bneck = len(p["m"])

    # free reshapes (contiguous row-major splits/merges, no data movement):
    #   x: (N, 2H, 2W, Cy) -> (N, H, 2W, 2Cy) with dim1 = dy*W + w and dim2 = dx*Cy + c
    x4 = x_nhwc.reshape(N, H, 2, W, 2, Cy).reshape(N, H, 2 * W, 2 * Cy)
    yv = y_nhwc.reshape(N, M, Cy)

    w_args = _prepare_fused_args(params, Cy, hidden)
    kernel, rows = _make_fused_kernel(n_bneck, Cy, hidden, H, W)

    def batch_spec(shape):
        nd = len(shape)
        return pl.BlockSpec((1,) + tuple(shape[1:]),
                            lambda n, _nd=nd: (n,) + (0,) * (_nd - 1))

    def full_spec(arr):
        nd = arr.ndim
        return pl.BlockSpec(arr.shape, lambda n, _nd=nd: (0,) * _nd)

    in_specs = [batch_spec(x4.shape), batch_spec(yv.shape)] + [full_spec(w) for w in w_args]

    out = pl.pallas_call(
        kernel,
        out_shape=jax.ShapeDtypeStruct((N, M, C), jnp.float32),
        grid=(N,),
        in_specs=in_specs,
        out_specs=pl.BlockSpec((1, M, C), lambda n: (n, 0, 0)),
        scratch_shapes=[pltpu.VMEM((3, rows, hidden), _MM_DTYPE)],
        compiler_params=pltpu.CompilerParams(
            dimension_semantics=("parallel",),
            # Raise the scoped-VMEM ceiling above the 16/32 MiB defaults; tune per
            # generation at real shapes (<= ~56 MiB on v7x, up to ~100 MiB on v5e/v6e).
            vmem_limit_bytes=48 * 1024 * 1024,
        ),
    )(x4, yv, *w_args)
    # TODO(synk): at realistic H*W (and for batch-1 on v7x) add an M row-block grid
    # axis with a 1-image-row recomputed halo so per-step VMEM stays inside v7x's
    # 64 MiB and both TensorCores get work even when N == 1.

    return out.reshape(N, H, W, C)        # free reshape back to NHWC


# --------------------------- pure-JAX reference (check) -----------------------

def _ref_forward(params, x_nhwc, y_nhwc):
    def silu(v):
        return v * jax.nn.sigmoid(v)

    def c1x1(v, p):
        return silu(jnp.einsum("nhwc,cd->nhwd", v, p["w"]) * p["scale"][0] + p["bias"][0])

    def c3x3(v, p):
        o = jax.lax.conv_general_dilated(v, p["w"], (1, 1), "SAME",
                                         dimension_numbers=("NHWC", "HWIO", "NHWC"))
        return silu(o * p["scale"][0] + p["bias"][0])

    N, H2, W2, Cy = x_nhwc.shape
    y_t = x_nhwc.reshape(N, H2 // 2, 2, W2 // 2, 2, Cy).max(axis=(2, 4))
    t = jnp.concatenate([y_nhwc, y_t], axis=-1)
    p = params["csp"]
    x1 = c1x1(t, p["conv1"])
    x2 = c1x1(t, p["conv2"])
    for b in p["m"]:
        x1 = c3x3(c1x1(x1, b["c1"]), b["c2"])
    return c1x1(jnp.concatenate([x1, x2], axis=-1), p["conv3"])


# ------------------------------------ main ------------------------------------

if __name__ == "__main__":
    key = jax.random.PRNGKey(0)
    kp, kx, ky = jax.random.split(key, 3)

    # small shapes: out_channels*width = 16 -> x and y each carry 8 channels (NHWC)
    N, Cy, H, W = 2, 8, 8, 8
    out_channels, width, depth = 16, 1.0, 1.0

    params = init_params(kp, out_channels=out_channels, width=width, depth=depth)
    x = jax.random.normal(kx, (N, 2 * H, 2 * W, Cy), jnp.float32)   # higher-res feature map
    y = jax.random.normal(ky, (N, H, W, Cy), jnp.float32)           # lower-res feature map

    fwd = jax.jit(functools.partial(downsampling_block_forward, params))
    out = jax.block_until_ready(fwd(x, y))

    ref = _ref_forward(params, x, y)
    assert out.shape == (N, H, W, int(out_channels * width)), out.shape
    max_err = float(jnp.max(jnp.abs(out - ref)))
    ref_max = float(jnp.max(jnp.abs(ref)))
    # bf16 MXU operands + bf16 folded weights vs a pure-f32 reference: allow ~5%
    # of the output dynamic range plus a small absolute floor.
    tol = 0.05 * ref_max + 0.02
    assert max_err < tol, f"mismatch vs reference: {max_err} (tol {tol})"

    print("KERNEL_OK")
</pallas_src>

<mosaic_0001>
module attributes {stable_mosaic.version = 11 : i64} {
  func.func @kernel(%arg0: i32, %arg1: memref<1x8x16x16xf32, #tpu.memory_space<vmem>>, %arg2: memref<1x64x8xf32, #tpu.memory_space<vmem>>, %arg3: memref<8x16xbf16, #tpu.memory_space<vmem>>, %arg4: memref<8x16xbf16, #tpu.memory_space<vmem>>, %arg5: memref<1x16xf32, #tpu.memory_space<vmem>>, %arg6: memref<8x8xbf16, #tpu.memory_space<vmem>>, %arg7: memref<1x8xf32, #tpu.memory_space<vmem>>, %arg8: memref<9x8x8xbf16, #tpu.memory_space<vmem>>, %arg9: memref<1x8xf32, #tpu.memory_space<vmem>>, %arg10: memref<8x8xbf16, #tpu.memory_space<vmem>>, %arg11: memref<1x8xf32, #tpu.memory_space<vmem>>, %arg12: memref<9x8x8xbf16, #tpu.memory_space<vmem>>, %arg13: memref<1x8xf32, #tpu.memory_space<vmem>>, %arg14: memref<8x8xbf16, #tpu.memory_space<vmem>>, %arg15: memref<1x8xf32, #tpu.memory_space<vmem>>, %arg16: memref<9x8x8xbf16, #tpu.memory_space<vmem>>, %arg17: memref<1x8xf32, #tpu.memory_space<vmem>>, %arg18: memref<8x16xbf16, #tpu.memory_space<vmem>>, %arg19: memref<8x16xbf16, #tpu.memory_space<vmem>>, %arg20: memref<1x16xf32, #tpu.memory_space<vmem>>, %arg21: memref<1x64x16xf32, #tpu.memory_space<vmem>>, %arg22: memref<3x96x8xbf16, #tpu.memory_space<vmem>>) attributes {dimension_semantics = [#tpu.dimension_semantics<parallel>], iteration_bounds = array<i64: 2>, scalar_prefetch = 0 : i64, scratch_operands = 1 : i64, tpu.core_type = #tpu.core_type<tc>, window_params = [{transform_indices = @transform_0, window_bounds = array<i64: 1, 8, 16, 16>}, {transform_indices = @transform_1, window_bounds = array<i64: 1, 64, 8>}, {pipeline_mode = #tpu.pipeline_mode<synchronous>, transform_indices = @transform_2, window_bounds = array<i64: 8, 16>}, {pipeline_mode = #tpu.pipeline_mode<synchronous>, transform_indices = @transform_3, window_bounds = array<i64: 8, 16>}, {pipeline_mode = #tpu.pipeline_mode<synchronous>, transform_indices = @transform_4, window_bounds = array<i64: 1, 16>}, {pipeline_mode = #tpu.pipeline_mode<synchronous>, transform_indices = @transform_5, window_bounds = array<i64: 8, 8>}, {pipeline_mode = #tpu.pipeline_mode<synchronous>, transform_indices = @transform_6, window_bounds = array<i64: 1, 8>}, {pipeline_mode = #tpu.pipeline_mode<synchronous>, transform_indices = @transform_7, window_bounds = array<i64: 9, 8, 8>}, {pipeline_mode = #tpu.pipeline_mode<synchronous>, transform_indices = @transform_8, window_bounds = array<i64: 1, 8>}, {pipeline_mode = #tpu.pipeline_mode<synchronous>, transform_indices = @transform_9, window_bounds = array<i64: 8, 8>}, {pipeline_mode = #tpu.pipeline_mode<synchronous>, transform_indices = @transform_10, window_bounds = array<i64: 1, 8>}, {pipeline_mode = #tpu.pipeline_mode<synchronous>, transform_indices = @transform_11, window_bounds = array<i64: 9, 8, 8>}, {pipeline_mode = #tpu.pipeline_mode<synchronous>, transform_indices = @transform_12, window_bounds = array<i64: 1, 8>}, {pipeline_mode = #tpu.pipeline_mode<synchronous>, transform_indices = @transform_13, window_bounds = array<i64: 8, 8>}, {pipeline_mode = #tpu.pipeline_mode<synchronous>, transform_indices = @transform_14, window_bounds = array<i64: 1, 8>}, {pipeline_mode = #tpu.pipeline_mode<synchronous>, transform_indices = @transform_15, window_bounds = array<i64: 9, 8, 8>}, {pipeline_mode = #tpu.pipeline_mode<synchronous>, transform_indices = @transform_16, window_bounds = array<i64: 1, 8>}, {pipeline_mode = #tpu.pipeline_mode<synchronous>, transform_indices = @transform_17, window_bounds = array<i64: 8, 16>}, {pipeline_mode = #tpu.pipeline_mode<synchronous>, transform_indices = @transform_18, window_bounds = array<i64: 8, 16>}, {pipeline_mode = #tpu.pipeline_mode<synchronous>, transform_indices = @transform_19, window_bounds = array<i64: 1, 16>}, {transform_indices = @transform_20, window_bounds = array<i64: 1, 64, 16>}]} {
    %c0 = arith.constant 0 : index
    %c0_0 = arith.constant 0 : index
    %c0_1 = arith.constant 0 : index
    %c0_2 = arith.constant 0 : index
    %0 = vector.load %arg1[%c0, %c0_0, %c0_1, %c0_2] : memref<1x8x16x16xf32, #tpu.memory_space<vmem>>, vector<1x8x16x16xf32>
    %1 = vector.shape_cast %0 : vector<1x8x16x16xf32> to vector<8x16x16xf32>
    %2 = vector.extract_strided_slice %1 {offsets = [0, 0, 0], sizes = [8, 8, 16], strides = [1, 1, 1]} : vector<8x16x16xf32> to vector<8x8x16xf32>
    %3 = vector.extract_strided_slice %1 {offsets = [0, 8, 0], sizes = [8, 8, 16], strides = [1, 1, 1]} : vector<8x16x16xf32> to vector<8x8x16xf32>
    %4 = arith.maximumf %2, %3 : vector<8x8x16xf32>
    %5 = vector.extract_strided_slice %4 {offsets = [0, 0, 0], sizes = [8, 8, 8], strides = [1, 1, 1]} : vector<8x8x16xf32> to vector<8x8x8xf32>
    %6 = vector.extract_strided_slice %4 {offsets = [0, 0, 8], sizes = [8, 8, 8], strides = [1, 1, 1]} : vector<8x8x16xf32> to vector<8x8x8xf32>
    %7 = arith.maximumf %5, %6 : vector<8x8x8xf32>
    %8 = vector.shape_cast %7 : vector<8x8x8xf32> to vector<64x8xf32>
    %c0_3 = arith.constant 0 : index
    %c0_4 = arith.constant 0 : index
    %c0_5 = arith.constant 0 : index
    %9 = vector.load %arg2[%c0_3, %c0_4, %c0_5] : memref<1x64x8xf32, #tpu.memory_space<vmem>>, vector<1x64x8xf32>
    %10 = vector.shape_cast %9 : vector<1x64x8xf32> to vector<64x8xf32>
    %c0_6 = arith.constant 0 : index
    %c0_7 = arith.constant 0 : index
    %11 = vector.load %arg3[%c0_6, %c0_7] : memref<8x16xbf16, #tpu.memory_space<vmem>>, vector<8x16xbf16>
    %12 = arith.truncf %10 : vector<64x8xf32> to vector<64x8xbf16>
    %cst = arith.constant dense<0.000000e+00> : vector<64x16xf32>
    %13 = tpu.matmul %12, %11, %cst {dimension_numbers = #tpu.dot_dimension_numbers<[1], [0], [0], [1], [0, 0, 1, 1], [], []>} : vector<64x8xbf16>, vector<8x16xbf16>, vector<64x16xf32> -> vector<64x16xf32>
    %c0_8 = arith.constant 0 : index
    %c0_9 = arith.constant 0 : index
    %14 = vector.load %arg4[%c0_8, %c0_9] : memref<8x16xbf16, #tpu.memory_space<vmem>>, vector<8x16xbf16>
    %15 = arith.truncf %8 : vector<64x8xf32> to vector<64x8xbf16>
    %cst_10 = arith.constant dense<0.000000e+00> : vector<64x16xf32>
    %16 = tpu.matmul %15, %14, %cst_10 {dimension_numbers = #tpu.dot_dimension_numbers<[1], [0], [0], [1], [0, 0, 1, 1], [], []>} : vector<64x8xbf16>, vector<8x16xbf16>, vector<64x16xf32> -> vector<64x16xf32>
    %17 = arith.addf %13, %16 : vector<64x16xf32>
    %c0_11 = arith.constant 0 : index
    %c0_12 = arith.constant 0 : index
    %18 = vector.load %arg5[%c0_11, %c0_12] : memref<1x16xf32, #tpu.memory_space<vmem>>, vector<1x16xf32>
    %19 = vector.broadcast %18 : vector<1x16xf32> to vector<64x16xf32>
    %20 = arith.addf %17, %19 : vector<64x16xf32>
    %21 = arith.negf %20 : vector<64x16xf32>
    %22 = math.exp %21 : vector<64x16xf32>
    %cst_13 = arith.constant 1.000000e+00 : f32
    %23 = vector.broadcast %cst_13 : f32 to vector<64x16xf32>
    %24 = arith.addf %23, %22 : vector<64x16xf32>
    %25 = arith.divf %23, %24 : vector<64x16xf32>
    %26 = arith.mulf %20, %25 : vector<64x16xf32>
    %27 = vector.extract_strided_slice %26 {offsets = [0, 0], sizes = [64, 8], strides = [1, 1]} : vector<64x16xf32> to vector<64x8xf32>
    %28 = vector.extract_strided_slice %26 {offsets = [0, 8], sizes = [64, 8], strides = [1, 1]} : vector<64x16xf32> to vector<64x8xf32>
    %29 = arith.truncf %28 : vector<64x8xf32> to vector<64x8xbf16>
    %30 = tpu.iota {dimensions = array<i32: 0>} : vector<64x1xi32>
    %c8_i32 = arith.constant 8 : i32
    %c0_i32 = arith.constant 0 : i32
    %31 = arith.cmpi eq, %c8_i32, %c0_i32 : i32
    %c1_i32 = arith.constant 1 : i32
    %32 = arith.select %31, %c1_i32, %c8_i32 : i32
    %33 = vector.broadcast %32 : i32 to vector<64x1xi32>
    %34 = arith.remsi %30, %33 : vector<64x1xi32>
    %c0_i32_14 = arith.constant 0 : i32
    %35 = vector.broadcast %c0_i32_14 : i32 to vector<64x1xi32>
    %36 = arith.cmpi ne, %34, %35 : vector<64x1xi32>
    %c0_i32_15 = arith.constant 0 : i32
    %37 = vector.broadcast %c0_i32_15 : i32 to vector<64x1xi32>
    %38 = arith.cmpi slt, %34, %37 : vector<64x1xi32>
    %c0_i32_16 = arith.constant 0 : i32
    %39 = arith.cmpi slt, %32, %c0_i32_16 : i32
    %40 = vector.broadcast %39 : i1 to vector<64x1xi1>
    %41 = vector.broadcast %40 : vector<64x1xi1> to vector<64x1xi1>
    %42 = arith.xori %38, %41 : vector<64x1xi1>
    %43 = arith.andi %42, %36 : vector<64x1xi1>
    %44 = vector.broadcast %32 : i32 to vector<64x1xi32>
    %45 = arith.addi %34, %44 : vector<64x1xi32>
    %46 = arith.select %43, %45, %34 : vector<64x1xi1>, vector<64x1xi32>
    %c1_i32_17 = arith.constant 1 : i32
    %47 = vector.broadcast %c1_i32_17 : i32 to vector<64x1xi32>
    %48 = arith.cmpi sge, %46, %47 : vector<64x1xi32>
    %49 = arith.extui %48 : vector<64x1xi1> to vector<64x1xi32>
    %50 = arith.sitofp %49 : vector<64x1xi32> to vector<64x1xf32>
    %51 = arith.truncf %50 : vector<64x1xf32> to vector<64x1xbf16>
    %c6_i32 = arith.constant 6 : i32
    %52 = vector.broadcast %c6_i32 : i32 to vector<64x1xi32>
    %53 = arith.cmpi sle, %46, %52 : vector<64x1xi32>
    %54 = arith.extui %53 : vector<64x1xi1> to vector<64x1xi32>
    %55 = arith.sitofp %54 : vector<64x1xi32> to vector<64x1xf32>
    %56 = arith.truncf %55 : vector<64x1xf32> to vector<64x1xbf16>
    %cst_18 = arith.constant 0.000000e+00 : bf16
    %57 = vector.broadcast %cst_18 : bf16 to vector<16x8xbf16>
    %c0_19 = arith.constant 0 : index
    %c0_20 = arith.constant 0 : index
    %c0_21 = arith.constant 0 : index
    %58 = vector.load %arg22[%c0_19, %c0_20, %c0_21] : memref<3x96x8xbf16, #tpu.memory_space<vmem>>, vector<1x16x8xbf16>
    %59 = vector.shape_cast %58 : vector<1x16x8xbf16> to vector<16x8xbf16>
    %60 = vector.shape_cast %57 : vector<16x8xbf16> to vector<1x16x8xbf16>
    tpu.vector_store %arg22[%c0_19, %c0_20, %c0_21], %60 {strides = array<i32>} : memref<3x96x8xbf16, #tpu.memory_space<vmem>>, vector<1x16x8xbf16>,
    %c0_22 = arith.constant 0 : index
    %c80 = arith.constant 80 : index
    %c0_23 = arith.constant 0 : index
    %61 = vector.load %arg22[%c0_22, %c80, %c0_23] : memref<3x96x8xbf16, #tpu.memory_space<vmem>>, vector<1x16x8xbf16>
    %62 = vector.shape_cast %61 : vector<1x16x8xbf16> to vector<16x8xbf16>
    %63 = vector.shape_cast %57 : vector<16x8xbf16> to vector<1x16x8xbf16>
    tpu.vector_store %arg22[%c0_22, %c80, %c0_23], %63 {strides = array<i32>} : memref<3x96x8xbf16, #tpu.memory_space<vmem>>, vector<1x16x8xbf16>,
    %c1 = arith.constant 1 : index
    %c0_24 = arith.constant 0 : index
    %c0_25 = arith.constant 0 : index
    %64 = vector.load %arg22[%c1, %c0_24, %c0_25] : memref<3x96x8xbf16, #tpu.memory_space<vmem>>, vector<1x16x8xbf16>
    %65 = vector.shape_cast %64 : vector<1x16x8xbf16> to vector<16x8xbf16>
    %66 = vector.shape_cast %57 : vector<16x8xbf16> to vector<1x16x8xbf16>
    tpu.vector_store %arg22[%c1, %c0_24, %c0_25], %66 {strides = array<i32>} : memref<3x96x8xbf16, #tpu.memory_space<vmem>>, vector<1x16x8xbf16>,
    %c1_26 = arith.constant 1 : index
    %c80_27 = arith.constant 80 : index
    %c0_28 = arith.constant 0 : index
    %67 = vector.load %arg22[%c1_26, %c80_27, %c0_28] : memref<3x96x8xbf16, #tpu.memory_space<vmem>>, vector<1x16x8xbf16>
    %68 = vector.shape_cast %67 : vector<1x16x8xbf16> to vector<16x8xbf16>
    %69 = vector.shape_cast %57 : vector<16x8xbf16> to vector<1x16x8xbf16>
    tpu.vector_store %arg22[%c1_26, %c80_27, %c0_28], %69 {strides = array<i32>} : memref<3x96x8xbf16, #tpu.memory_space<vmem>>, vector<1x16x8xbf16>,
    %c2 = arith.constant 2 : index
    %c0_29 = arith.constant 0 : index
    %c0_30 = arith.constant 0 : index
    %70 = vector.load %arg22[%c2, %c0_29, %c0_30] : memref<3x96x8xbf16, #tpu.memory_space<vmem>>, vector<1x16x8xbf16>
    %71 = vector.shape_cast %70 : vector<1x16x8xbf16> to vector<16x8xbf16>
    %72 = vector.shape_cast %57 : vector<16x8xbf16> to vector<1x16x8xbf16>
    tpu.vector_store %arg22[%c2, %c0_29, %c0_30], %72 {strides = array<i32>} : memref<3x96x8xbf16, #tpu.memory_space<vmem>>, vector<1x16x8xbf16>,
    %c2_31 = arith.constant 2 : index
    %c80_32 = arith.constant 80 : index
    %c0_33 = arith.constant 0 : index
    %73 = vector.load %arg22[%c2_31, %c80_32, %c0_33] : memref<3x96x8xbf16, #tpu.memory_space<vmem>>, vector<1x16x8xbf16>
    %74 = vector.shape_cast %73 : vector<1x16x8xbf16> to vector<16x8xbf16>
    %75 = vector.shape_cast %57 : vector<16x8xbf16> to vector<1x16x8xbf16>
    tpu.vector_store %arg22[%c2_31, %c80_32, %c0_33], %75 {strides = array<i32>} : memref<3x96x8xbf16, #tpu.memory_space<vmem>>, vector<1x16x8xbf16>,
    %c0_34 = arith.constant 0 : index
    %c0_35 = arith.constant 0 : index
    %76 = vector.load %arg6[%c0_34, %c0_35] : memref<8x8xbf16, #tpu.memory_space<vmem>>, vector<8x8xbf16>
    %77 = arith.truncf %27 : vector<64x8xf32> to vector<64x8xbf16>
    %cst_36 = arith.constant dense<0.000000e+00> : vector<64x8xf32>
    %78 = tpu.matmul %77, %76, %cst_36 {dimension_numbers = #tpu.dot_dimension_numbers<[1], [0], [0], [1], [0, 0, 1, 1], [], []>} : vector<64x8xbf16>, vector<8x8xbf16>, vector<64x8xf32> -> vector<64x8xf32>
    %c0_37 = arith.constant 0 : index
    %c0_38 = arith.constant 0 : index
    %79 = vector.load %arg7[%c0_37, %c0_38] : memref<1x8xf32, #tpu.memory_space<vmem>>, vector<1x8xf32>
    %80 = vector.broadcast %79 : vector<1x8xf32> to vector<64x8xf32>
    %81 = arith.addf %78, %80 : vector<64x8xf32>
    %82 = arith.negf %81 : vector<64x8xf32>
    %83 = math.exp %82 : vector<64x8xf32>
    %cst_39 = arith.constant 1.000000e+00 : f32
    %84 = vector.broadcast %cst_39 : f32 to vector<64x8xf32>
    %85 = arith.addf %84, %83 : vector<64x8xf32>
    %86 = arith.divf %84, %85 : vector<64x8xf32>
    %87 = arith.mulf %81, %86 : vector<64x8xf32>
    %88 = arith.truncf %87 : vector<64x8xf32> to vector<64x8xbf16>
    %c0_40 = arith.constant 0 : index
    %c16 = arith.constant 16 : index
    %c0_41 = arith.constant 0 : index
    %89 = vector.load %arg22[%c0_40, %c16, %c0_41] : memref<3x96x8xbf16, #tpu.memory_space<vmem>>, vector<1x64x8xbf16>
    %90 = vector.shape_cast %89 : vector<1x64x8xbf16> to vector<64x8xbf16>
    %91 = vector.shape_cast %88 : vector<64x8xbf16> to vector<1x64x8xbf16>
    tpu.vector_store %arg22[%c0_40, %c16, %c0_41], %91 {strides = array<i32>} : memref<3x96x8xbf16, #tpu.memory_space<vmem>>, vector<1x64x8xbf16>,
    %92 = vector.broadcast %56 : vector<64x1xbf16> to vector<64x8xbf16>
    %93 = arith.mulf %88, %92 : vector<64x8xbf16>
    %c1_42 = arith.constant 1 : index
    %c16_43 = arith.constant 16 : index
    %c0_44 = arith.constant 0 : index
    %94 = vector.load %arg22[%c1_42, %c16_43, %c0_44] : memref<3x96x8xbf16, #tpu.memory_space<vmem>>, vector<1x64x8xbf16>
    %95 = vector.shape_cast %94 : vector<1x64x8xbf16> to vector<64x8xbf16>
    %96 = vector.shape_cast %93 : vector<64x8xbf16> to vector<1x64x8xbf16>
    tpu.vector_store %arg22[%c1_42, %c16_43, %c0_44], %96 {strides = array<i32>} : memref<3x96x8xbf16, #tpu.memory_space<vmem>>, vector<1x64x8xbf16>,
    %97 = vector.broadcast %51 : vector<64x1xbf16> to vector<64x8xbf16>
    %98 = arith.mulf %88, %97 : vector<64x8xbf16>
    %c2_45 = arith.constant 2 : index
    %c16_46 = arith.constant 16 : index
    %c0_47 = arith.constant 0 : index
    %99 = vector.load %arg22[%c2_45, %c16_46, %c0_47] : memref<3x96x8xbf16, #tpu.memory_space<vmem>>, vector<1x64x8xbf16>
    %100 = vector.shape_cast %99 : vector<1x64x8xbf16> to vector<64x8xbf16>
    %101 = vector.shape_cast %98 : vector<64x8xbf16> to vector<1x64x8xbf16>
    tpu.vector_store %arg22[%c2_45, %c16_46, %c0_47], %101 {strides = array<i32>} : memref<3x96x8xbf16, #tpu.memory_space<vmem>>, vector<1x64x8xbf16>,
    %c4 = arith.constant 4 : index
    %c0_48 = arith.constant 0 : index
    %c0_49 = arith.constant 0 : index
    %102 = vector.load %arg8[%c4, %c0_48, %c0_49] : memref<9x8x8xbf16, #tpu.memory_space<vmem>>, vector<1x8x8xbf16>
    %103 = vector.shape_cast %102 : vector<1x8x8xbf16> to vector<8x8xbf16>
    %cst_50 = arith.constant dense<0.000000e+00> : vector<64x8xf32>
    %104 = tpu.matmul %88, %103, %cst_50 {dimension_numbers = #tpu.dot_dimension_numbers<[1], [0], [0], [1], [0, 0, 1, 1], [], []>} : vector<64x8xbf16>, vector<8x8xbf16>, vector<64x8xf32> -> vector<64x8xf32>
    %c1_51 = arith.constant 1 : index
    %c7 = arith.constant 7 : index
    %c0_52 = arith.constant 0 : index
    %105 = vector.load %arg22[%c1_51, %c7, %c0_52] : memref<3x96x8xbf16, #tpu.memory_space<vmem>>, vector<1x64x8xbf16>
    %106 = vector.shape_cast %105 : vector<1x64x8xbf16> to vector<64x8xbf16>
    %c0_53 = arith.constant 0 : index
    %c0_54 = arith.constant 0 : index
    %c0_55 = arith.constant 0 : index
    %107 = vector.load %arg8[%c0_53, %c0_54, %c0_55] : memref<9x8x8xbf16, #tpu.memory_space<vmem>>, vector<1x8x8xbf16>
    %108 = vector.shape_cast %107 : vector<1x8x8xbf16> to vector<8x8xbf16>
    %cst_56 = arith.constant dense<0.000000e+00> : vector<64x8xf32>
    %109 = tpu.matmul %106, %108, %cst_56 {dimension_numbers = #tpu.dot_dimension_numbers<[1], [0], [0], [1], [0, 0, 1, 1], [], []>} : vector<64x8xbf16>, vector<8x8xbf16>, vector<64x8xf32> -> vector<64x8xf32>
    %110 = arith.addf %104, %109 : vector<64x8xf32>
    %c0_57 = arith.constant 0 : index
    %c8 = arith.constant 8 : index
    %c0_58 = arith.constant 0 : index
    %111 = vector.load %arg22[%c0_57, %c8, %c0_58] : memref<3x96x8xbf16, #tpu.memory_space<vmem>>, vector<1x64x8xbf16>
    %112 = vector.shape_cast %111 : vector<1x64x8xbf16> to vector<64x8xbf16>
    %c1_59 = arith.constant 1 : index
    %c0_60 = arith.constant 0 : index
    %c0_61 = arith.constant 0 : index
    %113 = vector.load %arg8[%c1_59, %c0_60, %c0_61] : memref<9x8x8xbf16, #tpu.memory_space<vmem>>, vector<1x8x8xbf16>
    %114 = vector.shape_cast %113 : vector<1x8x8xbf16> to vector<8x8xbf16>
    %cst_62 = arith.constant dense<0.000000e+00> : vector<64x8xf32>
    %115 = tpu.matmul %112, %114, %cst_62 {dimension_numbers = #tpu.dot_dimension_numbers<[1], [0], [0], [1], [0, 0, 1, 1], [], []>} : vector<64x8xbf16>, vector<8x8xbf16>, vector<64x8xf32> -> vector<64x8xf32>
    %116 = arith.addf %110, %115 : vector<64x8xf32>
    %c2_63 = arith.constant 2 : index
    %c9 = arith.constant 9 : index
    %c0_64 = arith.constant 0 : index
    %117 = vector.load %arg22[%c2_63, %c9, %c0_64] : memref<3x96x8xbf16, #tpu.memory_space<vmem>>, vector<1x64x8xbf16>
    %118 = vector.shape_cast %117 : vector<1x64x8xbf16> to vector<64x8xbf16>
    %c2_65 = arith.constant 2 : index
    %c0_66 = arith.constant 0 : index
    %c0_67 = arith.constant 0 : index
    %119 = vector.load %arg8[%c2_65, %c0_66, %c0_67] : memref<9x8x8xbf16, #tpu.memory_space<vmem>>, vector<1x8x8xbf16>
    %120 = vector.shape_cast %119 : vector<1x8x8xbf16> to vector<8x8xbf16>
    %cst_68 = arith.constant dense<0.000000e+00> : vector<64x8xf32>
    %121 = tpu.matmul %118, %120, %cst_68 {dimension_numbers = #tpu.dot_dimension_numbers<[1], [0], [0], [1], [0, 0, 1, 1], [], []>} : vector<64x8xbf16>, vector<8x8xbf16>, vector<64x8xf32> -> vector<64x8xf32>
    %122 = arith.addf %116, %121 : vector<64x8xf32>
    %c1_69 = arith.constant 1 : index
    %c15 = arith.constant 15 : index
    %c0_70 = arith.constant 0 : index
    %123 = vector.load %arg22[%c1_69, %c15, %c0_70] : memref<3x96x8xbf16, #tpu.memory_space<vmem>>, vector<1x64x8xbf16>
    %124 = vector.shape_cast %123 : vector<1x64x8xbf16> to vector<64x8xbf16>
    %c3 = arith.constant 3 : index
    %c0_71 = arith.constant 0 : index
    %c0_72 = arith.constant 0 : index
    %125 = vector.load %arg8[%c3, %c0_71, %c0_72] : memref<9x8x8xbf16, #tpu.memory_space<vmem>>, vector<1x8x8xbf16>
    %126 = vector.shape_cast %125 : vector<1x8x8xbf16> to vector<8x8xbf16>
    %cst_73 = arith.constant dense<0.000000e+00> : vector<64x8xf32>
    %127 = tpu.matmul %124, %126, %cst_73 {dimension_numbers = #tpu.dot_dimension_numbers<[1], [0], [0], [1], [0, 0, 1, 1], [], []>} : vector<64x8xbf16>, vector<8x8xbf16>, vector<64x8xf32> -> vector<64x8xf32>
    %128 = arith.addf %122, %127 : vector<64x8xf32>
    %c2_74 = arith.constant 2 : index
    %c17 = arith.constant 17 : index
    %c0_75 = arith.constant 0 : index
    %129 = vector.load %arg22[%c2_74, %c17, %c0_75] : memref<3x96x8xbf16, #tpu.memory_space<vmem>>, vector<1x64x8xbf16>
    %130 = vector.shape_cast %129 : vector<1x64x8xbf16> to vector<64x8xbf16>
    %c5 = arith.constant 5 : index
    %c0_76 = arith.constant 0 : index
    %c0_77 = arith.constant 0 : index
    %131 = vector.load %arg8[%c5, %c0_76, %c0_77] : memref<9x8x8xbf16, #tpu.memory_space<vmem>>, vector<1x8x8xbf16>
    %132 = vector.shape_cast %131 : vector<1x8x8xbf16> to vector<8x8xbf16>
    %cst_78 = arith.constant dense<0.000000e+00> : vector<64x8xf32>
    %133 = tpu.matmul %130, %132, %cst_78 {dimension_numbers = #tpu.dot_dimension_numbers<[1], [0], [0], [1], [0, 0, 1, 1], [], []>} : vector<64x8xbf16>, vector<8x8xbf16>, vector<64x8xf32> -> vector<64x8xf32>
    %134 = arith.addf %128, %133 : vector<64x8xf32>
    %c1_79 = arith.constant 1 : index
    %c23 = arith.constant 23 : index
    %c0_80 = arith.constant 0 : index
    %135 = vector.load %arg22[%c1_79, %c23, %c0_80] : memref<3x96x8xbf16, #tpu.memory_space<vmem>>, vector<1x64x8xbf16>
    %136 = vector.shape_cast %135 : vector<1x64x8xbf16> to vector<64x8xbf16>
    %c6 = arith.constant 6 : index
    %c0_81 = arith.constant 0 : index
    %c0_82 = arith.constant 0 : index
    %137 = vector.load %arg8[%c6, %c0_81, %c0_82] : memref<9x8x8xbf16, #tpu.memory_space<vmem>>, vector<1x8x8xbf16>
    %138 = vector.shape_cast %137 : vector<1x8x8xbf16> to vector<8x8xbf16>
    %cst_83 = arith.constant dense<0.000000e+00> : vector<64x8xf32>
    %139 = tpu.matmul %136, %138, %cst_83 {dimension_numbers = #tpu.dot_dimension_numbers<[1], [0], [0], [1], [0, 0, 1, 1], [], []>} : vector<64x8xbf16>, vector<8x8xbf16>, vector<64x8xf32> -> vector<64x8xf32>
    %140 = arith.addf %134, %139 : vector<64x8xf32>
    %c0_84 = arith.constant 0 : index
    %c24 = arith.constant 24 : index
    %c0_85 = arith.constant 0 : index
    %141 = vector.load %arg22[%c0_84, %c24, %c0_85] : memref<3x96x8xbf16, #tpu.memory_space<vmem>>, vector<1x64x8xbf16>
    %142 = vector.shape_cast %141 : vector<1x64x8xbf16> to vector<64x8xbf16>
    %c7_86 = arith.constant 7 : index
    %c0_87 = arith.constant 0 : index
    %c0_88 = arith.constant 0 : index
    %143 = vector.load %arg8[%c7_86, %c0_87, %c0_88] : memref<9x8x8xbf16, #tpu.memory_space<vmem>>, vector<1x8x8xbf16>
    %144 = vector.shape_cast %143 : vector<1x8x8xbf16> to vector<8x8xbf16>
    %cst_89 = arith.constant dense<0.000000e+00> : vector<64x8xf32>
    %145 = tpu.matmul %142, %144, %cst_89 {dimension_numbers = #tpu.dot_dimension_numbers<[1], [0], [0], [1], [0, 0, 1, 1], [], []>} : vector<64x8xbf16>, vector<8x8xbf16>, vector<64x8xf32> -> vector<64x8xf32>
    %146 = arith.addf %140, %145 : vector<64x8xf32>
    %c2_90 = arith.constant 2 : index
    %c25 = arith.constant 25 : index
    %c0_91 = arith.constant 0 : index
    %147 = vector.load %arg22[%c2_90, %c25, %c0_91] : memref<3x96x8xbf16, #tpu.memory_space<vmem>>, vector<1x64x8xbf16>
    %148 = vector.shape_cast %147 : vector<1x64x8xbf16> to vector<64x8xbf16>
    %c8_92 = arith.constant 8 : index
    %c0_93 = arith.constant 0 : index
    %c0_94 = arith.constant 0 : index
    %149 = vector.load %arg8[%c8_92, %c0_93, %c0_94] : memref<9x8x8xbf16, #tpu.memory_space<vmem>>, vector<1x8x8xbf16>
    %150 = vector.shape_cast %149 : vector<1x8x8xbf16> to vector<8x8xbf16>
    %cst_95 = arith.constant dense<0.000000e+00> : vector<64x8xf32>
    %151 = tpu.matmul %148, %150, %cst_95 {dimension_numbers = #tpu.dot_dimension_numbers<[1], [0], [0], [1], [0, 0, 1, 1], [], []>} : vector<64x8xbf16>, vector<8x8xbf16>, vector<64x8xf32> -> vector<64x8xf32>
    %152 = arith.addf %146, %151 : vector<64x8xf32>
    %c0_96 = arith.constant 0 : index
    %c0_97 = arith.constant 0 : index
    %153 = vector.load %arg9[%c0_96, %c0_97] : memref<1x8xf32, #tpu.memory_space<vmem>>, vector<1x8xf32>
    %154 = vector.broadcast %153 : vector<1x8xf32> to vector<64x8xf32>
    %155 = arith.addf %152, %154 : vector<64x8xf32>
    %156 = arith.negf %155 : vector<64x8xf32>
    %157 = math.exp %156 : vector<64x8xf32>
    %cst_98 = arith.constant 1.000000e+00 : f32
    %158 = vector.broadcast %cst_98 : f32 to vector<64x8xf32>
    %159 = arith.addf %158, %157 : vector<64x8xf32>
    %160 = arith.divf %158, %159 : vector<64x8xf32>
    %161 = arith.mulf %155, %160 : vector<64x8xf32>
    %c0_99 = arith.constant 0 : index
    %c0_100 = arith.constant 0 : index
    %162 = vector.load %arg10[%c0_99, %c0_100] : memref<8x8xbf16, #tpu.memory_space<vmem>>, vector<8x8xbf16>
    %163 = arith.truncf %161 : vector<64x8xf32> to vector<64x8xbf16>
    %cst_101 = arith.constant dense<0.000000e+00> : vector<64x8xf32>
    %164 = tpu.matmul %163, %162, %cst_101 {dimension_numbers = #tpu.dot_dimension_numbers<[1], [0], [0], [1], [0, 0, 1, 1], [], []>} : vector<64x8xbf16>, vector<8x8xbf16>, vector<64x8xf32> -> vector<64x8xf32>
    %c0_102 = arith.constant 0 : index
    %c0_103 = arith.constant 0 : index
    %165 = vector.load %arg11[%c0_102, %c0_103] : memref<1x8xf32, #tpu.memory_space<vmem>>, vector<1x8xf32>
    %166 = vector.broadcast %165 : vector<1x8xf32> to vector<64x8xf32>
    %167 = arith.addf %164, %166 : vector<64x8xf32>
    %168 = arith.negf %167 : vector<64x8xf32>
    %169 = math.exp %168 : vector<64x8xf32>
    %cst_104 = arith.constant 1.000000e+00 : f32
    %170 = vector.broadcast %cst_104 : f32 to vector<64x8xf32>
    %171 = arith.addf %170, %169 : vector<64x8xf32>
    %172 = arith.divf %170, %171 : vector<64x8xf32>
    %173 = arith.mulf %167, %172 : vector<64x8xf32>
    %174 = arith.truncf %173 : vector<64x8xf32> to vector<64x8xbf16>
    %c0_105 = arith.constant 0 : index
    %c16_106 = arith.constant 16 : index
    %c0_107 = arith.constant 0 : index
    %175 = vector.load %arg22[%c0_105, %c16_106, %c0_107] : memref<3x96x8xbf16, #tpu.memory_space<vmem>>, vector<1x64x8xbf16>
    %176 = vector.shape_cast %175 : vector<1x64x8xbf16> to vector<64x8xbf16>
    %177 = vector.shape_cast %174 : vector<64x8xbf16> to vector<1x64x8xbf16>
    tpu.vector_store %arg22[%c0_105, %c16_106, %c0_107], %177 {strides = array<i32>} : memref<3x96x8xbf16, #tpu.memory_space<vmem>>, vector<1x64x8xbf16>,
    %178 = vector.broadcast %56 : vector<64x1xbf16> to vector<64x8xbf16>
    %179 = arith.mulf %174, %178 : vector<64x8xbf16>
    %c1_108 = arith.constant 1 : index
    %c16_109 = arith.constant 16 : index
    %c0_110 = arith.constant 0 : index
    %180 = vector.load %arg22[%c1_108, %c16_109, %c0_110] : memref<3x96x8xbf16, #tpu.memory_space<vmem>>, vector<1x64x8xbf16>
    %181 = vector.shape_cast %180 : vector<1x64x8xbf16> to vector<64x8xbf16>
    %182 = vector.shape_cast %179 : vector<64x8xbf16> to vector<1x64x8xbf16>
    tpu.vector_store %arg22[%c1_108, %c16_109, %c0_110], %182 {strides = array<i32>} : memref<3x96x8xbf16, #tpu.memory_space<vmem>>, vector<1x64x8xbf16>,
    %183 = vector.broadcast %51 : vector<64x1xbf16> to vector<64x8xbf16>
    %184 = arith.mulf %174, %183 : vector<64x8xbf16>
    %c2_111 = arith.constant 2 : index
    %c16_112 = arith.constant 16 : index
    %c0_113 = arith.constant 0 : index
    %185 = vector.load %arg22[%c2_111, %c16_112, %c0_113] : memref<3x96x8xbf16, #tpu.memory_space<vmem>>, vector<1x64x8xbf16>
    %186 = vector.shape_cast %185 : vector<1x64x8xbf16> to vector<64x8xbf16>
    %187 = vector.shape_cast %184 : vector<64x8xbf16> to vector<1x64x8xbf16>
    tpu.vector_store %arg22[%c2_111, %c16_112, %c0_113], %187 {strides = array<i32>} : memref<3x96x8xbf16, #tpu.memory_space<vmem>>, vector<1x64x8xbf16>,
    %c4_114 = arith.constant 4 : index
    %c0_115 = arith.constant 0 : index
    %c0_116 = arith.constant 0 : index
    %188 = vector.load %arg12[%c4_114, %c0_115, %c0_116] : memref<9x8x8xbf16, #tpu.memory_space<vmem>>, vector<1x8x8xbf16>
    %189 = vector.shape_cast %188 : vector<1x8x8xbf16> to vector<8x8xbf16>
    %cst_117 = arith.constant dense<0.000000e+00> : vector<64x8xf32>
    %190 = tpu.matmul %174, %189, %cst_117 {dimension_numbers = #tpu.dot_dimension_numbers<[1], [0], [0], [1], [0, 0, 1, 1], [], []>} : vector<64x8xbf16>, vector<8x8xbf16>, vector<64x8xf32> -> vector<64x8xf32>
    %c1_118 = arith.constant 1 : index
    %c7_119 = arith.constant 7 : index
    %c0_120 = arith.constant 0 : index
    %191 = vector.load %arg22[%c1_118, %c7_119, %c0_120] : memref<3x96x8xbf16, #tpu.memory_space<vmem>>, vector<1x64x8xbf16>
    %192 = vector.shape_cast %191 : vector<1x64x8xbf16> to vector<64x8xbf16>
    %c0_121 = arith.constant 0 : index
    %c0_122 = arith.constant 0 : index
    %c0_123 = arith.constant 0 : index
    %193 = vector.load %arg12[%c0_121, %c0_122, %c0_123] : memref<9x8x8xbf16, #tpu.memory_space<vmem>>, vector<1x8x8xbf16>
    %194 = vector.shape_cast %193 : vector<1x8x8xbf16> to vector<8x8xbf16>
    %cst_124 = arith.constant dense<0.000000e+00> : vector<64x8xf32>
    %195 = tpu.matmul %192, %194, %cst_124 {dimension_numbers = #tpu.dot_dimension_numbers<[1], [0], [0], [1], [0, 0, 1, 1], [], []>} : vector<64x8xbf16>, vector<8x8xbf16>, vector<64x8xf32> -> vector<64x8xf32>
    %196 = arith.addf %190, %195 : vector<64x8xf32>
    %c0_125 = arith.constant 0 : index
    %c8_126 = arith.constant 8 : index
    %c0_127 = arith.constant 0 : index
    %197 = vector.load %arg22[%c0_125, %c8_126, %c0_127] : memref<3x96x8xbf16, #tpu.memory_space<vmem>>, vector<1x64x8xbf16>
    %198 = vector.shape_cast %197 : vector<1x64x8xbf16> to vector<64x8xbf16>
    %c1_128 = arith.constant 1 : index
    %c0_129 = arith.constant 0 : index
    %c0_130 = arith.constant 0 : index
    %199 = vector.load %arg12[%c1_128, %c0_129, %c0_130] : memref<9x8x8xbf16, #tpu.memory_space<vmem>>, vector<1x8x8xbf16>
    %200 = vector.shape_cast %199 : vector<1x8x8xbf16> to vector<8x8xbf16>
    %cst_131 = arith.constant dense<0.000000e+00> : vector<64x8xf32>
    %201 = tpu.matmul %198, %200, %cst_131 {dimension_numbers = #tpu.dot_dimension_numbers<[1], [0], [0], [1], [0, 0, 1, 1], [], []>} : vector<64x8xbf16>, vector<8x8xbf16>, vector<64x8xf32> -> vector<64x8xf32>
    %202 = arith.addf %196, %201 : vector<64x8xf32>
    %c2_132 = arith.constant 2 : index
    %c9_133 = arith.constant 9 : index
    %c0_134 = arith.constant 0 : index
    %203 = vector.load %arg22[%c2_132, %c9_133, %c0_134] : memref<3x96x8xbf16, #tpu.memory_space<vmem>>, vector<1x64x8xbf16>
    %204 = vector.shape_cast %203 : vector<1x64x8xbf16> to vector<64x8xbf16>
    %c2_135 = arith.constant 2 : index
    %c0_136 = arith.constant 0 : index
    %c0_137 = arith.constant 0 : index
    %205 = vector.load %arg12[%c2_135, %c0_136, %c0_137] : memref<9x8x8xbf16, #tpu.memory_space<vmem>>, vector<1x8x8xbf16>
    %206 = vector.shape_cast %205 : vector<1x8x8xbf16> to vector<8x8xbf16>
    %cst_138 = arith.constant dense<0.000000e+00> : vector<64x8xf32>
    %207 = tpu.matmul %204, %206, %cst_138 {dimension_numbers = #tpu.dot_dimension_numbers<[1], [0], [0], [1], [0, 0, 1, 1], [], []>} : vector<64x8xbf16>, vector<8x8xbf16>, vector<64x8xf32> -> vector<64x8xf32>
    %208 = arith.addf %202, %207 : vector<64x8xf32>
    %c1_139 = arith.constant 1 : index
    %c15_140 = arith.constant 15 : index
    %c0_141 = arith.constant 0 : index
    %209 = vector.load %arg22[%c1_139, %c15_140, %c0_141] : memref<3x96x8xbf16, #tpu.memory_space<vmem>>, vector<1x64x8xbf16>
    %210 = vector.shape_cast %209 : vector<1x64x8xbf16> to vector<64x8xbf16>
    %c3_142 = arith.constant 3 : index
    %c0_143 = arith.constant 0 : index
    %c0_144 = arith.constant 0 : index
    %211 = vector.load %arg12[%c3_142, %c0_143, %c0_144] : memref<9x8x8xbf16, #tpu.memory_space<vmem>>, vector<1x8x8xbf16>
    %212 = vector.shape_cast %211 : vector<1x8x8xbf16> to vector<8x8xbf16>
    %cst_145 = arith.constant dense<0.000000e+00> : vector<64x8xf32>
    %213 = tpu.matmul %210, %212, %cst_145 {dimension_numbers = #tpu.dot_dimension_numbers<[1], [0], [0], [1], [0, 0, 1, 1], [], []>} : vector<64x8xbf16>, vector<8x8xbf16>, vector<64x8xf32> -> vector<64x8xf32>
    %214 = arith.addf %208, %213 : vector<64x8xf32>
    %c2_146 = arith.constant 2 : index
    %c17_147 = arith.constant 17 : index
    %c0_148 = arith.constant 0 : index
    %215 = vector.load %arg22[%c2_146, %c17_147, %c0_148] : memref<3x96x8xbf16, #tpu.memory_space<vmem>>, vector<1x64x8xbf16>
    %216 = vector.shape_cast %215 : vector<1x64x8xbf16> to vector<64x8xbf16>
    %c5_149 = arith.constant 5 : index
    %c0_150 = arith.constant 0 : index
    %c0_151 = arith.constant 0 : index
    %217 = vector.load %arg12[%c5_149, %c0_150, %c0_151] : memref<9x8x8xbf16, #tpu.memory_space<vmem>>, vector<1x8x8xbf16>
    %218 = vector.shape_cast %217 : vector<1x8x8xbf16> to vector<8x8xbf16>
    %cst_152 = arith.constant dense<0.000000e+00> : vector<64x8xf32>
    %219 = tpu.matmul %216, %218, %cst_152 {dimension_numbers = #tpu.dot_dimension_numbers<[1], [0], [0], [1], [0, 0, 1, 1], [], []>} : vector<64x8xbf16>, vector<8x8xbf16>, vector<64x8xf32> -> vector<64x8xf32>
    %220 = arith.addf %214, %219 : vector<64x8xf32>
    %c1_153 = arith.constant 1 : index
    %c23_154 = arith.constant 23 : index
    %c0_155 = arith.constant 0 : index
    %221 = vector.load %arg22[%c1_153, %c23_154, %c0_155] : memref<3x96x8xbf16, #tpu.memory_space<vmem>>, vector<1x64x8xbf16>
    %222 = vector.shape_cast %221 : vector<1x64x8xbf16> to vector<64x8xbf16>
    %c6_156 = arith.constant 6 : index
    %c0_157 = arith.constant 0 : index
    %c0_158 = arith.constant 0 : index
    %223 = vector.load %arg12[%c6_156, %c0_157, %c0_158] : memref<9x8x8xbf16, #tpu.memory_space<vmem>>, vector<1x8x8xbf16>
    %224 = vector.shape_cast %223 : vector<1x8x8xbf16> to vector<8x8xbf16>
    %cst_159 = arith.constant dense<0.000000e+00> : vector<64x8xf32>
    %225 = tpu.matmul %222, %224, %cst_159 {dimension_numbers = #tpu.dot_dimension_numbers<[1], [0], [0], [1], [0, 0, 1, 1], [], []>} : vector<64x8xbf16>, vector<8x8xbf16>, vector<64x8xf32> -> vector<64x8xf32>
    %226 = arith.addf %220, %225 : vector<64x8xf32>
    %c0_160 = arith.constant 0 : index
    %c24_161 = arith.constant 24 : index
    %c0_162 = arith.constant 0 : index
    %227 = vector.load %arg22[%c0_160, %c24_161, %c0_162] : memref<3x96x8xbf16, #tpu.memory_space<vmem>>, vector<1x64x8xbf16>
    %228 = vector.shape_cast %227 : vector<1x64x8xbf16> to vector<64x8xbf16>
    %c7_163 = arith.constant 7 : index
    %c0_164 = arith.constant 0 : index
    %c0_165 = arith.constant 0 : index
    %229 = vector.load %arg12[%c7_163, %c0_164, %c0_165] : memref<9x8x8xbf16, #tpu.memory_space<vmem>>, vector<1x8x8xbf16>
    %230 = vector.shape_cast %229 : vector<1x8x8xbf16> to vector<8x8xbf16>
    %cst_166 = arith.constant dense<0.000000e+00> : vector<64x8xf32>
    %231 = tpu.matmul %228, %230, %cst_166 {dimension_numbers = #tpu.dot_dimension_numbers<[1], [0], [0], [1], [0, 0, 1, 1], [], []>} : vector<64x8xbf16>, vector<8x8xbf16>, vector<64x8xf32> -> vector<64x8xf32>
    %232 = arith.addf %226, %231 : vector<64x8xf32>
    %c2_167 = arith.constant 2 : index
    %c25_168 = arith.constant 25 : index
    %c0_169 = arith.constant 0 : index
    %233 = vector.load %arg22[%c2_167, %c25_168, %c0_169] : memref<3x96x8xbf16, #tpu.memory_space<vmem>>, vector<1x64x8xbf16>
    %234 = vector.shape_cast %233 : vector<1x64x8xbf16> to vector<64x8xbf16>
    %c8_170 = arith.constant 8 : index
    %c0_171 = arith.constant 0 : index
    %c0_172 = arith.constant 0 : index
    %235 = vector.load %arg12[%c8_170, %c0_171, %c0_172] : memref<9x8x8xbf16, #tpu.memory_space<vmem>>, vector<1x8x8xbf16>
    %236 = vector.shape_cast %235 : vector<1x8x8xbf16> to vector<8x8xbf16>
    %cst_173 = arith.constant dense<0.000000e+00> : vector<64x8xf32>
    %237 = tpu.matmul %234, %236, %cst_173 {dimension_numbers = #tpu.dot_dimension_numbers<[1], [0], [0], [1], [0, 0, 1, 1], [], []>} : vector<64x8xbf16>, vector<8x8xbf16>, vector<64x8xf32> -> vector<64x8xf32>
    %238 = arith.addf %232, %237 : vector<64x8xf32>
    %c0_174 = arith.constant 0 : index
    %c0_175 = arith.constant 0 : index
    %239 = vector.load %arg13[%c0_174, %c0_175] : memref<1x8xf32, #tpu.memory_space<vmem>>, vector<1x8xf32>
    %240 = vector.broadcast %239 : vector<1x8xf32> to vector<64x8xf32>
    %241 = arith.addf %238, %240 : vector<64x8xf32>
    %242 = arith.negf %241 : vector<64x8xf32>
    %243 = math.exp %242 : vector<64x8xf32>
    %cst_176 = arith.constant 1.000000e+00 : f32
    %244 = vector.broadcast %cst_176 : f32 to vector<64x8xf32>
    %245 = arith.addf %244, %243 : vector<64x8xf32>
    %246 = arith.divf %244, %245 : vector<64x8xf32>
    %247 = arith.mulf %241, %246 : vector<64x8xf32>
    %c0_177 = arith.constant 0 : index
    %c0_178 = arith.constant 0 : index
    %248 = vector.load %arg14[%c0_177, %c0_178] : memref<8x8xbf16, #tpu.memory_space<vmem>>, vector<8x8xbf16>
    %249 = arith.truncf %247 : vector<64x8xf32> to vector<64x8xbf16>
    %cst_179 = arith.constant dense<0.000000e+00> : vector<64x8xf32>
    %250 = tpu.matmul %249, %248, %cst_179 {dimension_numbers = #tpu.dot_dimension_numbers<[1], [0], [0], [1], [0, 0, 1, 1], [], []>} : vector<64x8xbf16>, vector<8x8xbf16>, vector<64x8xf32> -> vector<64x8xf32>
    %c0_180 = arith.constant 0 : index
    %c0_181 = arith.constant 0 : index
    %251 = vector.load %arg15[%c0_180, %c0_181] : memref<1x8xf32, #tpu.memory_space<vmem>>, vector<1x8xf32>
    %252 = vector.broadcast %251 : vector<1x8xf32> to vector<64x8xf32>
    %253 = arith.addf %250, %252 : vector<64x8xf32>
    %254 = arith.negf %253 : vector<64x8xf32>
    %255 = math.exp %254 : vector<64x8xf32>
    %cst_182 = arith.constant 1.000000e+00 : f32
    %256 = vector.broadcast %cst_182 : f32 to vector<64x8xf32>
    %257 = arith.addf %256, %255 : vector<64x8xf32>
    %258 = arith.divf %256, %257 : vector<64x8xf32>
    %259 = arith.mulf %253, %258 : vector<64x8xf32>
    %260 = arith.truncf %259 : vector<64x8xf32> to vector<64x8xbf16>
    %c0_183 = arith.constant 0 : index
    %c16_184 = arith.constant 16 : index
    %c0_185 = arith.constant 0 : index
    %261 = vector.load %arg22[%c0_183, %c16_184, %c0_185] : memref<3x96x8xbf16, #tpu.memory_space<vmem>>, vector<1x64x8xbf16>
    %262 = vector.shape_cast %261 : vector<1x64x8xbf16> to vector<64x8xbf16>
    %263 = vector.shape_cast %260 : vector<64x8xbf16> to vector<1x64x8xbf16>
    tpu.vector_store %arg22[%c0_183, %c16_184, %c0_185], %263 {strides = array<i32>} : memref<3x96x8xbf16, #tpu.memory_space<vmem>>, vector<1x64x8xbf16>,
    %264 = vector.broadcast %56 : vector<64x1xbf16> to vector<64x8xbf16>
    %265 = arith.mulf %260, %264 : vector<64x8xbf16>
    %c1_186 = arith.constant 1 : index
    %c16_187 = arith.constant 16 : index
    %c0_188 = arith.constant 0 : index
    %266 = vector.load %arg22[%c1_186, %c16_187, %c0_188] : memref<3x96x8xbf16, #tpu.memory_space<vmem>>, vector<1x64x8xbf16>
    %267 = vector.shape_cast %266 : vector<1x64x8xbf16> to vector<64x8xbf16>
    %268 = vector.shape_cast %265 : vector<64x8xbf16> to vector<1x64x8xbf16>
    tpu.vector_store %arg22[%c1_186, %c16_187, %c0_188], %268 {strides = array<i32>} : memref<3x96x8xbf16, #tpu.memory_space<vmem>>, vector<1x64x8xbf16>,
    %269 = vector.broadcast %51 : vector<64x1xbf16> to vector<64x8xbf16>
    %270 = arith.mulf %260, %269 : vector<64x8xbf16>
    %c2_189 = arith.constant 2 : index
    %c16_190 = arith.constant 16 : index
    %c0_191 = arith.constant 0 : index
    %271 = vector.load %arg22[%c2_189, %c16_190, %c0_191] : memref<3x96x8xbf16, #tpu.memory_space<vmem>>, vector<1x64x8xbf16>
    %272 = vector.shape_cast %271 : vector<1x64x8xbf16> to vector<64x8xbf16>
    %273 = vector.shape_cast %270 : vector<64x8xbf16> to vector<1x64x8xbf16>
    tpu.vector_store %arg22[%c2_189, %c16_190, %c0_191], %273 {strides = array<i32>} : memref<3x96x8xbf16, #tpu.memory_space<vmem>>, vector<1x64x8xbf16>,
    %c4_192 = arith.constant 4 : index
    %c0_193 = arith.constant 0 : index
    %c0_194 = arith.constant 0 : index
    %274 = vector.load %arg16[%c4_192, %c0_193, %c0_194] : memref<9x8x8xbf16, #tpu.memory_space<vmem>>, vector<1x8x8xbf16>
    %275 = vector.shape_cast %274 : vector<1x8x8xbf16> to vector<8x8xbf16>
    %cst_195 = arith.constant dense<0.000000e+00> : vector<64x8xf32>
    %276 = tpu.matmul %260, %275, %cst_195 {dimension_numbers = #tpu.dot_dimension_numbers<[1], [0], [0], [1], [0, 0, 1, 1], [], []>} : vector<64x8xbf16>, vector<8x8xbf16>, vector<64x8xf32> -> vector<64x8xf32>
    %c1_196 = arith.constant 1 : index
    %c7_197 = arith.constant 7 : index
    %c0_198 = arith.constant 0 : index
    %277 = vector.load %arg22[%c1_196, %c7_197, %c0_198] : memref<3x96x8xbf16, #tpu.memory_space<vmem>>, vector<1x64x8xbf16>
    %278 = vector.shape_cast %277 : vector<1x64x8xbf16> to vector<64x8xbf16>
    %c0_199 = arith.constant 0 : index
    %c0_200 = arith.constant 0 : index
    %c0_201 = arith.constant 0 : index
    %279 = vector.load %arg16[%c0_199, %c0_200, %c0_201] : memref<9x8x8xbf16, #tpu.memory_space<vmem>>, vector<1x8x8xbf16>
    %280 = vector.shape_cast %279 : vector<1x8x8xbf16> to vector<8x8xbf16>
    %cst_202 = arith.constant dense<0.000000e+00> : vector<64x8xf32>
    %281 = tpu.matmul %278, %280, %cst_202 {dimension_numbers = #tpu.dot_dimension_numbers<[1], [0], [0], [1], [0, 0, 1, 1], [], []>} : vector<64x8xbf16>, vector<8x8xbf16>, vector<64x8xf32> -> vector<64x8xf32>
    %282 = arith.addf %276, %281 : vector<64x8xf32>
    %c0_203 = arith.constant 0 : index
    %c8_204 = arith.constant 8 : index
    %c0_205 = arith.constant 0 : index
    %283 = vector.load %arg22[%c0_203, %c8_204, %c0_205] : memref<3x96x8xbf16, #tpu.memory_space<vmem>>, vector<1x64x8xbf16>
    %284 = vector.shape_cast %283 : vector<1x64x8xbf16> to vector<64x8xbf16>
    %c1_206 = arith.constant 1 : index
    %c0_207 = arith.constant 0 : index
    %c0_208 = arith.constant 0 : index
    %285 = vector.load %arg16[%c1_206, %c0_207, %c0_208] : memref<9x8x8xbf16, #tpu.memory_space<vmem>>, vector<1x8x8xbf16>
    %286 = vector.shape_cast %285 : vector<1x8x8xbf16> to vector<8x8xbf16>
    %cst_209 = arith.constant dense<0.000000e+00> : vector<64x8xf32>
    %287 = tpu.matmul %284, %286, %cst_209 {dimension_numbers = #tpu.dot_dimension_numbers<[1], [0], [0], [1], [0, 0, 1, 1], [], []>} : vector<64x8xbf16>, vector<8x8xbf16>, vector<64x8xf32> -> vector<64x8xf32>
    %288 = arith.addf %282, %287 : vector<64x8xf32>
    %c2_210 = arith.constant 2 : index
    %c9_211 = arith.constant 9 : index
    %c0_212 = arith.constant 0 : index
    %289 = vector.load %arg22[%c2_210, %c9_211, %c0_212] : memref<3x96x8xbf16, #tpu.memory_space<vmem>>, vector<1x64x8xbf16>
    %290 = vector.shape_cast %289 : vector<1x64x8xbf16> to vector<64x8xbf16>
    %c2_213 = arith.constant 2 : index
    %c0_214 = arith.constant 0 : index
    %c0_215 = arith.constant 0 : index
    %291 = vector.load %arg16[%c2_213, %c0_214, %c0_215] : memref<9x8x8xbf16, #tpu.memory_space<vmem>>, vector<1x8x8xbf16>
    %292 = vector.shape_cast %291 : vector<1x8x8xbf16> to vector<8x8xbf16>
    %cst_216 = arith.constant dense<0.000000e+00> : vector<64x8xf32>
    %293 = tpu.matmul %290, %292, %cst_216 {dimension_numbers = #tpu.dot_dimension_numbers<[1], [0], [0], [1], [0, 0, 1, 1], [], []>} : vector<64x8xbf16>, vector<8x8xbf16>, vector<64x8xf32> -> vector<64x8xf32>
    %294 = arith.addf %288, %293 : vector<64x8xf32>
    %c1_217 = arith.constant 1 : index
    %c15_218 = arith.constant 15 : index
    %c0_219 = arith.constant 0 : index
    %295 = vector.load %arg22[%c1_217, %c15_218, %c0_219] : memref<3x96x8xbf16, #tpu.memory_space<vmem>>, vector<1x64x8xbf16>
    %296 = vector.shape_cast %295 : vector<1x64x8xbf16> to vector<64x8xbf16>
    %c3_220 = arith.constant 3 : index
    %c0_221 = arith.constant 0 : index
    %c0_222 = arith.constant 0 : index
    %297 = vector.load %arg16[%c3_220, %c0_221, %c0_222] : memref<9x8x8xbf16, #tpu.memory_space<vmem>>, vector<1x8x8xbf16>
    %298 = vector.shape_cast %297 : vector<1x8x8xbf16> to vector<8x8xbf16>
    %cst_223 = arith.constant dense<0.000000e+00> : vector<64x8xf32>
    %299 = tpu.matmul %296, %298, %cst_223 {dimension_numbers = #tpu.dot_dimension_numbers<[1], [0], [0], [1], [0, 0, 1, 1], [], []>} : vector<64x8xbf16>, vector<8x8xbf16>, vector<64x8xf32> -> vector<64x8xf32>
    %300 = arith.addf %294, %299 : vector<64x8xf32>
    %c2_224 = arith.constant 2 : index
    %c17_225 = arith.constant 17 : index
    %c0_226 = arith.constant 0 : index
    %301 = vector.load %arg22[%c2_224, %c17_225, %c0_226] : memref<3x96x8xbf16, #tpu.memory_space<vmem>>, vector<1x64x8xbf16>
    %302 = vector.shape_cast %301 : vector<1x64x8xbf16> to vector<64x8xbf16>
    %c5_227 = arith.constant 5 : index
    %c0_228 = arith.constant 0 : index
    %c0_229 = arith.constant 0 : index
    %303 = vector.load %arg16[%c5_227, %c0_228, %c0_229] : memref<9x8x8xbf16, #tpu.memory_space<vmem>>, vector<1x8x8xbf16>
    %304 = vector.shape_cast %303 : vector<1x8x8xbf16> to vector<8x8xbf16>
    %cst_230 = arith.constant dense<0.000000e+00> : vector<64x8xf32>
    %305 = tpu.matmul %302, %304, %cst_230 {dimension_numbers = #tpu.dot_dimension_numbers<[1], [0], [0], [1], [0, 0, 1, 1], [], []>} : vector<64x8xbf16>, vector<8x8xbf16>, vector<64x8xf32> -> vector<64x8xf32>
    %306 = arith.addf %300, %305 : vector<64x8xf32>
    %c1_231 = arith.constant 1 : index
    %c23_232 = arith.constant 23 : index
    %c0_233 = arith.constant 0 : index
    %307 = vector.load %arg22[%c1_231, %c23_232, %c0_233] : memref<3x96x8xbf16, #tpu.memory_space<vmem>>, vector<1x64x8xbf16>
    %308 = vector.shape_cast %307 : vector<1x64x8xbf16> to vector<64x8xbf16>
    %c6_234 = arith.constant 6 : index
    %c0_235 = arith.constant 0 : index
    %c0_236 = arith.constant 0 : index
    %309 = vector.load %arg16[%c6_234, %c0_235, %c0_236] : memref<9x8x8xbf16, #tpu.memory_space<vmem>>, vector<1x8x8xbf16>
    %310 = vector.shape_cast %309 : vector<1x8x8xbf16> to vector<8x8xbf16>
    %cst_237 = arith.constant dense<0.000000e+00> : vector<64x8xf32>
    %311 = tpu.matmul %308, %310, %cst_237 {dimension_numbers = #tpu.dot_dimension_numbers<[1], [0], [0], [1], [0, 0, 1, 1], [], []>} : vector<64x8xbf16>, vector<8x8xbf16>, vector<64x8xf32> -> vector<64x8xf32>
    %312 = arith.addf %306, %311 : vector<64x8xf32>
    %c0_238 = arith.constant 0 : index
    %c24_239 = arith.constant 24 : index
    %c0_240 = arith.constant 0 : index
    %313 = vector.load %arg22[%c0_238, %c24_239, %c0_240] : memref<3x96x8xbf16, #tpu.memory_space<vmem>>, vector<1x64x8xbf16>
    %314 = vector.shape_cast %313 : vector<1x64x8xbf16> to vector<64x8xbf16>
    %c7_241 = arith.constant 7 : index
    %c0_242 = arith.constant 0 : index
    %c0_243 = arith.constant 0 : index
    %315 = vector.load %arg16[%c7_241, %c0_242, %c0_243] : memref<9x8x8xbf16, #tpu.memory_space<vmem>>, vector<1x8x8xbf16>
    %316 = vector.shape_cast %315 : vector<1x8x8xbf16> to vector<8x8xbf16>
    %cst_244 = arith.constant dense<0.000000e+00> : vector<64x8xf32>
    %317 = tpu.matmul %314, %316, %cst_244 {dimension_numbers = #tpu.dot_dimension_numbers<[1], [0], [0], [1], [0, 0, 1, 1], [], []>} : vector<64x8xbf16>, vector<8x8xbf16>, vector<64x8xf32> -> vector<64x8xf32>
    %318 = arith.addf %312, %317 : vector<64x8xf32>
    %c2_245 = arith.constant 2 : index
    %c25_246 = arith.constant 25 : index
    %c0_247 = arith.constant 0 : index
    %319 = vector.load %arg22[%c2_245, %c25_246, %c0_247] : memref<3x96x8xbf16, #tpu.memory_space<vmem>>, vector<1x64x8xbf16>
    %320 = vector.shape_cast %319 : vector<1x64x8xbf16> to vector<64x8xbf16>
    %c8_248 = arith.constant 8 : index
    %c0_249 = arith.constant 0 : index
    %c0_250 = arith.constant 0 : index
    %321 = vector.load %arg16[%c8_248, %c0_249, %c0_250] : memref<9x8x8xbf16, #tpu.memory_space<vmem>>, vector<1x8x8xbf16>
    %322 = vector.shape_cast %321 : vector<1x8x8xbf16> to vector<8x8xbf16>
    %cst_251 = arith.constant dense<0.000000e+00> : vector<64x8xf32>
    %323 = tpu.matmul %320, %322, %cst_251 {dimension_numbers = #tpu.dot_dimension_numbers<[1], [0], [0], [1], [0, 0, 1, 1], [], []>} : vector<64x8xbf16>, vector<8x8xbf16>, vector<64x8xf32> -> vector<64x8xf32>
    %324 = arith.addf %318, %323 : vector<64x8xf32>
    %c0_252 = arith.constant 0 : index
    %c0_253 = arith.constant 0 : index
    %325 = vector.load %arg17[%c0_252, %c0_253] : memref<1x8xf32, #tpu.memory_space<vmem>>, vector<1x8xf32>
    %326 = vector.broadcast %325 : vector<1x8xf32> to vector<64x8xf32>
    %327 = arith.addf %324, %326 : vector<64x8xf32>
    %328 = arith.negf %327 : vector<64x8xf32>
    %329 = math.exp %328 : vector<64x8xf32>
    %cst_254 = arith.constant 1.000000e+00 : f32
    %330 = vector.broadcast %cst_254 : f32 to vector<64x8xf32>
    %331 = arith.addf %330, %329 : vector<64x8xf32>
    %332 = arith.divf %330, %331 : vector<64x8xf32>
    %333 = arith.mulf %327, %332 : vector<64x8xf32>
    %c0_255 = arith.constant 0 : index
    %c0_256 = arith.constant 0 : index
    %334 = vector.load %arg18[%c0_255, %c0_256] : memref<8x16xbf16, #tpu.memory_space<vmem>>, vector<8x16xbf16>
    %335 = arith.truncf %333 : vector<64x8xf32> to vector<64x8xbf16>
    %cst_257 = arith.constant dense<0.000000e+00> : vector<64x16xf32>
    %336 = tpu.matmul %335, %334, %cst_257 {dimension_numbers = #tpu.dot_dimension_numbers<[1], [0], [0], [1], [0, 0, 1, 1], [], []>} : vector<64x8xbf16>, vector<8x16xbf16>, vector<64x16xf32> -> vector<64x16xf32>
    %c0_258 = arith.constant 0 : index
    %c0_259 = arith.constant 0 : index
    %337 = vector.load %arg19[%c0_258, %c0_259] : memref<8x16xbf16, #tpu.memory_space<vmem>>, vector<8x16xbf16>
    %cst_260 = arith.constant dense<0.000000e+00> : vector<64x16xf32>
    %338 = tpu.matmul %29, %337, %cst_260 {dimension_numbers = #tpu.dot_dimension_numbers<[1], [0], [0], [1], [0, 0, 1, 1], [], []>} : vector<64x8xbf16>, vector<8x16xbf16>, vector<64x16xf32> -> vector<64x16xf32>
    %339 = arith.addf %336, %338 : vector<64x16xf32>
    %c0_261 = arith.constant 0 : index
    %c0_262 = arith.constant 0 : index
    %340 = vector.load %arg20[%c0_261, %c0_262] : memref<1x16xf32, #tpu.memory_space<vmem>>, vector<1x16xf32>
    %341 = vector.broadcast %340 : vector<1x16xf32> to vector<64x16xf32>
    %342 = arith.addf %339, %341 : vector<64x16xf32>
    %343 = arith.negf %342 : vector<64x16xf32>
    %344 = math.exp %343 : vector<64x16xf32>
    %cst_263 = arith.constant 1.000000e+00 : f32
    %345 = vector.broadcast %cst_263 : f32 to vector<64x16xf32>
    %346 = arith.addf %345, %344 : vector<64x16xf32>
    %347 = arith.divf %345, %346 : vector<64x16xf32>
    %348 = arith.mulf %342, %347 : vector<64x16xf32>
    %c0_264 = arith.constant 0 : index
    %c0_265 = arith.constant 0 : index
    %c0_266 = arith.constant 0 : index
    %349 = vector.load %arg21[%c0_264, %c0_265, %c0_266] : memref<1x64x16xf32, #tpu.memory_space<vmem>>, vector<1x64x16xf32>
    %350 = vector.shape_cast %349 : vector<1x64x16xf32> to vector<64x16xf32>
    %351 = vector.shape_cast %348 : vector<64x16xf32> to vector<1x64x16xf32>
    tpu.vector_store %arg21[%c0_264, %c0_265, %c0_266], %351 {strides = array<i32>} : memref<1x64x16xf32, #tpu.memory_space<vmem>>, vector<1x64x16xf32>,
    return
  }
  func.func @transform_0(%arg0: i32) -> (i32, i32, i32, i32) {
    %c0_i32 = arith.constant 0 : i32
    %c0_i32_0 = arith.constant 0 : i32
    %c0_i32_1 = arith.constant 0 : i32
    %c0_i32_2 = arith.constant 0 : i32
    return %arg0, %c0_i32, %c0_i32_0, %c0_i32_1 : i32, i32, i32, i32
  }
  func.func @transform_1(%arg0: i32) -> (i32, i32, i32) {
    %c0_i32 = arith.constant 0 : i32
    %c0_i32_0 = arith.constant 0 : i32
    %c0_i32_1 = arith.constant 0 : i32
    return %arg0, %c0_i32, %c0_i32_0 : i32, i32, i32
  }
  func.func @transform_2(%arg0: i32) -> (i32, i32) {
    %c0_i32 = arith.constant 0 : i32
    %c0_i32_0 = arith.constant 0 : i32
    %c0_i32_1 = arith.constant 0 : i32
    return %c0_i32, %c0_i32_0 : i32, i32
  }
  func.func @transform_3(%arg0: i32) -> (i32, i32) {
    %c0_i32 = arith.constant 0 : i32
    %c0_i32_0 = arith.constant 0 : i32
    %c0_i32_1 = arith.constant 0 : i32
    return %c0_i32, %c0_i32_0 : i32, i32
  }
  func.func @transform_4(%arg0: i32) -> (i32, i32) {
    %c0_i32 = arith.constant 0 : i32
    %c0_i32_0 = arith.constant 0 : i32
    %c0_i32_1 = arith.constant 0 : i32
    return %c0_i32, %c0_i32_0 : i32, i32
  }
  func.func @transform_5(%arg0: i32) -> (i32, i32) {
    %c0_i32 = arith.constant 0 : i32
    %c0_i32_0 = arith.constant 0 : i32
    %c0_i32_1 = arith.constant 0 : i32
    return %c0_i32, %c0_i32_0 : i32, i32
  }
  func.func @transform_6(%arg0: i32) -> (i32, i32) {
    %c0_i32 = arith.constant 0 : i32
    %c0_i32_0 = arith.constant 0 : i32
    %c0_i32_1 = arith.constant 0 : i32
    return %c0_i32, %c0_i32_0 : i32, i32
  }
  func.func @transform_7(%arg0: i32) -> (i32, i32, i32) {
    %c0_i32 = arith.constant 0 : i32
    %c0_i32_0 = arith.constant 0 : i32
    %c0_i32_1 = arith.constant 0 : i32
    %c0_i32_2 = arith.constant 0 : i32
    return %c0_i32, %c0_i32_0, %c0_i32_1 : i32, i32, i32
  }
  func.func @transform_8(%arg0: i32) -> (i32, i32) {
    %c0_i32 = arith.constant 0 : i32
    %c0_i32_0 = arith.constant 0 : i32
    %c0_i32_1 = arith.constant 0 : i32
    return %c0_i32, %c0_i32_0 : i32, i32
  }
  func.func @transform_9(%arg0: i32) -> (i32, i32) {
    %c0_i32 = arith.constant 0 : i32
    %c0_i32_0 = arith.constant 0 : i32
    %c0_i32_1 = arith.constant 0 : i32
    return %c0_i32, %c0_i32_0 : i32, i32
  }
  func.func @transform_10(%arg0: i32) -> (i32, i32) {
    %c0_i32 = arith.constant 0 : i32
    %c0_i32_0 = arith.constant 0 : i32
    %c0_i32_1 = arith.constant 0 : i32
    return %c0_i32, %c0_i32_0 : i32, i32
  }
  func.func @transform_11(%arg0: i32) -> (i32, i32, i32) {
    %c0_i32 = arith.constant 0 : i32
    %c0_i32_0 = arith.constant 0 : i32
    %c0_i32_1 = arith.constant 0 : i32
    %c0_i32_2 = arith.constant 0 : i32
    return %c0_i32, %c0_i32_0, %c0_i32_1 : i32, i32, i32
  }
  func.func @transform_12(%arg0: i32) -> (i32, i32) {
    %c0_i32 = arith.constant 0 : i32
    %c0_i32_0 = arith.constant 0 : i32
    %c0_i32_1 = arith.constant 0 : i32
    return %c0_i32, %c0_i32_0 : i32, i32
  }
  func.func @transform_13(%arg0: i32) -> (i32, i32) {
    %c0_i32 = arith.constant 0 : i32
    %c0_i32_0 = arith.constant 0 : i32
    %c0_i32_1 = arith.constant 0 : i32
    return %c0_i32, %c0_i32_0 : i32, i32
  }
  func.func @transform_14(%arg0: i32) -> (i32, i32) {
    %c0_i32 = arith.constant 0 : i32
    %c0_i32_0 = arith.constant 0 : i32
    %c0_i32_1 = arith.constant 0 : i32
    return %c0_i32, %c0_i32_0 : i32, i32
  }
  func.func @transform_15(%arg0: i32) -> (i32, i32, i32) {
    %c0_i32 = arith.constant 0 : i32
    %c0_i32_0 = arith.constant 0 : i32
    %c0_i32_1 = arith.constant 0 : i32
    %c0_i32_2 = arith.constant 0 : i32
    return %c0_i32, %c0_i32_0, %c0_i32_1 : i32, i32, i32
  }
  func.func @transform_16(%arg0: i32) -> (i32, i32) {
    %c0_i32 = arith.constant 0 : i32
    %c0_i32_0 = arith.constant 0 : i32
    %c0_i32_1 = arith.constant 0 : i32
    return %c0_i32, %c0_i32_0 : i32, i32
  }
  func.func @transform_17(%arg0: i32) -> (i32, i32) {
    %c0_i32 = arith.constant 0 : i32
    %c0_i32_0 = arith.constant 0 : i32
    %c0_i32_1 = arith.constant 0 : i32
    return %c0_i32, %c0_i32_0 : i32, i32
  }
  func.func @transform_18(%arg0: i32) -> (i32, i32) {
    %c0_i32 = arith.constant 0 : i32
    %c0_i32_0 = arith.constant 0 : i32
    %c0_i32_1 = arith.constant 0 : i32
    return %c0_i32, %c0_i32_0 : i32, i32
  }
  func.func @transform_19(%arg0: i32) -> (i32, i32) {
    %c0_i32 = arith.constant 0 : i32
    %c0_i32_0 = arith.constant 0 : i32
    %c0_i32_1 = arith.constant 0 : i32
    return %c0_i32, %c0_i32_0 : i32, i32
  }
  func.func @transform_20(%arg0: i32) -> (i32, i32, i32) {
    %c0_i32 = arith.constant 0 : i32
    %c0_i32_0 = arith.constant 0 : i32
    %c0_i32_1 = arith.constant 0 : i32
    return %arg0, %c0_i32, %c0_i32_0 : i32, i32, i32
  }
}

</mosaic_0001>

<llo_original>
// kernel: downsampling_block_forward.1
$region0: #{downsampling_block_forward.1}
  #allocation0 [shape = 'u32[]', space=smem, size = 0x4, offset = 0x4, fixed_abs, tag = 'smem constant byte address 0x4 - core index']
  #allocation1 [shape = 'u32[144,128]{1,0:T(1,128)}', space=vmem, size = 0x12000, scoped, tag = 'internal scratch']
  #allocation2 [shape = 'bf16[3,96,8]{2,1,0:T(16,128)(2,1)}', space=vmem, size = 0x12000, scoped, tag = 'scratch operand']
  %s0 = inlined_call_operand.vmem [shape: f32[2,8,16,16], index: 0, kind: input, shape index: {}]
  %s1 = inlined_call_operand.vmem [shape: f32[2,64,8], index: 1, kind: input, shape index: {}]
  %s2 = inlined_call_operand.vmem [shape: bf16[8,16], index: 2, kind: input, shape index: {}]
  %s3 = inlined_call_operand.vmem [shape: bf16[8,16], index: 3, kind: input, shape index: {}]
  %s4 = inlined_call_operand.vmem [shape: f32[1,16], index: 4, kind: input, shape index: {}]
  %s5 = inlined_call_operand.vmem [shape: bf16[8,8], index: 5, kind: input, shape index: {}]
  %s6 = inlined_call_operand.vmem [shape: f32[1,8], index: 6, kind: input, shape index: {}]
  %s7 = inlined_call_operand.vmem [shape: bf16[9,8,8], index: 7, kind: input, shape index: {}]
  %s8 = inlined_call_operand.vmem [shape: f32[1,8], index: 8, kind: input, shape index: {}]
  %s9 = inlined_call_operand.vmem [shape: bf16[8,8], index: 9, kind: input, shape index: {}]
  %s10 = inlined_call_operand.vmem [shape: f32[1,8], index: 10, kind: input, shape index: {}]
  %s11 = inlined_call_operand.vmem [shape: bf16[9,8,8], index: 11, kind: input, shape index: {}]
  %s12 = inlined_call_operand.vmem [shape: f32[1,8], index: 12, kind: input, shape index: {}]
  %s13 = inlined_call_operand.vmem [shape: bf16[8,8], index: 13, kind: input, shape index: {}]
  %s14 = inlined_call_operand.vmem [shape: f32[1,8], index: 14, kind: input, shape index: {}]
  %s15 = inlined_call_operand.vmem [shape: bf16[9,8,8], index: 15, kind: input, shape index: {}]
  %s16 = inlined_call_operand.vmem [shape: f32[1,8], index: 16, kind: input, shape index: {}]
  %s17 = inlined_call_operand.vmem [shape: bf16[8,16], index: 17, kind: input, shape index: {}]
  %s18 = inlined_call_operand.vmem [shape: bf16[8,16], index: 18, kind: input, shape index: {}]
  %s19 = inlined_call_operand.vmem [shape: f32[1,16], index: 19, kind: input, shape index: {}]
  %s20 = inlined_call_operand.hbm [shape: f32[2,64,16], index: 20, kind: output, shape index: {}]
  %s21 = sld [smem:[#allocation0]]
  $region113: #{downsampling_block_forward.1} parent=0
    _
  %s23 = ssub.s32 1, %s21
  %s24 = scalar_select 0, %s23, %s21
  $region1: #{downsampling_block_forward.1} parent=0
    #allocation3 [shape = 'u8[65536]{0}', space=vmem, size = 0x10000, scoped, tag = 'output window, operand 0']
    #allocation4 [shape = 's32[2]{0}', space=sflag, size = 0x8, scoped, tag = 'scoped memory for downsampling_block_forward.1']
    %25 = vsyncpa [#allocation4], 0
    %s26 = scalar_lea.sflag [#allocation4], 1
    %27 = vsyncpa %s26, 0
    loop: start=0, step=1, limit=4
    $region2: #{downsampling_block_forward.1} parent=1 // loop_pre_header
      _
    $region3: #{downsampling_block_forward.1} parent=1 // loop_header
      %s29 = sphi 0, %s33
      %p30 = scmp.ge.s32.totalorder %s29, 4
      %s39 = sphi 0, %s41
      %s42 = sphi 0, %s39
      %s43 = sphi 0, %s42
      %s59 = sphi 0, %s43
      %s65 = sphi 0, %s67
      %s68 = sphi 0, %s65
      %s69 = sphi 0, %s68
      %s85 = sphi 0, %s69
      %s89 = sphi 0, %s89
      %s91 = sphi 0, %s89
      %s92 = sphi 0, %s91
      %s106 = sphi 0, %s92
      %s110 = sphi 0, %s110
      %s112 = sphi 0, %s110
      %s113 = sphi 0, %s112
      %s127 = sphi 0, %s113
      %s131 = sphi 0, %s131
      %s133 = sphi 0, %s131
      %s134 = sphi 0, %s133
      %s148 = sphi 0, %s134
      %s152 = sphi 0, %s152
      %s154 = sphi 0, %s152
      %s155 = sphi 0, %s154
      %s169 = sphi 0, %s155
      %s173 = sphi 0, %s173
      %s175 = sphi 0, %s173
      %s176 = sphi 0, %s175
      %s190 = sphi 0, %s176
      %s194 = sphi 0, %s194
      %s196 = sphi 0, %s194
      %s197 = sphi 0, %s196
      %s211 = sphi 0, %s197
      %s215 = sphi 0, %s215
      %s217 = sphi 0, %s215
      %s218 = sphi 0, %s217
      %s232 = sphi 0, %s218
      %s236 = sphi 0, %s236
      %s238 = sphi 0, %s236
      %s239 = sphi 0, %s238
      %s253 = sphi 0, %s239
      %s257 = sphi 0, %s257
      %s259 = sphi 0, %s257
      %s260 = sphi 0, %s259
      %s274 = sphi 0, %s260
      %s278 = sphi 0, %s278
      %s280 = sphi 0, %s278
      %s281 = sphi 0, %s280
      %s295 = sphi 0, %s281
      %s299 = sphi 0, %s299
      %s301 = sphi 0, %s299
      %s302 = sphi 0, %s301
      %s316 = sphi 0, %s302
      %s320 = sphi 0, %s320
      %s322 = sphi 0, %s320
      %s323 = sphi 0, %s322
      %s337 = sphi 0, %s323
      %s341 = sphi 0, %s341
      %s343 = sphi 0, %s341
      %s344 = sphi 0, %s343
      %s358 = sphi 0, %s344
      %s362 = sphi 0, %s362
      %s364 = sphi 0, %s362
      %s365 = sphi 0, %s364
      %s379 = sphi 0, %s365
      %s383 = sphi 0, %s383
      %s385 = sphi 0, %s383
      %s386 = sphi 0, %s385
      %s400 = sphi 0, %s386
      %s404 = sphi 0, %s404
      %s406 = sphi 0, %s404
      %s407 = sphi 0, %s406
      %s421 = sphi 0, %s407
      %s425 = sphi 0, %s425
      %s427 = sphi 0, %s425
      %s428 = sphi 0, %s427
      %s442 = sphi 0, %s428
      %s446 = sphi 0, %s446
      %s448 = sphi 0, %s446
      %s449 = sphi 0, %s448
      %s463 = sphi 0, %s449
      %s469 = sphi 0, %s471
      %s472 = sphi 0, %s469
      %s473 = sphi 0, %s472
      %s489 = sphi 0, %s473
    $region4: #{downsampling_block_forward.1} parent=1 // loop_header_branch
      %32 = sbr.rel (%p30) target = $region8
    $region5: #{downsampling_block_forward.1} parent=1 // loop_body
      %s34 = ssub.s32 %s29, 1
      %s35 = ssub.s32 %s29, 2
      %s36 = sadd.s32 %s29, 1
      %s37 = ssub.s32 %s29, %s36
      %p38 = scmp.eq.s32.totalorder %s37, 0
      %s40 = sadd.s32 %s39, 1
      %s41 = scalar_select %p38, %s39, %s40
      %p44 = pneg %p38
      %p45 = scmp.eq.s32.totalorder %s29, 1
      %p46 = por %p44, %p45
      %p47 = scmp.ne.s32.totalorder %s39, %s42
      %p48 = scmp.eq.s32.totalorder %s29, 0
      %p49 = por %p47, %p48
      %p50 = scmp.ne.s32.totalorder %s39, %s42
      %p51 = scmp.eq.s32.totalorder %s34, 1
      %p52 = por %p50, %p51
      %p53 = scmp.ne.s32.totalorder %s42, %s43
      %p54 = scmp.eq.s32.totalorder %s34, 0
      %p55 = por %p53, %p54
      %p56 = scmp.ne.s32.totalorder %s42, %s43
      %p57 = scmp.eq.s32.totalorder %s35, 1
      %p58 = por %p56, %p57
      %p60 = scmp.ne.s32.totalorder %s43, %s59
      %p61 = scmp.eq.s32.totalorder %s35, 0
      %p62 = por %p60, %p61
      %s63 = ssub.s32 %s29, %s36
      %p64 = scmp.eq.s32.totalorder %s63, 0
      %s66 = sadd.s32 %s65, 1
      %s67 = scalar_select %p64, %s65, %s66
      %p70 = pneg %p64
      %p71 = scmp.eq.s32.totalorder %s29, 1
      %p72 = por %p70, %p71
      %p73 = scmp.ne.s32.totalorder %s65, %s68
      %p74 = scmp.eq.s32.totalorder %s29, 0
      %p75 = por %p73, %p74
      %p76 = scmp.ne.s32.totalorder %s65, %s68
      %p77 = scmp.eq.s32.totalorder %s34, 1
      %p78 = por %p76, %p77
      %p79 = scmp.ne.s32.totalorder %s68, %s69
      %p80 = scmp.eq.s32.totalorder %s34, 0
      %p81 = por %p79, %p80
      %p82 = scmp.ne.s32.totalorder %s68, %s69
      %p83 = scmp.eq.s32.totalorder %s35, 1
      %p84 = por %p82, %p83
      %p86 = scmp.ne.s32.totalorder %s69, %s85
      %p87 = scmp.eq.s32.totalorder %s35, 0
      %p88 = por %p86, %p87
      %s90 = sadd.s32 %s89, 1
      %p93 = scmp.eq.s32.totalorder %s29, 1
      %p94 = scmp.ne.s32.totalorder %s89, %s91
      %p95 = scmp.eq.s32.totalorder %s29, 0
      %p96 = por %p94, %p95
      %p97 = scmp.ne.s32.totalorder %s89, %s91
      %p98 = scmp.eq.s32.totalorder %s34, 1
      %p99 = por %p97, %p98
      %p100 = scmp.ne.s32.totalorder %s91, %s92
      %p101 = scmp.eq.s32.totalorder %s34, 0
      %p102 = por %p100, %p101
      %p103 = scmp.ne.s32.totalorder %s91, %s92
      %p104 = scmp.eq.s32.totalorder %s35, 1
      %p105 = por %p103, %p104
      %p107 = scmp.ne.s32.totalorder %s92, %s106
      %p108 = scmp.eq.s32.totalorder %s35, 0
      %p109 = por %p107, %p108
      %s111 = sadd.s32 %s110, 1
      %p114 = scmp.eq.s32.totalorder %s29, 1
      %p115 = scmp.ne.s32.totalorder %s110, %s112
      %p116 = scmp.eq.s32.totalorder %s29, 0
      %p117 = por %p115, %p116
      %p118 = scmp.ne.s32.totalorder %s110, %s112
      %p119 = scmp.eq.s32.totalorder %s34, 1
      %p120 = por %p118, %p119
      %p121 = scmp.ne.s32.totalorder %s112, %s113
      %p122 = scmp.eq.s32.totalorder %s34, 0
      %p123 = por %p121, %p122
      %p124 = scmp.ne.s32.totalorder %s112, %s113
      %p125 = scmp.eq.s32.totalorder %s35, 1
      %p126 = por %p124, %p125
      %p128 = scmp.ne.s32.totalorder %s113, %s127
      %p129 = scmp.eq.s32.totalorder %s35, 0
      %p130 = por %p128, %p129
      %s132 = sadd.s32 %s131, 1
      %p135 = scmp.eq.s32.totalorder %s29, 1
      %p136 = scmp.ne.s32.totalorder %s131, %s133
      %p137 = scmp.eq.s32.totalorder %s29, 0
      %p138 = por %p136, %p137
      %p139 = scmp.ne.s32.totalorder %s131, %s133
      %p140 = scmp.eq.s32.totalorder %s34, 1
      %p141 = por %p139, %p140
      %p142 = scmp.ne.s32.totalorder %s133, %s134
      %p143 = scmp.eq.s32.totalorder %s34, 0
      %p144 = por %p142, %p143
      %p145 = scmp.ne.s32.totalorder %s133, %s134
      %p146 = scmp.eq.s32.totalorder %s35, 1
      %p147 = por %p145, %p146
      %p149 = scmp.ne.s32.totalorder %s134, %s148
      %p150 = scmp.eq.s32.totalorder %s35, 0
      %p151 = por %p149, %p150
      %s153 = sadd.s32 %s152, 1
      %p156 = scmp.eq.s32.totalorder %s29, 1
      %p157 = scmp.ne.s32.totalorder %s152, %s154
      %p158 = scmp.eq.s32.totalorder %s29, 0
      %p159 = por %p157, %p158
      %p160 = scmp.ne.s32.totalorder %s152, %s154
      %p161 = scmp.eq.s32.totalorder %s34, 1
      %p162 = por %p160, %p161
      %p163 = scmp.ne.s32.totalorder %s154, %s155
      %p164 = scmp.eq.s32.totalorder %s34, 0
      %p165 = por %p163, %p164
      %p166 = scmp.ne.s32.totalorder %s154, %s155
      %p167 = scmp.eq.s32.totalorder %s35, 1
      %p168 = por %p166, %p167
      %p170 = scmp.ne.s32.totalorder %s155, %s169
      %p171 = scmp.eq.s32.totalorder %s35, 0
      %p172 = por %p170, %p171
      %s174 = sadd.s32 %s173, 1
      %p177 = scmp.eq.s32.totalorder %s29, 1
      %p178 = scmp.ne.s32.totalorder %s173, %s175
      %p179 = scmp.eq.s32.totalorder %s29, 0
      %p180 = por %p178, %p179
      %p181 = scmp.ne.s32.totalorder %s173, %s175
      %p182 = scmp.eq.s32.totalorder %s34, 1
      %p183 = por %p181, %p182
      %p184 = scmp.ne.s32.totalorder %s175, %s176
      %p185 = scmp.eq.s32.totalorder %s34, 0
      %p186 = por %p184, %p185
      %p187 = scmp.ne.s32.totalorder %s175, %s176
      %p188 = scmp.eq.s32.totalorder %s35, 1
      %p189 = por %p187, %p188
      %p191 = scmp.ne.s32.totalorder %s176, %s190
      %p192 = scmp.eq.s32.totalorder %s35, 0
      %p193 = por %p191, %p192
      %s195 = sadd.s32 %s194, 1
      %p198 = scmp.eq.s32.totalorder %s29, 1
      %p199 = scmp.ne.s32.totalorder %s194, %s196
      %p200 = scmp.eq.s32.totalorder %s29, 0
      %p201 = por %p199, %p200
      %p202 = scmp.ne.s32.totalorder %s194, %s196
      %p203 = scmp.eq.s32.totalorder %s34, 1
      %p204 = por %p202, %p203
      %p205 = scmp.ne.s32.totalorder %s196, %s197
      %p206 = scmp.eq.s32.totalorder %s34, 0
      %p207 = por %p205, %p206
      %p208 = scmp.ne.s32.totalorder %s196, %s197
      %p209 = scmp.eq.s32.totalorder %s35, 1
      %p210 = por %p208, %p209
      %p212 = scmp.ne.s32.totalorder %s197, %s211
      %p213 = scmp.eq.s32.totalorder %s35, 0
      %p214 = por %p212, %p213
      %s216 = sadd.s32 %s215, 1
      %p219 = scmp.eq.s32.totalorder %s29, 1
      %p220 = scmp.ne.s32.totalorder %s215, %s217
      %p221 = scmp.eq.s32.totalorder %s29, 0
      %p222 = por %p220, %p221
      %p223 = scmp.ne.s32.totalorder %s215, %s217
      %p224 = scmp.eq.s32.totalorder %s34, 1
      %p225 = por %p223, %p224
      %p226 = scmp.ne.s32.totalorder %s217, %s218
      %p227 = scmp.eq.s32.totalorder %s34, 0
      %p228 = por %p226, %p227
      %p229 = scmp.ne.s32.totalorder %s217, %s218
      %p230 = scmp.eq.s32.totalorder %s35, 1
      %p231 = por %p229, %p230
      %p233 = scmp.ne.s32.totalorder %s218, %s232
      %p234 = scmp.eq.s32.totalorder %s35, 0
      %p235 = por %p233, %p234
      %s237 = sadd.s32 %s236, 1
      %p240 = scmp.eq.s32.totalorder %s29, 1
      %p241 = scmp.ne.s32.totalorder %s236, %s238
      %p242 = scmp.eq.s32.totalorder %s29, 0
      %p243 = por %p241, %p242
      %p244 = scmp.ne.s32.totalorder %s236, %s238
      %p245 = scmp.eq.s32.totalorder %s34, 1
      %p246 = por %p244, %p245
      %p247 = scmp.ne.s32.totalorder %s238, %s239
      %p248 = scmp.eq.s32.totalorder %s34, 0
      %p249 = por %p247, %p248
      %p250 = scmp.ne.s32.totalorder %s238, %s239
      %p251 = scmp.eq.s32.totalorder %s35, 1
      %p252 = por %p250, %p251
      %p254 = scmp.ne.s32.totalorder %s239, %s253
      %p255 = scmp.eq.s32.totalorder %s35, 0
      %p256 = por %p254, %p255
      %s258 = sadd.s32 %s257, 1
      %p261 = scmp.eq.s32.totalorder %s29, 1
      %p262 = scmp.ne.s32.totalorder %s257, %s259
      %p263 = scmp.eq.s32.totalorder %s29, 0
      %p264 = por %p262, %p263
      %p265 = scmp.ne.s32.totalorder %s257, %s259
      %p266 = scmp.eq.s32.totalorder %s34, 1
      %p267 = por %p265, %p266
      %p268 = scmp.ne.s32.totalorder %s259, %s260
      %p269 = scmp.eq.s32.totalorder %s34, 0
      %p270 = por %p268, %p269
      %p271 = scmp.ne.s32.totalorder %s259, %s260
      %p272 = scmp.eq.s32.totalorder %s35, 1
      %p273 = por %p271, %p272
      %p275 = scmp.ne.s32.totalorder %s260, %s274
      %p276 = scmp.eq.s32.totalorder %s35, 0
      %p277 = por %p275, %p276
      %s279 = sadd.s32 %s278, 1
      %p282 = scmp.eq.s32.totalorder %s29, 1
      %p283 = scmp.ne.s32.totalorder %s278, %s280
      %p284 = scmp.eq.s32.totalorder %s29, 0
      %p285 = por %p283, %p284
      %p286 = scmp.ne.s32.totalorder %s278, %s280
      %p287 = scmp.eq.s32.totalorder %s34, 1
      %p288 = por %p286, %p287
      %p289 = scmp.ne.s32.totalorder %s280, %s281
      %p290 = scmp.eq.s32.totalorder %s34, 0
      %p291 = por %p289, %p290
      %p292 = scmp.ne.s32.totalorder %s280, %s281
      %p293 = scmp.eq.s32.totalorder %s35, 1
      %p294 = por %p292, %p293
      %p296 = scmp.ne.s32.totalorder %s281, %s295
      %p297 = scmp.eq.s32.totalorder %s35, 0
      %p298 = por %p296, %p297
      %s300 = sadd.s32 %s299, 1
      %p303 = scmp.eq.s32.totalorder %s29, 1
      %p304 = scmp.ne.s32.totalorder %s299, %s301
      %p305 = scmp.eq.s32.totalorder %s29, 0
      %p306 = por %p304, %p305
      %p307 = scmp.ne.s32.totalorder %s299, %s301
      %p308 = scmp.eq.s32.totalorder %s34, 1
      %p309 = por %p307, %p308
      %p310 = scmp.ne.s32.totalorder %s301, %s302
      %p311 = scmp.eq.s32.totalorder %s34, 0
      %p312 = por %p310, %p311
      %p313 = scmp.ne.s32.totalorder %s301, %s302
      %p314 = scmp.eq.s32.totalorder %s35, 1
      %p315 = por %p313, %p314
      %p317 = scmp.ne.s32.totalorder %s302, %s316
      %p318 = scmp.eq.s32.totalorder %s35, 0
      %p319 = por %p317, %p318
      %s321 = sadd.s32 %s320, 1
      %p324 = scmp.eq.s32.totalorder %s29, 1
      %p325 = scmp.ne.s32.totalorder %s320, %s322
      %p326 = scmp.eq.s32.totalorder %s29, 0
      %p327 = por %p325, %p326
      %p328 = scmp.ne.s32.totalorder %s320, %s322
      %p329 = scmp.eq.s32.totalorder %s34, 1
      %p330 = por %p328, %p329
      %p331 = scmp.ne.s32.totalorder %s322, %s323
      %p332 = scmp.eq.s32.totalorder %s34, 0
      %p333 = por %p331, %p332
      %p334 = scmp.ne.s32.totalorder %s322, %s323
      %p335 = scmp.eq.s32.totalorder %s35, 1
      %p336 = por %p334, %p335
      %p338 = scmp.ne.s32.totalorder %s323, %s337
      %p339 = scmp.eq.s32.totalorder %s35, 0
      %p340 = por %p338, %p339
      %s342 = sadd.s32 %s341, 1
      %p345 = scmp.eq.s32.totalorder %s29, 1
      %p346 = scmp.ne.s32.totalorder %s341, %s343
      %p347 = scmp.eq.s32.totalorder %s29, 0
      %p348 = por %p346, %p347
      %p349 = scmp.ne.s32.totalorder %s341, %s343
      %p350 = scmp.eq.s32.totalorder %s34, 1
      %p351 = por %p349, %p350
      %p352 = scmp.ne.s32.totalorder %s343, %s344
      %p353 = scmp.eq.s32.totalorder %s34, 0
      %p354 = por %p352, %p353
      %p355 = scmp.ne.s32.totalorder %s343, %s344
      %p356 = scmp.eq.s32.totalorder %s35, 1
      %p357 = por %p355, %p356
      %p359 = scmp.ne.s32.totalorder %s344, %s358
      %p360 = scmp.eq.s32.totalorder %s35, 0
      %p361 = por %p359, %p360
      %s363 = sadd.s32 %s362, 1
      %p366 = scmp.eq.s32.totalorder %s29, 1
      %p367 = scmp.ne.s32.totalorder %s362, %s364
      %p368 = scmp.eq.s32.totalorder %s29, 0
      %p369 = por %p367, %p368
      %p370 = scmp.ne.s32.totalorder %s362, %s364
      %p371 = scmp.eq.s32.totalorder %s34, 1
      %p372 = por %p370, %p371
      %p373 = scmp.ne.s32.totalorder %s364, %s365
      %p374 = scmp.eq.s32.totalorder %s34, 0
      %p375 = por %p373, %p374
      %p376 = scmp.ne.s32.totalorder %s364, %s365
      %p377 = scmp.eq.s32.totalorder %s35, 1
      %p378 = por %p376, %p377
      %p380 = scmp.ne.s32.totalorder %s365, %s379
      %p381 = scmp.eq.s32.totalorder %s35, 0
      %p382 = por %p380, %p381
      %s384 = sadd.s32 %s383, 1
      %p387 = scmp.eq.s32.totalorder %s29, 1
      %p388 = scmp.ne.s32.totalorder %s383, %s385
      %p389 = scmp.eq.s32.totalorder %s29, 0
      %p390 = por %p388, %p389
      %p391 = scmp.ne.s32.totalorder %s383, %s385
      %p392 = scmp.eq.s32.totalorder %s34, 1
      %p393 = por %p391, %p392
      %p394 = scmp.ne.s32.totalorder %s385, %s386
      %p395 = scmp.eq.s32.totalorder %s34, 0
      %p396 = por %p394, %p395
      %p397 = scmp.ne.s32.totalorder %s385, %s386
      %p398 = scmp.eq.s32.totalorder %s35, 1
      %p399 = por %p397, %p398
      %p401 = scmp.ne.s32.totalorder %s386, %s400
      %p402 = scmp.eq.s32.totalorder %s35, 0
      %p403 = por %p401, %p402
      %s405 = sadd.s32 %s404, 1
      %p408 = scmp.eq.s32.totalorder %s29, 1
      %p409 = scmp.ne.s32.totalorder %s404, %s406
      %p410 = scmp.eq.s32.totalorder %s29, 0
      %p411 = por %p409, %p410
      %p412 = scmp.ne.s32.totalorder %s404, %s406
      %p413 = scmp.eq.s32.totalorder %s34, 1
      %p414 = por %p412, %p413
      %p415 = scmp.ne.s32.totalorder %s406, %s407
      %p416 = scmp.eq.s32.totalorder %s34, 0
      %p417 = por %p415, %p416
      %p418 = scmp.ne.s32.totalorder %s406, %s407
      %p419 = scmp.eq.s32.totalorder %s35, 1
      %p420 = por %p418, %p419
      %p422 = scmp.ne.s32.totalorder %s407, %s421
      %p423 = scmp.eq.s32.totalorder %s35, 0
      %p424 = por %p422, %p423
      %s426 = sadd.s32 %s425, 1
      %p429 = scmp.eq.s32.totalorder %s29, 1
      %p430 = scmp.ne.s32.totalorder %s425, %s427
      %p431 = scmp.eq.s32.totalorder %s29, 0
      %p432 = por %p430, %p431
      %p433 = scmp.ne.s32.totalorder %s425, %s427
      %p434 = scmp.eq.s32.totalorder %s34, 1
      %p435 = por %p433, %p434
      %p436 = scmp.ne.s32.totalorder %s427, %s428
      %p437 = scmp.eq.s32.totalorder %s34, 0
      %p438 = por %p436, %p437
      %p439 = scmp.ne.s32.totalorder %s427, %s428
      %p440 = scmp.eq.s32.totalorder %s35, 1
      %p441 = por %p439, %p440
      %p443 = scmp.ne.s32.totalorder %s428, %s442
      %p444 = scmp.eq.s32.totalorder %s35, 0
      %p445 = por %p443, %p444
      %s447 = sadd.s32 %s446, 1
      %p450 = scmp.eq.s32.totalorder %s29, 1
      %p451 = scmp.ne.s32.totalorder %s446, %s448
      %p452 = scmp.eq.s32.totalorder %s29, 0
      %p453 = por %p451, %p452
      %p454 = scmp.ne.s32.totalorder %s446, %s448
      %p455 = scmp.eq.s32.totalorder %s34, 1
      %p456 = por %p454, %p455
      %p457 = scmp.ne.s32.totalorder %s448, %s449
      %p458 = scmp.eq.s32.totalorder %s34, 0
      %p459 = por %p457, %p458
      %p460 = scmp.ne.s32.totalorder %s448, %s449
      %p461 = scmp.eq.s32.totalorder %s35, 1
      %p462 = por %p460, %p461
      %p464 = scmp.ne.s32.totalorder %s449, %s463
      %p465 = scmp.eq.s32.totalorder %s35, 0
      %p466 = por %p464, %p465
      %s467 = ssub.s32 %s29, %s36
      %p468 = scmp.eq.s32.totalorder %s467, 0
      %s470 = sadd.s32 %s469, 1
      %s471 = scalar_select %p468, %s469, %s470
      %p474 = pneg %p468
      %p475 = scmp.eq.s32.totalorder %s29, 1
      %p476 = por %p474, %p475
      %p477 = scmp.ne.s32.totalorder %s469, %s472
      %p478 = scmp.eq.s32.totalorder %s29, 0
      %p479 = por %p477, %p478
      %p480 = scmp.ne.s32.totalorder %s469, %s472
      %p481 = scmp.eq.s32.totalorder %s34, 1
      %p482 = por %p480, %p481
      %p483 = scmp.ne.s32.totalorder %s472, %s473
      %p484 = scmp.eq.s32.totalorder %s34, 0
      %p485 = por %p483, %p484
      %p486 = scmp.ne.s32.totalorder %s472, %s473
      %p487 = scmp.eq.s32.totalorder %s35, 1
      %p488 = por %p486, %p487
      %p490 = scmp.ne.s32.totalorder %s473, %s489
      %p491 = scmp.eq.s32.totalorder %s35, 0
      %p492 = por %p490, %p491
      %p493 = scmp.le.s32.totalorder 1, %s29
      %p494 = scmp.lt.s32.totalorder %s29, 3
      %p495 = pnand %p493, %p494
      %p496 = pneg %p495
      // Predicated region
      $region9: #{downsampling_block_forward.1} parent=5 // pred_check
        _
      $region10: #{downsampling_block_forward.1} parent=5 // pred_check_branch
        %498 = sbr.rel (%p495) target = $region12
      $region11: #{downsampling_block_forward.1} parent=5 // pred_region
        %s499 = ssub.s32 %s29, 1
        // Predicated region
        $region13: #{downsampling_block_forward.1} parent=11 // pred_check
          %p500 = pneg %p102
        $region14: #{downsampling_block_forward.1} parent=11 // pred_check_branch
          %502 = sbr.rel (%p500) target = $region16
        $region15: #{downsampling_block_forward.1} parent=11 // pred_region
          _
        $region16: #{downsampling_block_forward.1} parent=11 // pred_fallthru
          _
        // Predicated region
        $region17: #{downsampling_block_forward.1} parent=11 // pred_check
          %p503 = pneg %p123
        $region18: #{downsampling_block_forward.1} parent=11 // pred_check_branch
          %505 = sbr.rel (%p503) target = $region20
        $region19: #{downsampling_block_forward.1} parent=11 // pred_region
          _
        $region20: #{downsampling_block_forward.1} parent=11 // pred_fallthru
          _
        // Predicated region
        $region21: #{downsampling_block_forward.1} parent=11 // pred_check
          %p506 = pneg %p144
        $region22: #{downsampling_block_forward.1} parent=11 // pred_check_branch
          %508 = sbr.rel (%p506) target = $region24
        $region23: #{downsampling_block_forward.1} parent=11 // pred_region
          _
        $region24: #{downsampling_block_forward.1} parent=11 // pred_fallthru
          _
        // Predicated region
        $region25: #{downsampling_block_forward.1} parent=11 // pred_check
          %p509 = pneg %p165
        $region26: #{downsampling_block_forward.1} parent=11 // pred_check_branch
          %511 = sbr.rel (%p509) target = $region28
        $region27: #{downsampling_block_forward.1} parent=11 // pred_region
          _
        $region28: #{downsampling_block_forward.1} parent=11 // pred_fallthru
          _
        // Predicated region
        $region29: #{downsampling_block_forward.1} parent=11 // pred_check
          %p512 = pneg %p186
        $region30: #{downsampling_block_forward.1} parent=11 // pred_check_branch
          %514 = sbr.rel (%p512) target = $region32
        $region31: #{downsampling_block_forward.1} parent=11 // pred_region
          _
        $region32: #{downsampling_block_forward.1} parent=11 // pred_fallthru
          _
        // Predicated region
        $region33: #{downsampling_block_forward.1} parent=11 // pred_check
          %p515 = pneg %p207
        $region34: #{downsampling_block_forward.1} parent=11 // pred_check_branch
          %517 = sbr.rel (%p515) target = $region36
        $region35: #{downsampling_block_forward.1} parent=11 // pred_region
          _
        $region36: #{downsampling_block_forward.1} parent=11 // pred_fallthru
          _
        // Predicated region
        $region37: #{downsampling_block_forward.1} parent=11 // pred_check
          %p518 = pneg %p228
        $region38: #{downsampling_block_forward.1} parent=11 // pred_check_branch
          %520 = sbr.rel (%p518) target = $region40
        $region39: #{downsampling_block_forward.1} parent=11 // pred_region
          _
        $region40: #{downsampling_block_forward.1} parent=11 // pred_fallthru
          _
        // Predicated region
        $region41: #{downsampling_block_forward.1} parent=11 // pred_check
          %p521 = pneg %p249
        $region42: #{downsampling_block_forward.1} parent=11 // pred_check_branch
          %523 = sbr.rel (%p521) target = $region44
        $region43: #{downsampling_block_forward.1} parent=11 // pred_region
          _
        $region44: #{downsampling_block_forward.1} parent=11 // pred_fallthru
          _
        // Predicated region
        $region45: #{downsampling_block_forward.1} parent=11 // pred_check
          %p524 = pneg %p270
        $region46: #{downsampling_block_forward.1} parent=11 // pred_check_branch
          %526 = sbr.rel (%p524) target = $region48
        $region47: #{downsampling_block_forward.1} parent=11 // pred_region
          _
        $region48: #{downsampling_block_forward.1} parent=11 // pred_fallthru
          _
        // Predicated region
        $region49: #{downsampling_block_forward.1} parent=11 // pred_check
          %p527 = pneg %p291
        $region50: #{downsampling_block_forward.1} parent=11 // pred_check_branch
          %529 = sbr.rel (%p527) target = $region52
        $region51: #{downsampling_block_forward.1} parent=11 // pred_region
          _
        $region52: #{downsampling_block_forward.1} parent=11 // pred_fallthru
          _
        // Predicated region
        $region53: #{downsampling_block_forward.1} parent=11 // pred_check
          %p530 = pneg %p312
        $region54: #{downsampling_block_forward.1} parent=11 // pred_check_branch
          %532 = sbr.rel (%p530) target = $region56
        $region55: #{downsampling_block_forward.1} parent=11 // pred_region
          _
        $region56: #{downsampling_block_forward.1} parent=11 // pred_fallthru
          _
        // Predicated region
        $region57: #{downsampling_block_forward.1} parent=11 // pred_check
          %p533 = pneg %p333
        $region58: #{downsampling_block_forward.1} parent=11 // pred_check_branch
          %535 = sbr.rel (%p533) target = $region60
        $region59: #{downsampling_block_forward.1} parent=11 // pred_region
          _
        $region60: #{downsampling_block_forward.1} parent=11 // pred_fallthru
          _
        // Predicated region
        $region61: #{downsampling_block_forward.1} parent=11 // pred_check
          %p536 = pneg %p354
        $region62: #{downsampling_block_forward.1} parent=11 // pred_check_branch
          %538 = sbr.rel (%p536) target = $region64
        $region63: #{downsampling_block_forward.1} parent=11 // pred_region
          _
        $region64: #{downsampling_block_forward.1} parent=11 // pred_fallthru
          _
        // Predicated region
        $region65: #{downsampling_block_forward.1} parent=11 // pred_check
          %p539 = pneg %p375
        $region66: #{downsampling_block_forward.1} parent=11 // pred_check_branch
          %541 = sbr.rel (%p539) target = $region68
        $region67: #{downsampling_block_forward.1} parent=11 // pred_region
          _
        $region68: #{downsampling_block_forward.1} parent=11 // pred_fallthru
          _
        // Predicated region
        $region69: #{downsampling_block_forward.1} parent=11 // pred_check
          %p542 = pneg %p396
        $region70: #{downsampling_block_forward.1} parent=11 // pred_check_branch
          %544 = sbr.rel (%p542) target = $region72
        $region71: #{downsampling_block_forward.1} parent=11 // pred_region
          _
        $region72: #{downsampling_block_forward.1} parent=11 // pred_fallthru
          _
        // Predicated region
        $region73: #{downsampling_block_forward.1} parent=11 // pred_check
          %p545 = pneg %p417
        $region74: #{downsampling_block_forward.1} parent=11 // pred_check_branch
          %547 = sbr.rel (%p545) target = $region76
        $region75: #{downsampling_block_forward.1} parent=11 // pred_region
          _
        $region76: #{downsampling_block_forward.1} parent=11 // pred_fallthru
          _
        // Predicated region
        $region77: #{downsampling_block_forward.1} parent=11 // pred_check
          %p548 = pneg %p438
        $region78: #{downsampling_block_forward.1} parent=11 // pred_check_branch
          %550 = sbr.rel (%p548) target = $region80
        $region79: #{downsampling_block_forward.1} parent=11 // pred_region
          _
        $region80: #{downsampling_block_forward.1} parent=11 // pred_fallthru
          _
        // Predicated region
        $region81: #{downsampling_block_forward.1} parent=11 // pred_check
          %p551 = pneg %p459
        $region82: #{downsampling_block_forward.1} parent=11 // pred_check_branch
          %553 = sbr.rel (%p551) target = $region84
        $region83: #{downsampling_block_forward.1} parent=11 // pred_region
          _
        $region84: #{downsampling_block_forward.1} parent=11 // pred_fallthru
          _
      $region12: #{downsampling_block_forward.1} parent=5 // pred_fallthru
        _
      %p554 = scmp.lt.s32.totalorder %s29, 2
      // Predicated region
      $region85: #{downsampling_block_forward.1} parent=5 // pred_check
        %p555 = pneg %p554
      $region86: #{downsampling_block_forward.1} parent=5 // pred_check_branch
        %557 = sbr.rel (%p555) target = $region88
      $region87: #{downsampling_block_forward.1} parent=5 // pred_region
        // Predicated region
        $region89: #{downsampling_block_forward.1} parent=87 // pred_check
          %p558 = pneg %p49
        $region90: #{downsampling_block_forward.1} parent=87 // pred_check_branch
          %560 = sbr.rel (%p558) target = $region92
        $region91: #{downsampling_block_forward.1} parent=87 // pred_region
          %p561 = scmp.lt.s32.totalorder %s29, 1
          %s562 = scalar_select %p561, %s29, 1
          %s563 = smul.addr %s562, 16
          %s564 = smul.addr %s563, 8
          %s565 = scalar_lea.vmem %s0, %s564
        $region92: #{downsampling_block_forward.1} parent=87 // pred_fallthru
          _
        // Predicated region
        $region93: #{downsampling_block_forward.1} parent=87 // pred_check
          %p566 = pneg %p75
        $region94: #{downsampling_block_forward.1} parent=87 // pred_check_branch
          %568 = sbr.rel (%p566) target = $region96
        $region95: #{downsampling_block_forward.1} parent=87 // pred_region
          %p569 = scmp.lt.s32.totalorder %s29, 1
          %s570 = scalar_select %p569, %s29, 1
          %s571 = smul.addr %s570, 8
          %s572 = smul.addr %s571, 8
          %s573 = scalar_lea.vmem %s1, %s572
        $region96: #{downsampling_block_forward.1} parent=87 // pred_fallthru
          _
      $region88: #{downsampling_block_forward.1} parent=5 // pred_fallthru
        _
      %p574 = scmp.le.s32.totalorder 1, %s29
      %p575 = scmp.lt.s32.totalorder %s29, 3
      %p576 = pnand %p574, %p575
      %p577 = pneg %p576
      // Predicated region
      $region97: #{downsampling_block_forward.1} parent=5 // pred_check
        _
      $region98: #{downsampling_block_forward.1} parent=5 // pred_check_branch
        %579 = sbr.rel (%p576) target = $region100
      $region99: #{downsampling_block_forward.1} parent=5 // pred_region
        %s580 = ssub.s32 %s29, 1
        %p581 = scmp.lt.s32.totalorder %s34, 1
        %s582 = scalar_select %p581, %s34, 1
        %s583 = smul.addr %s582, 16
        %s584 = smul.addr %s583, 8
        %s585 = scalar_lea.vmem %s0, %s584
        %p586 = pneg %p55
        %p587 = pneg %p52
        %p588 = scmp.lt.s32.totalorder %s34, 1
        %s589 = scalar_select %p588, %s34, 1
        %s590 = smul.addr %s589, 8
        %s591 = smul.addr %s590, 8
        %s592 = scalar_lea.vmem %s1, %s591
        %p593 = pneg %p81
        %p594 = pneg %p78
        %p595 = pneg %p102
        %p596 = pneg %p99
        %p597 = pneg %p123
        %p598 = pneg %p120
        %p599 = pneg %p144
        %p600 = pneg %p141
        %p601 = pneg %p165
        %p602 = pneg %p162
        %p603 = pneg %p186
        %p604 = pneg %p183
        %p605 = pneg %p207
        %p606 = pneg %p204
        %p607 = pneg %p228
        %p608 = pneg %p225
        %p609 = pneg %p249
        %p610 = pneg %p246
        %p611 = pneg %p270
        %p612 = pneg %p267
        %p613 = pneg %p291
        %p614 = pneg %p288
        %p615 = pneg %p312
        %p616 = pneg %p309
        %p617 = pneg %p333
        %p618 = pneg %p330
        %p619 = pneg %p354
        %p620 = pneg %p351
        %p621 = pneg %p375
        %p622 = pneg %p372
        %p623 = pneg %p396
        %p624 = pneg %p393
        %p625 = pneg %p417
        %p626 = pneg %p414
        %p627 = pneg %p438
        %p628 = pneg %p435
        %p629 = pneg %p459
        %p630 = pneg %p456
        %p631 = pneg %p485
        %p632 = pneg %p482
        %s633 = sand.u32 %s472, 1
        %s634 = scalar_lea.sflag [#allocation4], %s633
        %s635 = sand.u32 %s472, 1
        %s636 = smul.addr %s635, 64
        %s637 = scalar_lea.vmem [#allocation3], %s636
        %p638 = scmp.lt.s32.totalorder %s34, 1
        %s639 = scalar_select %p638, %s34, 1
        %s640 = smul.addr %s639, 16
        %s641 = smul.addr %s640, 8
        %s642 = scalar_lea.vmem %s0, %s641
        %p643 = scmp.lt.s32.totalorder %s34, 1
        %s644 = scalar_select %p643, %s34, 1
        %s645 = smul.addr %s644, 8
        %s646 = smul.addr %s645, 8
        %s647 = scalar_lea.vmem %s1, %s646
        %v649 = vld [vmem:[%s642] sm:$0xff]
        %v650 = vld [vmem:[%s642 + $0x8] sm:$0xff]
        %v651 = vld [vmem:[%s642 + $0x10] sm:$0xff]
        %v652 = vld [vmem:[%s642 + $0x18] sm:$0xff]
        %v653 = vld [vmem:[%s642 + $0x20] sm:$0xff]
        %v654 = vld [vmem:[%s642 + $0x28] sm:$0xff]
        %v655 = vld [vmem:[%s642 + $0x30] sm:$0xff]
        %v656 = vld [vmem:[%s642 + $0x38] sm:$0xff]
        %v657 = vld [vmem:[%s642 + $0x40] sm:$0xff]
        %v658 = vld [vmem:[%s642 + $0x48] sm:$0xff]
        %v659 = vld [vmem:[%s642 + $0x50] sm:$0xff]
        %v660 = vld [vmem:[%s642 + $0x58] sm:$0xff]
        %v661 = vld [vmem:[%s642 + $0x60] sm:$0xff]
        %v662 = vld [vmem:[%s642 + $0x68] sm:$0xff]
        %v663 = vld [vmem:[%s642 + $0x70] sm:$0xff]
        %v664 = vld [vmem:[%s642 + $0x78] sm:$0xff]
        %v665 = vmax.f32 %v649, %v650
        %v666 = vmax.f32 %v651, %v652
        %v667 = vmax.f32 %v653, %v654
        %v668 = vmax.f32 %v655, %v656
        %v669 = vmax.f32 %v657, %v658
        %v670 = vmax.f32 %v659, %v660
        %v671 = vmax.f32 %v661, %v662
        %v672 = vmax.f32 %v663, %v664
        %681 = vrot.lane.b32.xlu0 %v665, 120
        %v682 = vpop.permute.xlu0 %681
        %683 = vrot.lane.b32.xlu0 %v666, 120
        %v684 = vpop.permute.xlu0 %683
        %685 = vrot.lane.b32.xlu0 %v667, 120
        %v686 = vpop.permute.xlu0 %685
        %687 = vrot.lane.b32.xlu0 %v668, 120
        %v688 = vpop.permute.xlu0 %687
        %689 = vrot.lane.b32.xlu0 %v669, 120
        %v690 = vpop.permute.xlu0 %689
        %691 = vrot.lane.b32.xlu0 %v670, 120
        %v692 = vpop.permute.xlu0 %691
        %693 = vrot.lane.b32.xlu0 %v671, 120
        %v694 = vpop.permute.xlu0 %693
        %695 = vrot.lane.b32.xlu0 %v672, 120
        %v696 = vpop.permute.xlu0 %695
        %v705 = vmax.f32 %v665, %v682
        %v706 = vmax.f32 %v666, %v684
        %v707 = vmax.f32 %v667, %v686
        %v708 = vmax.f32 %v668, %v688
        %v709 = vmax.f32 %v669, %v690
        %v710 = vmax.f32 %v670, %v692
        %v711 = vmax.f32 %v671, %v694
        %v712 = vmax.f32 %v672, %v696
        %v713 = vld [vmem:[%s647] sm:$0xff]
        %v714 = vld [vmem:[%s647 + $0x8] sm:$0xff]
        %v715 = vld [vmem:[%s647 + $0x10] sm:$0xff]
        %v716 = vld [vmem:[%s647 + $0x18] sm:$0xff]
        %v717 = vld [vmem:[%s647 + $0x20] sm:$0xff]
        %v718 = vld [vmem:[%s647 + $0x28] sm:$0xff]
        %v719 = vld [vmem:[%s647 + $0x30] sm:$0xff]
        %v720 = vld [vmem:[%s647 + $0x38] sm:$0xff]
        %v721 = vld [vmem:[%s2] sm:$0xf]
        %v722 = vpack.c.bf16 %v714, %v713
        %v723 = vpack.c.bf16 %v716, %v715
        %v724 = vpack.c.bf16 %v718, %v717
        %v725 = vpack.c.bf16 %v720, %v719
        %v726 = vld [vmem:[%s3] sm:$0xf]
        %v727 = vpack.c.bf16 %v706, %v705
        %v728 = vpack.c.bf16 %v708, %v707
        %v729 = vpack.c.bf16 %v710, %v709
        %v730 = vpack.c.bf16 %v712, %v711
        %vm731 = vcmask 64512
        %v733 = vsel %vm731, %v727, 0
        %v736 = vsel %vm731, %v728, 0
        %v739 = vsel %vm731, %v729, 0
        %v742 = vsel %vm731, %v730, 0
        %vm744 = vcmask 1043456
        %v746 = vsel %vm744, %v726, 0
        %748 = vmatprep.subr.bf16.mxu0 0
        %749 = vmatpush1.bf16.msra.mxu0 %v746
        %750 = vmatprep.subr.bf16.mxu0 0
        %751 = vmatpush1.bf16.msra.mxu0 0
        %752 = vmatprep.subr.bf16.mxu0 0
        %753 = vmatpush1.bf16.msra.mxu0 0
        %754 = vmatprep.subr.bf16.mxu0 0
        %755 = vmatpush1.bf16.msra.mxu0 0
        %756 = vmatprep.subr.bf16.mxu0 0
        %757 = vmatpush1.bf16.msra.mxu0 0
        %758 = vmatprep.subr.bf16.mxu0 0
        %759 = vmatpush1.bf16.msra.mxu0 0
        %760 = vmatprep.subr.bf16.mxu0 0
        %761 = vmatpush1.bf16.msra.mxu0 0
        %762 = vmatprep.subr.bf16.mxu0 0
        %763 = vmatpush1.bf16.msra.mxu0 0
        %764 = vmatprep.subr.bf16.mxu0 0
        %765 = vmatpush1.bf16.msra.mxu0 0
        %766 = vmatprep.subr.bf16.mxu0 0
        %767 = vmatpush1.bf16.msra.mxu0 0
        %768 = vmatprep.subr.bf16.mxu0 0
        %769 = vmatpush1.bf16.msra.mxu0 0
        %770 = vmatprep.subr.bf16.mxu0 0
        %771 = vmatpush1.bf16.msra.mxu0 0
        %772 = vmatprep.subr.bf16.mxu0 0
        %773 = vmatpush1.bf16.msra.mxu0 0
        %774 = vmatprep.subr.bf16.mxu0 0
        %775 = vmatpush1.bf16.msra.mxu0 0
        %776 = vmatprep.subr.bf16.mxu0 0
        %777 = vmatpush1.bf16.msra.mxu0 0
        %778 = vmatprep.subr.bf16.mxu0 0
        %779 = vmatpush1.bf16.msra.mxu0 0
        %780 = vmatprep.mubr.bf16.mxu0 0
        %781 = vmatmul.mubr.bf16.gmra.mrb[0].mxu0 %v733
        %v782 = vpop.f32.mrb[0].mxu0
        %v783 = vadd.f32 0.0, %v782
        %v784 = vpop.f32.mrb[0].mxu0
        %v785 = vpop.f32.mrb[0].mxu0
        %v786 = vadd.f32 0.0, %v785
        %v787 = vpop.f32.mrb[0].mxu0
        %788 = vmatprep.mubr.bf16.mxu0 0
        %789 = vmatmul.mubr.bf16.gmra.mrb[0].mxu0 %v736
        %v790 = vpop.f32.mrb[0].mxu0
        %v791 = vadd.f32 0.0, %v790
        %v792 = vpop.f32.mrb[0].mxu0
        %v793 = vpop.f32.mrb[0].mxu0
        %v794 = vadd.f32 0.0, %v793
        %v795 = vpop.f32.mrb[0].mxu0
        %796 = vmatprep.mubr.bf16.mxu0 0
        %797 = vmatmul.mubr.bf16.gmra.mrb[0].mxu0 %v739
        %v798 = vpop.f32.mrb[0].mxu0
        %v799 = vadd.f32 0.0, %v798
        %v800 = vpop.f32.mrb[0].mxu0
        %v801 = vpop.f32.mrb[0].mxu0
        %v802 = vadd.f32 0.0, %v801
        %v803 = vpop.f32.mrb[0].mxu0
        %804 = vmatprep.mubr.bf16.mxu0 0
        %805 = vmatmul.mubr.bf16.gmra.mrb[0].mxu0 %v742
        %v806 = vpop.f32.mrb[0].mxu0
        %v807 = vadd.f32 0.0, %v806
        %v808 = vpop.f32.mrb[0].mxu0
        %v809 = vpop.f32.mrb[0].mxu0
        %v810 = vadd.f32 0.0, %v809
        %v811 = vpop.f32.mrb[0].mxu0
        %812 = vdwg.mxu0
        %v814 = vsel %vm731, %v722, 0
        %v817 = vsel %vm731, %v723, 0
        %v820 = vsel %vm731, %v724, 0
        %v823 = vsel %vm731, %v725, 0
        %v826 = vsel %vm744, %v721, 0
        %828 = vmatprep.subr.bf16.mxu0 0
        %829 = vmatpush1.bf16.msra.mxu0 %v826
        %830 = vmatprep.subr.bf16.mxu0 0
        %831 = vmatpush1.bf16.msra.mxu0 0
        %832 = vmatprep.subr.bf16.mxu0 0
        %833 = vmatpush1.bf16.msra.mxu0 0
        %834 = vmatprep.subr.bf16.mxu0 0
        %835 = vmatpush1.bf16.msra.mxu0 0
        %836 = vmatprep.subr.bf16.mxu0 0
        %837 = vmatpush1.bf16.msra.mxu0 0
        %838 = vmatprep.subr.bf16.mxu0 0
        %839 = vmatpush1.bf16.msra.mxu0 0
        %840 = vmatprep.subr.bf16.mxu0 0
        %841 = vmatpush1.bf16.msra.mxu0 0
        %842 = vmatprep.subr.bf16.mxu0 0
        %843 = vmatpush1.bf16.msra.mxu0 0
        %844 = vmatprep.subr.bf16.mxu0 0
        %845 = vmatpush1.bf16.msra.mxu0 0
        %846 = vmatprep.subr.bf16.mxu0 0
        %847 = vmatpush1.bf16.msra.mxu0 0
        %848 = vmatprep.subr.bf16.mxu0 0
        %849 = vmatpush1.bf16.msra.mxu0 0
        %850 = vmatprep.subr.bf16.mxu0 0
        %851 = vmatpush1.bf16.msra.mxu0 0
        %852 = vmatprep.subr.bf16.mxu0 0
        %853 = vmatpush1.bf16.msra.mxu0 0
        %854 = vmatprep.subr.bf16.mxu0 0
        %855 = vmatpush1.bf16.msra.mxu0 0
        %856 = vmatprep.subr.bf16.mxu0 0
        %857 = vmatpush1.bf16.msra.mxu0 0
        %858 = vmatprep.subr.bf16.mxu0 0
        %859 = vmatpush1.bf16.msra.mxu0 0
        %860 = vmatprep.mubr.bf16.mxu0 0
        %861 = vmatmul.mubr.bf16.gmra.mrb[0].mxu0 %v814
        %v862 = vpop.f32.mrb[0].mxu0
        %v863 = vadd.f32 %v783, %v862
        %v864 = vpop.f32.mrb[0].mxu0
        %v865 = vpop.f32.mrb[0].mxu0
        %v866 = vadd.f32 %v786, %v865
        %v867 = vpop.f32.mrb[0].mxu0
        %868 = vmatprep.mubr.bf16.mxu0 0
        %869 = vmatmul.mubr.bf16.gmra.mrb[0].mxu0 %v817
        %v870 = vpop.f32.mrb[0].mxu0
        %v871 = vadd.f32 %v791, %v870
        %v872 = vpop.f32.mrb[0].mxu0
        %v873 = vpop.f32.mrb[0].mxu0
        %v874 = vadd.f32 %v794, %v873
        %v875 = vpop.f32.mrb[0].mxu0
        %876 = vmatprep.mubr.bf16.mxu0 0
        %877 = vmatmul.mubr.bf16.gmra.mrb[0].mxu0 %v820
        %v878 = vpop.f32.mrb[0].mxu0
        %v879 = vadd.f32 %v799, %v878
        %v880 = vpop.f32.mrb[0].mxu0
        %v881 = vpop.f32.mrb[0].mxu0
        %v882 = vadd.f32 %v802, %v881
        %v883 = vpop.f32.mrb[0].mxu0
        %884 = vmatprep.mubr.bf16.mxu0 0
        %885 = vmatmul.mubr.bf16.gmra.mrb[0].mxu0 %v823
        %v886 = vpop.f32.mrb[0].mxu0
        %v887 = vadd.f32 %v807, %v886
        %v888 = vpop.f32.mrb[0].mxu0
        %v889 = vpop.f32.mrb[0].mxu0
        %v890 = vadd.f32 %v810, %v889
        %v891 = vpop.f32.mrb[0].mxu0
        %892 = vdwg.mxu0
        %v893 = vld [vmem:[%s4] sm:$0x1]
        %v895 = vlaneseq
        %v896 = vshrl.u32 %v895, 7
        %v897 = vsub.s32 0, %v896
        %v898 = vrot.slane %v893, %v897
        %v900 = vadd.f32 %v863, %v898
        %v901 = vadd.f32 %v866, %v898
        %v902 = vadd.f32 %v871, %v898
        %v903 = vadd.f32 %v874, %v898
        %v904 = vadd.f32 %v879, %v898
        %v905 = vadd.f32 %v882, %v898
        %v906 = vadd.f32 %v887, %v898
        %v907 = vadd.f32 %v890, %v898
        %v908 = vxor.u32 %v900, 2147483648
        %v909 = vxor.u32 %v901, 2147483648
        %v910 = vxor.u32 %v902, 2147483648
        %v911 = vxor.u32 %v903, 2147483648
        %v912 = vxor.u32 %v904, 2147483648
        %v913 = vxor.u32 %v905, 2147483648
        %v914 = vxor.u32 %v906, 2147483648
        %v915 = vxor.u32 %v907, 2147483648
        %v916 = vmul.f32 %v908, 1.442695
        %v917 = vpow.pop %v916
        %v918 = vmul.f32 %v909, 1.442695
        %v919 = vpow.pop %v918
        %v920 = vmul.f32 %v910, 1.442695
        %v921 = vpow.pop %v920
        %v922 = vmul.f32 %v911, 1.442695
        %v923 = vpow.pop %v922
        %v924 = vmul.f32 %v912, 1.442695
        %v925 = vpow.pop %v924
        %v926 = vmul.f32 %v913, 1.442695
        %v927 = vpow.pop %v926
        %v928 = vmul.f32 %v914, 1.442695
        %v929 = vpow.pop %v928
        %v930 = vmul.f32 %v915, 1.442695
        %v931 = vpow.pop %v930
        %v932 = vadd.f32 %v917, 1.0
        %v933 = vadd.f32 %v919, 1.0
        %v934 = vadd.f32 %v921, 1.0
        %v935 = vadd.f32 %v923, 1.0
        %v936 = vadd.f32 %v925, 1.0
        %v937 = vadd.f32 %v927, 1.0
        %v938 = vadd.f32 %v929, 1.0
        %v939 = vadd.f32 %v931, 1.0
        %v940 = vrcp.pop %v932
        %v941 = vmul.f32 1.0, %v940
        %v942 = vrcp.pop %v933
        %v943 = vmul.f32 1.0, %v942
        %v944 = vrcp.pop %v934
        %v945 = vmul.f32 1.0, %v944
        %v946 = vrcp.pop %v935
        %v947 = vmul.f32 1.0, %v946
        %v948 = vrcp.pop %v936
        %v949 = vmul.f32 1.0, %v948
        %v950 = vrcp.pop %v937
        %v951 = vmul.f32 1.0, %v950
        %v952 = vrcp.pop %v938
        %v953 = vmul.f32 1.0, %v952
        %v954 = vrcp.pop %v939
        %v955 = vmul.f32 1.0, %v954
        %v956 = vmul.f32 %v900, %v941
        %v957 = vmul.f32 %v901, %v943
        %v958 = vmul.f32 %v902, %v945
        %v959 = vmul.f32 %v903, %v947
        %v960 = vmul.f32 %v904, %v949
        %v961 = vmul.f32 %v905, %v951
        %v962 = vmul.f32 %v906, %v953
        %v963 = vmul.f32 %v907, %v955
        %v964 = vpack.c.bf16 %v957, %v956
        %v965 = vpack.c.bf16 %v959, %v958
        %v966 = vpack.c.bf16 %v961, %v960
        %v967 = vpack.c.bf16 %v963, %v962
        %v968 = vlaneseq
        %v969 = vshrl.u32 %v968, 7
        %v970 = vadd.s32 %v969, 8
        %v971 = vadd.s32 %v969, 16
        %v972 = vadd.s32 %v969, 24
        %v973 = vadd.s32 %v969, 32
        %v974 = vadd.s32 %v969, 40
        %v975 = vadd.s32 %v969, 48
        %v976 = vadd.s32 %v969, 56
        %vm977 = vcmp.lt.s32.totalorder %v969, 0
        %v978 = vsub.s32 0, %v969
        %v979 = vsel %vm977, %v978, %v969
        %v980 = vshrl.u32 %v979, 3
        %v981 = vand.u32 %v979, 7
        %v982 = vsub.s32 0, %v981
        %v983 = vsel %vm977, %v982, %v981
        %vm984 = vcmp.lt.s32.totalorder %v970, 0
        %v985 = vsub.s32 0, %v970
        %v986 = vsel %vm984, %v985, %v970
        %v987 = vshrl.u32 %v986, 3
        %v988 = vand.u32 %v986, 7
        %v989 = vsub.s32 0, %v988
        %v990 = vsel %vm984, %v989, %v988
        %vm991 = vcmp.lt.s32.totalorder %v971, 0
        %v992 = vsub.s32 0, %v971
        %v993 = vsel %vm991, %v992, %v971
        %v994 = vshrl.u32 %v993, 3
        %v995 = vand.u32 %v993, 7
        %v996 = vsub.s32 0, %v995
        %v997 = vsel %vm991, %v996, %v995
        %vm998 = vcmp.lt.s32.totalorder %v972, 0
        %v999 = vsub.s32 0, %v972
        %v1000 = vsel %vm998, %v999, %v972
        %v1001 = vshrl.u32 %v1000, 3
        %v1002 = vand.u32 %v1000, 7
        %v1003 = vsub.s32 0, %v1002
        %v1004 = vsel %vm998, %v1003, %v1002
        %vm1005 = vcmp.lt.s32.totalorder %v973, 0
        %v1006 = vsub.s32 0, %v973
        %v1007 = vsel %vm1005, %v1006, %v973
        %v1008 = vshrl.u32 %v1007, 3
        %v1009 = vand.u32 %v1007, 7
        %v1010 = vsub.s32 0, %v1009
        %v1011 = vsel %vm1005, %v1010, %v1009
        %vm1012 = vcmp.lt.s32.totalorder %v974, 0
        %v1013 = vsub.s32 0, %v974
        %v1014 = vsel %vm1012, %v1013, %v974
        %v1015 = vshrl.u32 %v1014, 3
        %v1016 = vand.u32 %v1014, 7
        %v1017 = vsub.s32 0, %v1016
        %v1018 = vsel %vm1012, %v1017, %v1016
        %vm1019 = vcmp.lt.s32.totalorder %v975, 0
        %v1020 = vsub.s32 0, %v975
        %v1021 = vsel %vm1019, %v1020, %v975
        %v1022 = vshrl.u32 %v1021, 3
        %v1023 = vand.u32 %v1021, 7
        %v1024 = vsub.s32 0, %v1023
        %v1025 = vsel %vm1019, %v1024, %v1023
        %vm1026 = vcmp.lt.s32.totalorder %v976, 0
        %v1027 = vsub.s32 0, %v976
        %v1028 = vsel %vm1026, %v1027, %v976
        %v1029 = vshrl.u32 %v1028, 3
        %v1030 = vand.u32 %v1028, 7
        %v1031 = vsub.s32 0, %v1030
        %v1032 = vsel %vm1026, %v1031, %v1030
        %vm1033 = vcmp.ne.s32.totalorder %v983, 0
        %vm1034 = vcmp.ne.s32.totalorder %v990, 0
        %vm1035 = vcmp.ne.s32.totalorder %v997, 0
        %vm1036 = vcmp.ne.s32.totalorder %v1004, 0
        %vm1037 = vcmp.ne.s32.totalorder %v1011, 0
        %vm1038 = vcmp.ne.s32.totalorder %v1018, 0
        %vm1039 = vcmp.ne.s32.totalorder %v1025, 0
        %vm1040 = vcmp.ne.s32.totalorder %v1032, 0
        %vm1041 = vcmp.lt.s32.totalorder %v983, 0
        %vm1042 = vcmp.lt.s32.totalorder %v990, 0
        %vm1043 = vcmp.lt.s32.totalorder %v997, 0
        %vm1044 = vcmp.lt.s32.totalorder %v1004, 0
        %vm1045 = vcmp.lt.s32.totalorder %v1011, 0
        %vm1046 = vcmp.lt.s32.totalorder %v1018, 0
        %vm1047 = vcmp.lt.s32.totalorder %v1025, 0
        %vm1048 = vcmp.lt.s32.totalorder %v1032, 0
        %vm1049 = vmand %vm1041, %vm1033
        %vm1050 = vmand %vm1042, %vm1034
        %vm1051 = vmand %vm1043, %vm1035
        %vm1052 = vmand %vm1044, %vm1036
        %vm1053 = vmand %vm1045, %vm1037
        %vm1054 = vmand %vm1046, %vm1038
        %vm1055 = vmand %vm1047, %vm1039
        %vm1056 = vmand %vm1048, %vm1040
        %v1057 = vadd.s32 %v983, 8
        %v1058 = vadd.s32 %v990, 8
        %v1059 = vadd.s32 %v997, 8
        %v1060 = vadd.s32 %v1004, 8
        %v1061 = vadd.s32 %v1011, 8
        %v1062 = vadd.s32 %v1018, 8
        %v1063 = vadd.s32 %v1025, 8
        %v1064 = vadd.s32 %v1032, 8
        %v1065 = vsel %vm1049, %v1057, %v983
        %v1066 = vsel %vm1050, %v1058, %v990
        %v1067 = vsel %vm1051, %v1059, %v997
        %v1068 = vsel %vm1052, %v1060, %v1004
        %v1069 = vsel %vm1053, %v1061, %v1011
        %v1070 = vsel %vm1054, %v1062, %v1018
        %v1071 = vsel %vm1055, %v1063, %v1025
        %v1072 = vsel %vm1056, %v1064, %v1032
        %vm1073 = vcmp.ge.s32.totalorder %v1065, 1
        %vm1074 = vcmp.ge.s32.totalorder %v1066, 1
        %vm1075 = vcmp.ge.s32.totalorder %v1067, 1
        %vm1076 = vcmp.ge.s32.totalorder %v1068, 1
        %vm1077 = vcmp.ge.s32.totalorder %v1069, 1
        %vm1078 = vcmp.ge.s32.totalorder %v1070, 1
        %vm1079 = vcmp.ge.s32.totalorder %v1071, 1
        %vm1080 = vcmp.ge.s32.totalorder %v1072, 1
        %v1081 = vsel %vm1073, 1, 0
        %v1082 = vsel %vm1074, 1, 0
        %v1083 = vsel %vm1075, 1, 0
        %v1084 = vsel %vm1076, 1, 0
        %v1085 = vsel %vm1077, 1, 0
        %v1086 = vsel %vm1078, 1, 0
        %v1087 = vsel %vm1079, 1, 0
        %v1088 = vsel %vm1080, 1, 0
        %v1089 = vcvt.s32.f32 %v1081
        %v1090 = vcvt.s32.f32 %v1082
        %v1091 = vcvt.s32.f32 %v1083
        %v1092 = vcvt.s32.f32 %v1084
        %v1093 = vcvt.s32.f32 %v1085
        %v1094 = vcvt.s32.f32 %v1086
        %v1095 = vcvt.s32.f32 %v1087
        %v1096 = vcvt.s32.f32 %v1088
        %v1097 = vpack.c.bf16 %v1090, %v1089
        %v1098 = vpack.c.bf16 %v1092, %v1091
        %v1099 = vpack.c.bf16 %v1094, %v1093
        %v1100 = vpack.c.bf16 %v1096, %v1095
        %vm1101 = vcmp.le.s32.totalorder %v1065, 6
        %vm1102 = vcmp.le.s32.totalorder %v1066, 6
        %vm1103 = vcmp.le.s32.totalorder %v1067, 6
        %vm1104 = vcmp.le.s32.totalorder %v1068, 6
        %vm1105 = vcmp.le.s32.totalorder %v1069, 6
        %vm1106 = vcmp.le.s32.totalorder %v1070, 6
        %vm1107 = vcmp.le.s32.totalorder %v1071, 6
        %vm1108 = vcmp.le.s32.totalorder %v1072, 6
        %v1109 = vsel %vm1101, 1, 0
        %v1110 = vsel %vm1102, 1, 0
        %v1111 = vsel %vm1103, 1, 0
        %v1112 = vsel %vm1104, 1, 0
        %v1113 = vsel %vm1105, 1, 0
        %v1114 = vsel %vm1106, 1, 0
        %v1115 = vsel %vm1107, 1, 0
        %v1116 = vsel %vm1108, 1, 0
        %v1117 = vcvt.s32.f32 %v1109
        %v1118 = vcvt.s32.f32 %v1110
        %v1119 = vcvt.s32.f32 %v1111
        %v1120 = vcvt.s32.f32 %v1112
        %v1121 = vcvt.s32.f32 %v1113
        %v1122 = vcvt.s32.f32 %v1114
        %v1123 = vcvt.s32.f32 %v1115
        %v1124 = vcvt.s32.f32 %v1116
        %v1125 = vpack.c.bf16 %v1118, %v1117
        %v1126 = vpack.c.bf16 %v1120, %v1119
        %v1127 = vpack.c.bf16 %v1122, %v1121
        %v1128 = vpack.c.bf16 %v1124, %v1123
        %1129 = vst.msk [vmem:[#allocation2] sm:$0xff] %vm731, 0
        %1130 = vst.msk [vmem:[#allocation2 + $0x28] sm:$0xff] %vm731, 0
        %s1131 = scalar_lea.vmem [#allocation2], 48
        %1132 = vst.msk [vmem:[%s1131] sm:$0xff] %vm731, 0
        %1133 = vst.msk [vmem:[%s1131 + $0x28] sm:$0xff] %vm731, 0
        %s1134 = scalar_lea.vmem [#allocation2], 96
        %1135 = vst.msk [vmem:[%s1134] sm:$0xff] %vm731, 0
        %1136 = vst.msk [vmem:[%s1134 + $0x28] sm:$0xff] %vm731, 0
        %v1137 = vld [vmem:[%s5] sm:$0xf]
        %v1138 = vld [vmem:[%s6] sm:$0x1]
        %v1140 = vlaneseq
        %v1141 = vshrl.u32 %v1140, 7
        %v1142 = vsub.s32 0, %v1141
        %v1143 = vrot.slane %v1138, %v1142
        %v1146 = vsel %vm731, %v964, 0
        %v1149 = vsel %vm731, %v965, 0
        %v1152 = vsel %vm731, %v966, 0
        %v1155 = vsel %vm731, %v967, 0
        %v1158 = vsel %vm744, %v1137, 0
        %1160 = vmatprep.subr.bf16.mxu0 0
        %1161 = vmatpush1.bf16.msra.mxu0 %v1158
        %1162 = vmatprep.subr.bf16.mxu0 0
        %1163 = vmatpush1.bf16.msra.mxu0 0
        %1164 = vmatprep.subr.bf16.mxu0 0
        %1165 = vmatpush1.bf16.msra.mxu0 0
        %1166 = vmatprep.subr.bf16.mxu0 0
        %1167 = vmatpush1.bf16.msra.mxu0 0
        %1168 = vmatprep.subr.bf16.mxu0 0
        %1169 = vmatpush1.bf16.msra.mxu0 0
        %1170 = vmatprep.subr.bf16.mxu0 0
        %1171 = vmatpush1.bf16.msra.mxu0 0
        %1172 = vmatprep.subr.bf16.mxu0 0
        %1173 = vmatpush1.bf16.msra.mxu0 0
        %1174 = vmatprep.subr.bf16.mxu0 0
        %1175 = vmatpush1.bf16.msra.mxu0 0
        %1176 = vmatprep.subr.bf16.mxu0 0
        %1177 = vmatpush1.bf16.msra.mxu0 0
        %1178 = vmatprep.subr.bf16.mxu0 0
        %1179 = vmatpush1.bf16.msra.mxu0 0
        %1180 = vmatprep.subr.bf16.mxu0 0
        %1181 = vmatpush1.bf16.msra.mxu0 0
        %1182 = vmatprep.subr.bf16.mxu0 0
        %1183 = vmatpush1.bf16.msra.mxu0 0
        %1184 = vmatprep.subr.bf16.mxu0 0
        %1185 = vmatpush1.bf16.msra.mxu0 0
        %1186 = vmatprep.subr.bf16.mxu0 0
        %1187 = vmatpush1.bf16.msra.mxu0 0
        %1188 = vmatprep.subr.bf16.mxu0 0
        %1189 = vmatpush1.bf16.msra.mxu0 0
        %1190 = vmatprep.subr.bf16.mxu0 0
        %1191 = vmatpush1.bf16.msra.mxu0 0
        %1192 = vmatprep.mubr.bf16.mxu0 0
        %1193 = vmatmul.mubr.bf16.gmra.mrb[0].mxu0 %v1146
        %v1194 = vpop.f32.mrb[0].mxu0
        %v1195 = vadd.f32 %v1143, %v1194
        %v1196 = vpop.f32.mrb[0].mxu0
        %v1197 = vpop.f32.mrb[0].mxu0
        %v1198 = vadd.f32 %v1143, %v1197
        %v1199 = vpop.f32.mrb[0].mxu0
        %1200 = vmatprep.mubr.bf16.mxu0 0
        %1201 = vmatmul.mubr.bf16.gmra.mrb[0].mxu0 %v1149
        %v1202 = vpop.f32.mrb[0].mxu0
        %v1203 = vadd.f32 %v1143, %v1202
        %v1204 = vpop.f32.mrb[0].mxu0
        %v1205 = vpop.f32.mrb[0].mxu0
        %v1206 = vadd.f32 %v1143, %v1205
        %v1207 = vpop.f32.mrb[0].mxu0
        %1208 = vmatprep.mubr.bf16.mxu0 0
        %1209 = vmatmul.mubr.bf16.gmra.mrb[0].mxu0 %v1152
        %v1210 = vpop.f32.mrb[0].mxu0
        %v1211 = vadd.f32 %v1143, %v1210
        %v1212 = vpop.f32.mrb[0].mxu0
        %v1213 = vpop.f32.mrb[0].mxu0
        %v1214 = vadd.f32 %v1143, %v1213
        %v1215 = vpop.f32.mrb[0].mxu0
        %1216 = vmatprep.mubr.bf16.mxu0 0
        %1217 = vmatmul.mubr.bf16.gmra.mrb[0].mxu0 %v1155
        %v1218 = vpop.f32.mrb[0].mxu0
        %v1219 = vadd.f32 %v1143, %v1218
        %v1220 = vpop.f32.mrb[0].mxu0
        %v1221 = vpop.f32.mrb[0].mxu0
        %v1222 = vadd.f32 %v1143, %v1221
        %v1223 = vpop.f32.mrb[0].mxu0
        %1224 = vdwg.mxu0
        %v1225 = vxor.u32 %v1195, 2147483648
        %v1226 = vxor.u32 %v1198, 2147483648
        %v1227 = vxor.u32 %v1203, 2147483648
        %v1228 = vxor.u32 %v1206, 2147483648
        %v1229 = vxor.u32 %v1211, 2147483648
        %v1230 = vxor.u32 %v1214, 2147483648
        %v1231 = vxor.u32 %v1219, 2147483648
        %v1232 = vxor.u32 %v1222, 2147483648
        %v1233 = vmul.f32 %v1225, 1.442695
        %v1234 = vpow.pop %v1233
        %v1235 = vmul.f32 %v1226, 1.442695
        %v1236 = vpow.pop %v1235
        %v1237 = vmul.f32 %v1227, 1.442695
        %v1238 = vpow.pop %v1237
        %v1239 = vmul.f32 %v1228, 1.442695
        %v1240 = vpow.pop %v1239
        %v1241 = vmul.f32 %v1229, 1.442695
        %v1242 = vpow.pop %v1241
        %v1243 = vmul.f32 %v1230, 1.442695
        %v1244 = vpow.pop %v1243
        %v1245 = vmul.f32 %v1231, 1.442695
        %v1246 = vpow.pop %v1245
        %v1247 = vmul.f32 %v1232, 1.442695
        %v1248 = vpow.pop %v1247
        %v1249 = vadd.f32 %v1234, 1.0
        %v1250 = vadd.f32 %v1236, 1.0
        %v1251 = vadd.f32 %v1238, 1.0
        %v1252 = vadd.f32 %v1240, 1.0
        %v1253 = vadd.f32 %v1242, 1.0
        %v1254 = vadd.f32 %v1244, 1.0
        %v1255 = vadd.f32 %v1246, 1.0
        %v1256 = vadd.f32 %v1248, 1.0
        %v1257 = vrcp.pop %v1249
        %v1258 = vmul.f32 1.0, %v1257
        %v1259 = vrcp.pop %v1250
        %v1260 = vmul.f32 1.0, %v1259
        %v1261 = vrcp.pop %v1251
        %v1262 = vmul.f32 1.0, %v1261
        %v1263 = vrcp.pop %v1252
        %v1264 = vmul.f32 1.0, %v1263
        %v1265 = vrcp.pop %v1253
        %v1266 = vmul.f32 1.0, %v1265
        %v1267 = vrcp.pop %v1254
        %v1268 = vmul.f32 1.0, %v1267
        %v1269 = vrcp.pop %v1255
        %v1270 = vmul.f32 1.0, %v1269
        %v1271 = vrcp.pop %v1256
        %v1272 = vmul.f32 1.0, %v1271
        %v1273 = vmul.f32 %v1195, %v1258
        %v1274 = vmul.f32 %v1198, %v1260
        %v1275 = vmul.f32 %v1203, %v1262
        %v1276 = vmul.f32 %v1206, %v1264
        %v1277 = vmul.f32 %v1211, %v1266
        %v1278 = vmul.f32 %v1214, %v1268
        %v1279 = vmul.f32 %v1219, %v1270
        %v1280 = vmul.f32 %v1222, %v1272
        %v1281 = vpack.c.bf16 %v1274, %v1273
        %v1282 = vpack.c.bf16 %v1276, %v1275
        %v1283 = vpack.c.bf16 %v1278, %v1277
        %v1284 = vpack.c.bf16 %v1280, %v1279
        %1285 = vst.msk [vmem:[#allocation2 + $0x8] sm:$0xff] %vm731, %v1281
        %1286 = vst.msk [vmem:[#allocation2 + $0x10] sm:$0xff] %vm731, %v1282
        %1287 = vst.msk [vmem:[#allocation2 + $0x18] sm:$0xff] %vm731, %v1283
        %1288 = vst.msk [vmem:[#allocation2 + $0x20] sm:$0xff] %vm731, %v1284
        %v1289 = vmul.bf16 %v1281, %v1125
        %v1290 = vmul.bf16 %v1282, %v1126
        %v1291 = vmul.bf16 %v1283, %v1127
        %v1292 = vmul.bf16 %v1284, %v1128
        %1293 = vst.msk [vmem:[%s1131 + $0x8] sm:$0xff] %vm731, %v1289
        %1294 = vst.msk [vmem:[%s1131 + $0x10] sm:$0xff] %vm731, %v1290
        %1295 = vst.msk [vmem:[%s1131 + $0x18] sm:$0xff] %vm731, %v1291
        %1296 = vst.msk [vmem:[%s1131 + $0x20] sm:$0xff] %vm731, %v1292
        %v1297 = vmul.bf16 %v1281, %v1097
        %v1298 = vmul.bf16 %v1282, %v1098
        %v1299 = vmul.bf16 %v1283, %v1099
        %v1300 = vmul.bf16 %v1284, %v1100
        %1301 = vst.msk [vmem:[%s1134 + $0x8] sm:$0xff] %vm731, %v1297
        %1302 = vst.msk [vmem:[%s1134 + $0x10] sm:$0xff] %vm731, %v1298
        %1303 = vst.msk [vmem:[%s1134 + $0x18] sm:$0xff] %vm731, %v1299
        %1304 = vst.msk [vmem:[%s1134 + $0x20] sm:$0xff] %vm731, %v1300
        %s1305 = scalar_lea.vmem %s7, 16
        %v1306 = vld [vmem:[%s1305] sm:$0xf]
        %v1307 = vld [vmem:[%s1131] sm:$0xf8]
        %v1308 = vld [vmem:[%s1131 + $0x8] sm:$0xff]
        %v1309 = vld [vmem:[%s1131 + $0x10] sm:$0xff]
        %v1310 = vld [vmem:[%s1131 + $0x18] sm:$0xff]
        %v1311 = vld [vmem:[%s1131 + $0x20] sm:$0xf]
        %v1312 = vld [vmem:[%s7] sm:$0xf]
        %vm1313 = vsmask.f32 4352
        %v1315 = vshrl.u32 %v1307, 16
        %v1317 = vrot.slane %v1315, 3
        %v1318 = vshll.u32 %v1307, 16
        %v1320 = vrot.slane %v1318, 4
        %v1321 = vor.u32 %v1317, %v1320
        %v1323 = vshrl.u32 %v1308, 16
        %v1325 = vrot.slane %v1323, 3
        %v1326 = vshll.u32 %v1308, 16
        %v1328 = vrot.slane %v1326, 4
        %v1329 = vor.u32 %v1325, %v1328
        %v1330 = vsel %vm1313, %v1321, %v1329
        %v1332 = vshrl.u32 %v1309, 16
        %v1334 = vrot.slane %v1332, 3
        %v1335 = vshll.u32 %v1309, 16
        %v1337 = vrot.slane %v1335, 4
        %v1338 = vor.u32 %v1334, %v1337
        %v1339 = vsel %vm1313, %v1329, %v1338
        %v1341 = vshrl.u32 %v1310, 16
        %v1343 = vrot.slane %v1341, 3
        %v1344 = vshll.u32 %v1310, 16
        %v1346 = vrot.slane %v1344, 4
        %v1347 = vor.u32 %v1343, %v1346
        %v1348 = vsel %vm1313, %v1338, %v1347
        %v1350 = vshrl.u32 %v1311, 16
        %v1352 = vrot.slane %v1350, 3
        %v1353 = vshll.u32 %v1311, 16
        %v1355 = vrot.slane %v1353, 4
        %v1356 = vor.u32 %v1352, %v1355
        %v1357 = vsel %vm1313, %v1347, %v1356
        %v1359 = vsel %vm731, %v1330, 0
        %v1362 = vsel %vm731, %v1339, 0
        %v1365 = vsel %vm731, %v1348, 0
        %v1368 = vsel %vm731, %v1357, 0
        %v1371 = vsel %vm744, %v1312, 0
        %1373 = vmatprep.subr.bf16.mxu0 0
        %1374 = vmatpush1.bf16.msra.mxu0 %v1371
        %1375 = vmatprep.subr.bf16.mxu0 0
        %1376 = vmatpush1.bf16.msra.mxu0 0
        %1377 = vmatprep.subr.bf16.mxu0 0
        %1378 = vmatpush1.bf16.msra.mxu0 0
        %1379 = vmatprep.subr.bf16.mxu0 0
        %1380 = vmatpush1.bf16.msra.mxu0 0
        %1381 = vmatprep.subr.bf16.mxu0 0
        %1382 = vmatpush1.bf16.msra.mxu0 0
        %1383 = vmatprep.subr.bf16.mxu0 0
        %1384 = vmatpush1.bf16.msra.mxu0 0
        %1385 = vmatprep.subr.bf16.mxu0 0
        %1386 = vmatpush1.bf16.msra.mxu0 0
        %1387 = vmatprep.subr.bf16.mxu0 0
        %1388 = vmatpush1.bf16.msra.mxu0 0
        %1389 = vmatprep.subr.bf16.mxu0 0
        %1390 = vmatpush1.bf16.msra.mxu0 0
        %1391 = vmatprep.subr.bf16.mxu0 0
        %1392 = vmatpush1.bf16.msra.mxu0 0
        %1393 = vmatprep.subr.bf16.mxu0 0
        %1394 = vmatpush1.bf16.msra.mxu0 0
        %1395 = vmatprep.subr.bf16.mxu0 0
        %1396 = vmatpush1.bf16.msra.mxu0 0
        %1397 = vmatprep.subr.bf16.mxu0 0
        %1398 = vmatpush1.bf16.msra.mxu0 0
        %1399 = vmatprep.subr.bf16.mxu0 0
        %1400 = vmatpush1.bf16.msra.mxu0 0
        %1401 = vmatprep.subr.bf16.mxu0 0
        %1402 = vmatpush1.bf16.msra.mxu0 0
        %1403 = vmatprep.subr.bf16.mxu0 0
        %1404 = vmatpush1.bf16.msra.mxu0 0
        %1405 = vmatprep.mubr.bf16.mxu0 0
        %1406 = vmatmul.mubr.bf16.gmra.mrb[0].mxu0 %v1359
        %v1407 = vpop.f32.mrb[0].mxu0
        %v1408 = vadd.f32 0.0, %v1407
        %v1409 = vpop.f32.mrb[0].mxu0
        %v1410 = vpop.f32.mrb[0].mxu0
        %v1411 = vadd.f32 0.0, %v1410
        %v1412 = vpop.f32.mrb[0].mxu0
        %1413 = vmatprep.mubr.bf16.mxu0 0
        %1414 = vmatmul.mubr.bf16.gmra.mrb[0].mxu0 %v1362
        %v1415 = vpop.f32.mrb[0].mxu0
        %v1416 = vadd.f32 0.0, %v1415
        %v1417 = vpop.f32.mrb[0].mxu0
        %v1418 = vpop.f32.mrb[0].mxu0
        %v1419 = vadd.f32 0.0, %v1418
        %v1420 = vpop.f32.mrb[0].mxu0
        %1421 = vmatprep.mubr.bf16.mxu0 0
        %1422 = vmatmul.mubr.bf16.gmra.mrb[0].mxu0 %v1365
        %v1423 = vpop.f32.mrb[0].mxu0
        %v1424 = vadd.f32 0.0, %v1423
        %v1425 = vpop.f32.mrb[0].mxu0
        %v1426 = vpop.f32.mrb[0].mxu0
        %v1427 = vadd.f32 0.0, %v1426
        %v1428 = vpop.f32.mrb[0].mxu0
        %1429 = vmatprep.mubr.bf16.mxu0 0
        %1430 = vmatmul.mubr.bf16.gmra.mrb[0].mxu0 %v1368
        %v1431 = vpop.f32.mrb[0].mxu0
        %v1432 = vadd.f32 0.0, %v1431
        %v1433 = vpop.f32.mrb[0].mxu0
        %v1434 = vpop.f32.mrb[0].mxu0
        %v1435 = vadd.f32 0.0, %v1434
        %v1436 = vpop.f32.mrb[0].mxu0
        %1437 = vdwg.mxu0
        %v1439 = vsel %vm731, %v1281, 0
        %v1442 = vsel %vm731, %v1282, 0
        %v1445 = vsel %vm731, %v1283, 0
        %v1448 = vsel %vm731, %v1284, 0
        %v1451 = vsel %vm744, %v1306, 0
        %1453 = vmatprep.subr.bf16.mxu0 0
        %1454 = vmatpush1.bf16.msra.mxu0 %v1451
        %1455 = vmatprep.subr.bf16.mxu0 0
        %1456 = vmatpush1.bf16.msra.mxu0 0
        %1457 = vmatprep.subr.bf16.mxu0 0
        %1458 = vmatpush1.bf16.msra.mxu0 0
        %1459 = vmatprep.subr.bf16.mxu0 0
        %1460 = vmatpush1.bf16.msra.mxu0 0
        %1461 = vmatprep.subr.bf16.mxu0 0
        %1462 = vmatpush1.bf16.msra.mxu0 0
        %1463 = vmatprep.subr.bf16.mxu0 0
        %1464 = vmatpush1.bf16.msra.mxu0 0
        %1465 = vmatprep.subr.bf16.mxu0 0
        %1466 = vmatpush1.bf16.msra.mxu0 0
        %1467 = vmatprep.subr.bf16.mxu0 0
        %1468 = vmatpush1.bf16.msra.mxu0 0
        %1469 = vmatprep.subr.bf16.mxu0 0
        %1470 = vmatpush1.bf16.msra.mxu0 0
        %1471 = vmatprep.subr.bf16.mxu0 0
        %1472 = vmatpush1.bf16.msra.mxu0 0
        %1473 = vmatprep.subr.bf16.mxu0 0
        %1474 = vmatpush1.bf16.msra.mxu0 0
        %1475 = vmatprep.subr.bf16.mxu0 0
        %1476 = vmatpush1.bf16.msra.mxu0 0
        %1477 = vmatprep.subr.bf16.mxu0 0
        %1478 = vmatpush1.bf16.msra.mxu0 0
        %1479 = vmatprep.subr.bf16.mxu0 0
        %1480 = vmatpush1.bf16.msra.mxu0 0
        %1481 = vmatprep.subr.bf16.mxu0 0
        %1482 = vmatpush1.bf16.msra.mxu0 0
        %1483 = vmatprep.subr.bf16.mxu0 0
        %1484 = vmatpush1.bf16.msra.mxu0 0
        %1485 = vmatprep.mubr.bf16.mxu0 0
        %1486 = vmatmul.mubr.bf16.gmra.mrb[0].mxu0 %v1439
        %v1487 = vpop.f32.mrb[0].mxu0
        %v1488 = vadd.f32 %v1408, %v1487
        %v1489 = vpop.f32.mrb[0].mxu0
        %v1490 = vpop.f32.mrb[0].mxu0
        %v1491 = vadd.f32 %v1411, %v1490
        %v1492 = vpop.f32.mrb[0].mxu0
        %1493 = vmatprep.mubr.bf16.mxu0 0
        %1494 = vmatmul.mubr.bf16.gmra.mrb[0].mxu0 %v1442
        %v1495 = vpop.f32.mrb[0].mxu0
        %v1496 = vadd.f32 %v1416, %v1495
        %v1497 = vpop.f32.mrb[0].mxu0
        %v1498 = vpop.f32.mrb[0].mxu0
        %v1499 = vadd.f32 %v1419, %v1498
        %v1500 = vpop.f32.mrb[0].mxu0
        %1501 = vmatprep.mubr.bf16.mxu0 0
        %1502 = vmatmul.mubr.bf16.gmra.mrb[0].mxu0 %v1445
        %v1503 = vpop.f32.mrb[0].mxu0
        %v1504 = vadd.f32 %v1424, %v1503
        %v1505 = vpop.f32.mrb[0].mxu0
        %v1506 = vpop.f32.mrb[0].mxu0
        %v1507 = vadd.f32 %v1427, %v1506
        %v1508 = vpop.f32.mrb[0].mxu0
        %1509 = vmatprep.mubr.bf16.mxu0 0
        %1510 = vmatmul.mubr.bf16.gmra.mrb[0].mxu0 %v1448
        %v1511 = vpop.f32.mrb[0].mxu0
        %v1512 = vadd.f32 %v1432, %v1511
        %v1513 = vpop.f32.mrb[0].mxu0
        %v1514 = vpop.f32.mrb[0].mxu0
        %v1515 = vadd.f32 %v1435, %v1514
        %v1516 = vpop.f32.mrb[0].mxu0
        %1517 = vdwg.mxu0
        %v1518 = vld [vmem:[#allocation2] sm:$0xf0]
        %v1519 = vld [vmem:[#allocation2 + $0x8] sm:$0xff]
        %v1520 = vld [vmem:[#allocation2 + $0x10] sm:$0xff]
        %v1521 = vld [vmem:[#allocation2 + $0x18] sm:$0xff]
        %v1522 = vld [vmem:[#allocation2 + $0x20] sm:$0xf]
        %s1523 = scalar_lea.vmem %s7, 4
        %v1524 = vld [vmem:[%s1523] sm:$0xf]
        %vm1530 = vcmask 1043456
        %v1531 = vrot.slane %v1518, 4
        %v1532 = vrot.slane %v1519, 4
        %v1533 = vsel %vm1530, %v1531, %v1532
        %v1534 = vrot.slane %v1520, 4
        %v1535 = vsel %vm1530, %v1532, %v1534
        %v1536 = vrot.slane %v1521, 4
        %v1537 = vsel %vm1530, %v1534, %v1536
        %v1538 = vrot.slane %v1522, 4
        %v1539 = vsel %vm1530, %v1536, %v1538
        %v1541 = vsel %vm731, %v1533, 0
        %v1544 = vsel %vm731, %v1535, 0
        %v1547 = vsel %vm731, %v1537, 0
        %v1550 = vsel %vm731, %v1539, 0
        %v1553 = vsel %vm744, %v1524, 0
        %1555 = vmatprep.subr.bf16.mxu0 0
        %1556 = vmatpush1.bf16.msra.mxu0 %v1553
        %1557 = vmatprep.subr.bf16.mxu0 0
        %1558 = vmatpush1.bf16.msra.mxu0 0
        %1559 = vmatprep.subr.bf16.mxu0 0
        %1560 = vmatpush1.bf16.msra.mxu0 0
        %1561 = vmatprep.subr.bf16.mxu0 0
        %1562 = vmatpush1.bf16.msra.mxu0 0
        %1563 = vmatprep.subr.bf16.mxu0 0
        %1564 = vmatpush1.bf16.msra.mxu0 0
        %1565 = vmatprep.subr.bf16.mxu0 0
        %1566 = vmatpush1.bf16.msra.mxu0 0
        %1567 = vmatprep.subr.bf16.mxu0 0
        %1568 = vmatpush1.bf16.msra.mxu0 0
        %1569 = vmatprep.subr.bf16.mxu0 0
        %1570 = vmatpush1.bf16.msra.mxu0 0
        %1571 = vmatprep.subr.bf16.mxu0 0
        %1572 = vmatpush1.bf16.msra.mxu0 0
        %1573 = vmatprep.subr.bf16.mxu0 0
        %1574 = vmatpush1.bf16.msra.mxu0 0
        %1575 = vmatprep.subr.bf16.mxu0 0
        %1576 = vmatpush1.bf16.msra.mxu0 0
        %1577 = vmatprep.subr.bf16.mxu0 0
        %1578 = vmatpush1.bf16.msra.mxu0 0
        %1579 = vmatprep.subr.bf16.mxu0 0
        %1580 = vmatpush1.bf16.msra.mxu0 0
        %1581 = vmatprep.subr.bf16.mxu0 0
        %1582 = vmatpush1.bf16.msra.mxu0 0
        %1583 = vmatprep.subr.bf16.mxu0 0
        %1584 = vmatpush1.bf16.msra.mxu0 0
        %1585 = vmatprep.subr.bf16.mxu0 0
        %1586 = vmatpush1.bf16.msra.mxu0 0
        %1587 = vmatprep.mubr.bf16.mxu0 0
        %1588 = vmatmul.mubr.bf16.gmra.mrb[0].mxu0 %v1541
        %v1589 = vpop.f32.mrb[0].mxu0
        %v1590 = vadd.f32 0.0, %v1589
        %v1591 = vpop.f32.mrb[0].mxu0
        %v1592 = vpop.f32.mrb[0].mxu0
        %v1593 = vadd.f32 0.0, %v1592
        %v1594 = vpop.f32.mrb[0].mxu0
        %1595 = vmatprep.mubr.bf16.mxu0 0
        %1596 = vmatmul.mubr.bf16.gmra.mrb[0].mxu0 %v1544
        %v1597 = vpop.f32.mrb[0].mxu0
        %v1598 = vadd.f32 0.0, %v1597
        %v1599 = vpop.f32.mrb[0].mxu0
        %v1600 = vpop.f32.mrb[0].mxu0
        %v1601 = vadd.f32 0.0, %v1600
        %v1602 = vpop.f32.mrb[0].mxu0
        %1603 = vmatprep.mubr.bf16.mxu0 0
        %1604 = vmatmul.mubr.bf16.gmra.mrb[0].mxu0 %v1547
        %v1605 = vpop.f32.mrb[0].mxu0
        %v1606 = vadd.f32 0.0, %v1605
        %v1607 = vpop.f32.mrb[0].mxu0
        %v1608 = vpop.f32.mrb[0].mxu0
        %v1609 = vadd.f32 0.0, %v1608
        %v1610 = vpop.f32.mrb[0].mxu0
        %1611 = vmatprep.mubr.bf16.mxu0 0
        %1612 = vmatmul.mubr.bf16.gmra.mrb[0].mxu0 %v1550
        %v1613 = vpop.f32.mrb[0].mxu0
        %v1614 = vadd.f32 0.0, %v1613
        %v1615 = vpop.f32.mrb[0].mxu0
        %v1616 = vpop.f32.mrb[0].mxu0
        %v1617 = vadd.f32 0.0, %v1616
        %v1618 = vpop.f32.mrb[0].mxu0
        %1619 = vdwg.mxu0
        %v1620 = vadd.f32 %v1488, %v1590
        %v1621 = vadd.f32 %v1491, %v1593
        %v1622 = vadd.f32 %v1496, %v1598
        %v1623 = vadd.f32 %v1499, %v1601
        %v1624 = vadd.f32 %v1504, %v1606
        %v1625 = vadd.f32 %v1507, %v1609
        %v1626 = vadd.f32 %v1512, %v1614
        %v1627 = vadd.f32 %v1515, %v1617
        %v1628 = vld [vmem:[%s1134] sm:$0xf0]
        %v1629 = vld [vmem:[%s1134 + $0x8] sm:$0xff]
        %v1630 = vld [vmem:[%s1134 + $0x10] sm:$0xff]
        %v1631 = vld [vmem:[%s1134 + $0x18] sm:$0xff]
        %v1632 = vld [vmem:[%s1134 + $0x20] sm:$0x1f]
        %s1633 = scalar_lea.vmem %s7, 8
        %v1634 = vld [vmem:[%s1633] sm:$0xf]
        %vm1635 = vsmask.f32 3328
        %v1637 = vshrl.u32 %v1628, 16
        %v1639 = vrot.slane %v1637, 4
        %v1640 = vshll.u32 %v1628, 16
        %v1642 = vrot.slane %v1640, 5
        %v1643 = vor.u32 %v1639, %v1642
        %v1645 = vshrl.u32 %v1629, 16
        %v1647 = vrot.slane %v1645, 4
        %v1648 = vshll.u32 %v1629, 16
        %v1650 = vrot.slane %v1648, 5
        %v1651 = vor.u32 %v1647, %v1650
        %v1652 = vsel %vm1635, %v1643, %v1651
        %v1654 = vshrl.u32 %v1630, 16
        %v1656 = vrot.slane %v1654, 4
        %v1657 = vshll.u32 %v1630, 16
        %v1659 = vrot.slane %v1657, 5
        %v1660 = vor.u32 %v1656, %v1659
        %v1661 = vsel %vm1635, %v1651, %v1660
        %v1663 = vshrl.u32 %v1631, 16
        %v1665 = vrot.slane %v1663, 4
        %v1666 = vshll.u32 %v1631, 16
        %v1668 = vrot.slane %v1666, 5
        %v1669 = vor.u32 %v1665, %v1668
        %v1670 = vsel %vm1635, %v1660, %v1669
        %v1672 = vshrl.u32 %v1632, 16
        %v1674 = vrot.slane %v1672, 4
        %v1675 = vshll.u32 %v1632, 16
        %v1677 = vrot.slane %v1675, 5
        %v1678 = vor.u32 %v1674, %v1677
        %v1679 = vsel %vm1635, %v1669, %v1678
        %v1681 = vsel %vm731, %v1652, 0
        %v1684 = vsel %vm731, %v1661, 0
        %v1687 = vsel %vm731, %v1670, 0
        %v1690 = vsel %vm731, %v1679, 0
        %v1693 = vsel %vm744, %v1634, 0
        %1695 = vmatprep.subr.bf16.mxu0 0
        %1696 = vmatpush1.bf16.msra.mxu0 %v1693
        %1697 = vmatprep.subr.bf16.mxu0 0
        %1698 = vmatpush1.bf16.msra.mxu0 0
        %1699 = vmatprep.subr.bf16.mxu0 0
        %1700 = vmatpush1.bf16.msra.mxu0 0
        %1701 = vmatprep.subr.bf16.mxu0 0
        %1702 = vmatpush1.bf16.msra.mxu0 0
        %1703 = vmatprep.subr.bf16.mxu0 0
        %1704 = vmatpush1.bf16.msra.mxu0 0
        %1705 = vmatprep.subr.bf16.mxu0 0
        %1706 = vmatpush1.bf16.msra.mxu0 0
        %1707 = vmatprep.subr.bf16.mxu0 0
        %1708 = vmatpush1.bf16.msra.mxu0 0
        %1709 = vmatprep.subr.bf16.mxu0 0
        %1710 = vmatpush1.bf16.msra.mxu0 0
        %1711 = vmatprep.subr.bf16.mxu0 0
        %1712 = vmatpush1.bf16.msra.mxu0 0
        %1713 = vmatprep.subr.bf16.mxu0 0
        %1714 = vmatpush1.bf16.msra.mxu0 0
        %1715 = vmatprep.subr.bf16.mxu0 0
        %1716 = vmatpush1.bf16.msra.mxu0 0
        %1717 = vmatprep.subr.bf16.mxu0 0
        %1718 = vmatpush1.bf16.msra.mxu0 0
        %1719 = vmatprep.subr.bf16.mxu0 0
        %1720 = vmatpush1.bf16.msra.mxu0 0
        %1721 = vmatprep.subr.bf16.mxu0 0
        %1722 = vmatpush1.bf16.msra.mxu0 0
        %1723 = vmatprep.subr.bf16.mxu0 0
        %1724 = vmatpush1.bf16.msra.mxu0 0
        %1725 = vmatprep.subr.bf16.mxu0 0
        %1726 = vmatpush1.bf16.msra.mxu0 0
        %1727 = vmatprep.mubr.bf16.mxu0 0
        %1728 = vmatmul.mubr.bf16.gmra.mrb[0].mxu0 %v1681
        %v1729 = vpop.f32.mrb[0].mxu0
        %v1730 = vadd.f32 0.0, %v1729
        %v1731 = vpop.f32.mrb[0].mxu0
        %v1732 = vpop.f32.mrb[0].mxu0
        %v1733 = vadd.f32 0.0, %v1732
        %v1734 = vpop.f32.mrb[0].mxu0
        %1735 = vmatprep.mubr.bf16.mxu0 0
        %1736 = vmatmul.mubr.bf16.gmra.mrb[0].mxu0 %v1684
        %v1737 = vpop.f32.mrb[0].mxu0
        %v1738 = vadd.f32 0.0, %v1737
        %v1739 = vpop.f32.mrb[0].mxu0
        %v1740 = vpop.f32.mrb[0].mxu0
        %v1741 = vadd.f32 0.0, %v1740
        %v1742 = vpop.f32.mrb[0].mxu0
        %1743 = vmatprep.mubr.bf16.mxu0 0
        %1744 = vmatmul.mubr.bf16.gmra.mrb[0].mxu0 %v1687
        %v1745 = vpop.f32.mrb[0].mxu0
        %v1746 = vadd.f32 0.0, %v1745
        %v1747 = vpop.f32.mrb[0].mxu0
        %v1748 = vpop.f32.mrb[0].mxu0
        %v1749 = vadd.f32 0.0, %v1748
        %v1750 = vpop.f32.mrb[0].mxu0
        %1751 = vmatprep.mubr.bf16.mxu0 0
        %1752 = vmatmul.mubr.bf16.gmra.mrb[0].mxu0 %v1690
        %v1753 = vpop.f32.mrb[0].mxu0
        %v1754 = vadd.f32 0.0, %v1753
        %v1755 = vpop.f32.mrb[0].mxu0
        %v1756 = vpop.f32.mrb[0].mxu0
        %v1757 = vadd.f32 0.0, %v1756
        %v1758 = vpop.f32.mrb[0].mxu0
        %1759 = vdwg.mxu0
        %v1760 = vadd.f32 %v1620, %v1730
        %v1761 = vadd.f32 %v1621, %v1733
        %v1762 = vadd.f32 %v1622, %v1738
        %v1763 = vadd.f32 %v1623, %v1741
        %v1764 = vadd.f32 %v1624, %v1746
        %v1765 = vadd.f32 %v1625, %v1749
        %v1766 = vadd.f32 %v1626, %v1754
        %v1767 = vadd.f32 %v1627, %v1757
        %v1768 = vld [vmem:[%s1131] sm:$0x80]
        %v1769 = vld [vmem:[%s1131 + $0x20] sm:$0xff]
        %s1770 = scalar_lea.vmem %s7, 12
        %v1771 = vld [vmem:[%s1770] sm:$0xf]
        %vm1772 = vsmask.f32 256
        %v1774 = vshrl.u32 %v1768, 16
        %v1776 = vrot.slane %v1774, 7
        %v1777 = vrot.slane %v1323, 7
        %v1778 = vor.u32 %v1777, %v1326
        %v1779 = vsel %vm1772, %v1776, %v1778
        %v1780 = vrot.slane %v1332, 7
        %v1781 = vor.u32 %v1780, %v1335
        %v1782 = vsel %vm1772, %v1777, %v1781
        %v1783 = vrot.slane %v1341, 7
        %v1784 = vor.u32 %v1783, %v1344
        %v1785 = vsel %vm1772, %v1780, %v1784
        %v1787 = vshrl.u32 %v1769, 16
        %v1789 = vrot.slane %v1787, 7
        %v1790 = vshll.u32 %v1769, 16
        %v1792 = vor.u32 %v1789, %v1790
        %v1793 = vsel %vm1772, %v1783, %v1792
        %v1795 = vsel %vm731, %v1779, 0
        %v1798 = vsel %vm731, %v1782, 0
        %v1801 = vsel %vm731, %v1785, 0
        %v1804 = vsel %vm731, %v1793, 0
        %v1807 = vsel %vm744, %v1771, 0
        %1809 = vmatprep.subr.bf16.mxu0 0
        %1810 = vmatpush1.bf16.msra.mxu0 %v1807
        %1811 = vmatprep.subr.bf16.mxu0 0
        %1812 = vmatpush1.bf16.msra.mxu0 0
        %1813 = vmatprep.subr.bf16.mxu0 0
        %1814 = vmatpush1.bf16.msra.mxu0 0
        %1815 = vmatprep.subr.bf16.mxu0 0
        %1816 = vmatpush1.bf16.msra.mxu0 0
        %1817 = vmatprep.subr.bf16.mxu0 0
        %1818 = vmatpush1.bf16.msra.mxu0 0
        %1819 = vmatprep.subr.bf16.mxu0 0
        %1820 = vmatpush1.bf16.msra.mxu0 0
        %1821 = vmatprep.subr.bf16.mxu0 0
        %1822 = vmatpush1.bf16.msra.mxu0 0
        %1823 = vmatprep.subr.bf16.mxu0 0
        %1824 = vmatpush1.bf16.msra.mxu0 0
        %1825 = vmatprep.subr.bf16.mxu0 0
        %1826 = vmatpush1.bf16.msra.mxu0 0
        %1827 = vmatprep.subr.bf16.mxu0 0
        %1828 = vmatpush1.bf16.msra.mxu0 0
        %1829 = vmatprep.subr.bf16.mxu0 0
        %1830 = vmatpush1.bf16.msra.mxu0 0
        %1831 = vmatprep.subr.bf16.mxu0 0
        %1832 = vmatpush1.bf16.msra.mxu0 0
        %1833 = vmatprep.subr.bf16.mxu0 0
        %1834 = vmatpush1.bf16.msra.mxu0 0
        %1835 = vmatprep.subr.bf16.mxu0 0
        %1836 = vmatpush1.bf16.msra.mxu0 0
        %1837 = vmatprep.subr.bf16.mxu0 0
        %1838 = vmatpush1.bf16.msra.mxu0 0
        %1839 = vmatprep.subr.bf16.mxu0 0
        %1840 = vmatpush1.bf16.msra.mxu0 0
        %1841 = vmatprep.mubr.bf16.mxu0 0
        %1842 = vmatmul.mubr.bf16.gmra.mrb[0].mxu0 %v1795
        %v1843 = vpop.f32.mrb[0].mxu0
        %v1844 = vadd.f32 0.0, %v1843
        %v1845 = vpop.f32.mrb[0].mxu0
        %v1846 = vpop.f32.mrb[0].mxu0
        %v1847 = vadd.f32 0.0, %v1846
        %v1848 = vpop.f32.mrb[0].mxu0
        %1849 = vmatprep.mubr.bf16.mxu0 0
        %1850 = vmatmul.mubr.bf16.gmra.mrb[0].mxu0 %v1798
        %v1851 = vpop.f32.mrb[0].mxu0
        %v1852 = vadd.f32 0.0, %v1851
        %v1853 = vpop.f32.mrb[0].mxu0
        %v1854 = vpop.f32.mrb[0].mxu0
        %v1855 = vadd.f32 0.0, %v1854
        %v1856 = vpop.f32.mrb[0].mxu0
        %1857 = vmatprep.mubr.bf16.mxu0 0
        %1858 = vmatmul.mubr.bf16.gmra.mrb[0].mxu0 %v1801
        %v1859 = vpop.f32.mrb[0].mxu0
        %v1860 = vadd.f32 0.0, %v1859
        %v1861 = vpop.f32.mrb[0].mxu0
        %v1862 = vpop.f32.mrb[0].mxu0
        %v1863 = vadd.f32 0.0, %v1862
        %v1864 = vpop.f32.mrb[0].mxu0
        %1865 = vmatprep.mubr.bf16.mxu0 0
        %1866 = vmatmul.mubr.bf16.gmra.mrb[0].mxu0 %v1804
        %v1867 = vpop.f32.mrb[0].mxu0
        %v1868 = vadd.f32 0.0, %v1867
        %v1869 = vpop.f32.mrb[0].mxu0
        %v1870 = vpop.f32.mrb[0].mxu0
        %v1871 = vadd.f32 0.0, %v1870
        %v1872 = vpop.f32.mrb[0].mxu0
        %1873 = vdwg.mxu0
        %v1874 = vadd.f32 %v1760, %v1844
        %v1875 = vadd.f32 %v1761, %v1847
        %v1876 = vadd.f32 %v1762, %v1852
        %v1877 = vadd.f32 %v1763, %v1855
        %v1878 = vadd.f32 %v1764, %v1860
        %v1879 = vadd.f32 %v1765, %v1863
        %v1880 = vadd.f32 %v1766, %v1868
        %v1881 = vadd.f32 %v1767, %v1871
        %v1882 = vld [vmem:[%s1134 + $0x8] sm:$0xff]
        %v1883 = vld [vmem:[%s1134 + $0x10] sm:$0xff]
        %v1884 = vld [vmem:[%s1134 + $0x18] sm:$0xff]
        %v1885 = vld [vmem:[%s1134 + $0x20] sm:$0xff]
        %v1886 = vld [vmem:[%s1134 + $0x28] sm:$0x1]
        %s1887 = scalar_lea.vmem %s7, 20
        %v1888 = vld [vmem:[%s1887] sm:$0xf]
        %vm1889 = vsmask.f32 7424
        %v1891 = vshrl.u32 %v1882, 16
        %v1893 = vshll.u32 %v1882, 16
        %v1895 = vrot.slane %v1893, 1
        %v1896 = vor.u32 %v1891, %v1895
        %v1898 = vshll.u32 %v1883, 16
        %v1900 = vrot.slane %v1898, 1
        %v1901 = vsel %vm1889, %v1896, %v1900
        %v1902 = vshrl.u32 %v1883, 16
        %v1904 = vor.u32 %v1902, %v1900
        %v1906 = vshll.u32 %v1884, 16
        %v1908 = vrot.slane %v1906, 1
        %v1909 = vsel %vm1889, %v1904, %v1908
        %v1910 = vshrl.u32 %v1884, 16
        %v1912 = vor.u32 %v1910, %v1908
        %v1914 = vshll.u32 %v1885, 16
        %v1916 = vrot.slane %v1914, 1
        %v1917 = vsel %vm1889, %v1912, %v1916
        %v1918 = vshrl.u32 %v1885, 16
        %v1920 = vor.u32 %v1918, %v1916
        %v1922 = vshll.u32 %v1886, 16
        %v1924 = vrot.slane %v1922, 1
        %v1925 = vsel %vm1889, %v1920, %v1924
        %v1927 = vsel %vm731, %v1901, 0
        %v1930 = vsel %vm731, %v1909, 0
        %v1933 = vsel %vm731, %v1917, 0
        %v1936 = vsel %vm731, %v1925, 0
        %v1939 = vsel %vm744, %v1888, 0
        %1941 = vmatprep.subr.bf16.mxu0 0
        %1942 = vmatpush1.bf16.msra.mxu0 %v1939
        %1943 = vmatprep.subr.bf16.mxu0 0
        %1944 = vmatpush1.bf16.msra.mxu0 0
        %1945 = vmatprep.subr.bf16.mxu0 0
        %1946 = vmatpush1.bf16.msra.mxu0 0
        %1947 = vmatprep.subr.bf16.mxu0 0
        %1948 = vmatpush1.bf16.msra.mxu0 0
        %1949 = vmatprep.subr.bf16.mxu0 0
        %1950 = vmatpush1.bf16.msra.mxu0 0
        %1951 = vmatprep.subr.bf16.mxu0 0
        %1952 = vmatpush1.bf16.msra.mxu0 0
        %1953 = vmatprep.subr.bf16.mxu0 0
        %1954 = vmatpush1.bf16.msra.mxu0 0
        %1955 = vmatprep.subr.bf16.mxu0 0
        %1956 = vmatpush1.bf16.msra.mxu0 0
        %1957 = vmatprep.subr.bf16.mxu0 0
        %1958 = vmatpush1.bf16.msra.mxu0 0
        %1959 = vmatprep.subr.bf16.mxu0 0
        %1960 = vmatpush1.bf16.msra.mxu0 0
        %1961 = vmatprep.subr.bf16.mxu0 0
        %1962 = vmatpush1.bf16.msra.mxu0 0
        %1963 = vmatprep.subr.bf16.mxu0 0
        %1964 = vmatpush1.bf16.msra.mxu0 0
        %1965 = vmatprep.subr.bf16.mxu0 0
        %1966 = vmatpush1.bf16.msra.mxu0 0
        %1967 = vmatprep.subr.bf16.mxu0 0
        %1968 = vmatpush1.bf16.msra.mxu0 0
        %1969 = vmatprep.subr.bf16.mxu0 0
        %1970 = vmatpush1.bf16.msra.mxu0 0
        %1971 = vmatprep.subr.bf16.mxu0 0
        %1972 = vmatpush1.bf16.msra.mxu0 0
        %1973 = vmatprep.mubr.bf16.mxu0 0
        %1974 = vmatmul.mubr.bf16.gmra.mrb[0].mxu0 %v1927
        %v1975 = vpop.f32.mrb[0].mxu0
        %v1976 = vadd.f32 0.0, %v1975
        %v1977 = vpop.f32.mrb[0].mxu0
        %v1978 = vpop.f32.mrb[0].mxu0
        %v1979 = vadd.f32 0.0, %v1978
        %v1980 = vpop.f32.mrb[0].mxu0
        %1981 = vmatprep.mubr.bf16.mxu0 0
        %1982 = vmatmul.mubr.bf16.gmra.mrb[0].mxu0 %v1930
        %v1983 = vpop.f32.mrb[0].mxu0
        %v1984 = vadd.f32 0.0, %v1983
        %v1985 = vpop.f32.mrb[0].mxu0
        %v1986 = vpop.f32.mrb[0].mxu0
        %v1987 = vadd.f32 0.0, %v1986
        %v1988 = vpop.f32.mrb[0].mxu0
        %1989 = vmatprep.mubr.bf16.mxu0 0
        %1990 = vmatmul.mubr.bf16.gmra.mrb[0].mxu0 %v1933
        %v1991 = vpop.f32.mrb[0].mxu0
        %v1992 = vadd.f32 0.0, %v1991
        %v1993 = vpop.f32.mrb[0].mxu0
        %v1994 = vpop.f32.mrb[0].mxu0
        %v1995 = vadd.f32 0.0, %v1994
        %v1996 = vpop.f32.mrb[0].mxu0
        %1997 = vmatprep.mubr.bf16.mxu0 0
        %1998 = vmatmul.mubr.bf16.gmra.mrb[0].mxu0 %v1936
        %v1999 = vpop.f32.mrb[0].mxu0
        %v2000 = vadd.f32 0.0, %v1999
        %v2001 = vpop.f32.mrb[0].mxu0
        %v2002 = vpop.f32.mrb[0].mxu0
        %v2003 = vadd.f32 0.0, %v2002
        %v2004 = vpop.f32.mrb[0].mxu0
        %2005 = vdwg.mxu0
        %v2006 = vadd.f32 %v1874, %v1976
        %v2007 = vadd.f32 %v1875, %v1979
        %v2008 = vadd.f32 %v1876, %v1984
        %v2009 = vadd.f32 %v1877, %v1987
        %v2010 = vadd.f32 %v1878, %v1992
        %v2011 = vadd.f32 %v1879, %v1995
        %v2012 = vadd.f32 %v1880, %v2000
        %v2013 = vadd.f32 %v1881, %v2003
        %v2014 = vld [vmem:[%s1131 + $0x8] sm:$0xf8]
        %v2015 = vld [vmem:[%s1131 + $0x10] sm:$0xff]
        %v2016 = vld [vmem:[%s1131 + $0x18] sm:$0xff]
        %v2017 = vld [vmem:[%s1131 + $0x20] sm:$0xff]
        %v2018 = vld [vmem:[%s1131 + $0x28] sm:$0xf]
        %s2019 = scalar_lea.vmem %s7, 24
        %v2020 = vld [vmem:[%s2019] sm:$0xf]
        %v2022 = vshrl.u32 %v2014, 16
        %v2024 = vrot.slane %v2022, 3
        %v2025 = vshll.u32 %v2014, 16
        %v2027 = vrot.slane %v2025, 4
        %v2028 = vor.u32 %v2024, %v2027
        %v2030 = vshrl.u32 %v2015, 16
        %v2032 = vrot.slane %v2030, 3
        %v2033 = vshll.u32 %v2015, 16
        %v2035 = vrot.slane %v2033, 4
        %v2036 = vor.u32 %v2032, %v2035
        %v2037 = vsel %vm1313, %v2028, %v2036
        %v2039 = vshrl.u32 %v2016, 16
        %v2041 = vrot.slane %v2039, 3
        %v2042 = vshll.u32 %v2016, 16
        %v2044 = vrot.slane %v2042, 4
        %v2045 = vor.u32 %v2041, %v2044
        %v2046 = vsel %vm1313, %v2036, %v2045
        %v2048 = vshrl.u32 %v2017, 16
        %v2050 = vrot.slane %v2048, 3
        %v2051 = vshll.u32 %v2017, 16
        %v2053 = vrot.slane %v2051, 4
        %v2054 = vor.u32 %v2050, %v2053
        %v2055 = vsel %vm1313, %v2045, %v2054
        %v2057 = vshrl.u32 %v2018, 16
        %v2059 = vrot.slane %v2057, 3
        %v2060 = vshll.u32 %v2018, 16
        %v2062 = vrot.slane %v2060, 4
        %v2063 = vor.u32 %v2059, %v2062
        %v2064 = vsel %vm1313, %v2054, %v2063
        %v2066 = vsel %vm731, %v2037, 0
        %v2069 = vsel %vm731, %v2046, 0
        %v2072 = vsel %vm731, %v2055, 0
        %v2075 = vsel %vm731, %v2064, 0
        %v2078 = vsel %vm744, %v2020, 0
        %2080 = vmatprep.subr.bf16.mxu0 0
        %2081 = vmatpush1.bf16.msra.mxu0 %v2078
        %2082 = vmatprep.subr.bf16.mxu0 0
        %2083 = vmatpush1.bf16.msra.mxu0 0
        %2084 = vmatprep.subr.bf16.mxu0 0
        %2085 = vmatpush1.bf16.msra.mxu0 0
        %2086 = vmatprep.subr.bf16.mxu0 0
        %2087 = vmatpush1.bf16.msra.mxu0 0
        %2088 = vmatprep.subr.bf16.mxu0 0
        %2089 = vmatpush1.bf16.msra.mxu0 0
        %2090 = vmatprep.subr.bf16.mxu0 0
        %2091 = vmatpush1.bf16.msra.mxu0 0
        %2092 = vmatprep.subr.bf16.mxu0 0
        %2093 = vmatpush1.bf16.msra.mxu0 0
        %2094 = vmatprep.subr.bf16.mxu0 0
        %2095 = vmatpush1.bf16.msra.mxu0 0
        %2096 = vmatprep.subr.bf16.mxu0 0
        %2097 = vmatpush1.bf16.msra.mxu0 0
        %2098 = vmatprep.subr.bf16.mxu0 0
        %2099 = vmatpush1.bf16.msra.mxu0 0
        %2100 = vmatprep.subr.bf16.mxu0 0
        %2101 = vmatpush1.bf16.msra.mxu0 0
        %2102 = vmatprep.subr.bf16.mxu0 0
        %2103 = vmatpush1.bf16.msra.mxu0 0
        %2104 = vmatprep.subr.bf16.mxu0 0
        %2105 = vmatpush1.bf16.msra.mxu0 0
        %2106 = vmatprep.subr.bf16.mxu0 0
        %2107 = vmatpush1.bf16.msra.mxu0 0
        %2108 = vmatprep.subr.bf16.mxu0 0
        %2109 = vmatpush1.bf16.msra.mxu0 0
        %2110 = vmatprep.subr.bf16.mxu0 0
        %2111 = vmatpush1.bf16.msra.mxu0 0
        %2112 = vmatprep.mubr.bf16.mxu0 0
        %2113 = vmatmul.mubr.bf16.gmra.mrb[0].mxu0 %v2066
        %v2114 = vpop.f32.mrb[0].mxu0
        %v2115 = vadd.f32 0.0, %v2114
        %v2116 = vpop.f32.mrb[0].mxu0
        %v2117 = vpop.f32.mrb[0].mxu0
        %v2118 = vadd.f32 0.0, %v2117
        %v2119 = vpop.f32.mrb[0].mxu0
        %2120 = vmatprep.mubr.bf16.mxu0 0
        %2121 = vmatmul.mubr.bf16.gmra.mrb[0].mxu0 %v2069
        %v2122 = vpop.f32.mrb[0].mxu0
        %v2123 = vadd.f32 0.0, %v2122
        %v2124 = vpop.f32.mrb[0].mxu0
        %v2125 = vpop.f32.mrb[0].mxu0
        %v2126 = vadd.f32 0.0, %v2125
        %v2127 = vpop.f32.mrb[0].mxu0
        %2128 = vmatprep.mubr.bf16.mxu0 0
        %2129 = vmatmul.mubr.bf16.gmra.mrb[0].mxu0 %v2072
        %v2130 = vpop.f32.mrb[0].mxu0
        %v2131 = vadd.f32 0.0, %v2130
        %v2132 = vpop.f32.mrb[0].mxu0
        %v2133 = vpop.f32.mrb[0].mxu0
        %v2134 = vadd.f32 0.0, %v2133
        %v2135 = vpop.f32.mrb[0].mxu0
        %2136 = vmatprep.mubr.bf16.mxu0 0
        %2137 = vmatmul.mubr.bf16.gmra.mrb[0].mxu0 %v2075
        %v2138 = vpop.f32.mrb[0].mxu0
        %v2139 = vadd.f32 0.0, %v2138
        %v2140 = vpop.f32.mrb[0].mxu0
        %v2141 = vpop.f32.mrb[0].mxu0
        %v2142 = vadd.f32 0.0, %v2141
        %v2143 = vpop.f32.mrb[0].mxu0
        %2144 = vdwg.mxu0
        %v2145 = vadd.f32 %v2006, %v2115
        %v2146 = vadd.f32 %v2007, %v2118
        %v2147 = vadd.f32 %v2008, %v2123
        %v2148 = vadd.f32 %v2009, %v2126
        %v2149 = vadd.f32 %v2010, %v2131
        %v2150 = vadd.f32 %v2011, %v2134
        %v2151 = vadd.f32 %v2012, %v2139
        %v2152 = vadd.f32 %v2013, %v2142
        %v2153 = vld [vmem:[#allocation2 + $0x8] sm:$0xf0]
        %v2154 = vld [vmem:[#allocation2 + $0x10] sm:$0xff]
        %v2155 = vld [vmem:[#allocation2 + $0x18] sm:$0xff]
        %v2156 = vld [vmem:[#allocation2 + $0x20] sm:$0xff]
        %v2157 = vld [vmem:[#allocation2 + $0x28] sm:$0xf]
        %s2158 = scalar_lea.vmem %s7, 28
        %v2159 = vld [vmem:[%s2158] sm:$0xf]
        %v2165 = vrot.slane %v2153, 4
        %v2166 = vrot.slane %v2154, 4
        %v2167 = vsel %vm1530, %v2165, %v2166
        %v2168 = vrot.slane %v2155, 4
        %v2169 = vsel %vm1530, %v2166, %v2168
        %v2170 = vrot.slane %v2156, 4
        %v2171 = vsel %vm1530, %v2168, %v2170
        %v2172 = vrot.slane %v2157, 4
        %v2173 = vsel %vm1530, %v2170, %v2172
        %v2175 = vsel %vm731, %v2167, 0
        %v2178 = vsel %vm731, %v2169, 0
        %v2181 = vsel %vm731, %v2171, 0
        %v2184 = vsel %vm731, %v2173, 0
        %v2187 = vsel %vm744, %v2159, 0
        %2189 = vmatprep.subr.bf16.mxu0 0
        %2190 = vmatpush1.bf16.msra.mxu0 %v2187
        %2191 = vmatprep.subr.bf16.mxu0 0
        %2192 = vmatpush1.bf16.msra.mxu0 0
        %2193 = vmatprep.subr.bf16.mxu0 0
        %2194 = vmatpush1.bf16.msra.mxu0 0
        %2195 = vmatprep.subr.bf16.mxu0 0
        %2196 = vmatpush1.bf16.msra.mxu0 0
        %2197 = vmatprep.subr.bf16.mxu0 0
        %2198 = vmatpush1.bf16.msra.mxu0 0
        %2199 = vmatprep.subr.bf16.mxu0 0
        %2200 = vmatpush1.bf16.msra.mxu0 0
        %2201 = vmatprep.subr.bf16.mxu0 0
        %2202 = vmatpush1.bf16.msra.mxu0 0
        %2203 = vmatprep.subr.bf16.mxu0 0
        %2204 = vmatpush1.bf16.msra.mxu0 0
        %2205 = vmatprep.subr.bf16.mxu0 0
        %2206 = vmatpush1.bf16.msra.mxu0 0
        %2207 = vmatprep.subr.bf16.mxu0 0
        %2208 = vmatpush1.bf16.msra.mxu0 0
        %2209 = vmatprep.subr.bf16.mxu0 0
        %2210 = vmatpush1.bf16.msra.mxu0 0
        %2211 = vmatprep.subr.bf16.mxu0 0
        %2212 = vmatpush1.bf16.msra.mxu0 0
        %2213 = vmatprep.subr.bf16.mxu0 0
        %2214 = vmatpush1.bf16.msra.mxu0 0
        %2215 = vmatprep.subr.bf16.mxu0 0
        %2216 = vmatpush1.bf16.msra.mxu0 0
        %2217 = vmatprep.subr.bf16.mxu0 0
        %2218 = vmatpush1.bf16.msra.mxu0 0
        %2219 = vmatprep.subr.bf16.mxu0 0
        %2220 = vmatpush1.bf16.msra.mxu0 0
        %2221 = vmatprep.mubr.bf16.mxu0 0
        %2222 = vmatmul.mubr.bf16.gmra.mrb[0].mxu0 %v2175
        %v2223 = vpop.f32.mrb[0].mxu0
        %v2224 = vadd.f32 0.0, %v2223
        %v2225 = vpop.f32.mrb[0].mxu0
        %v2226 = vpop.f32.mrb[0].mxu0
        %v2227 = vadd.f32 0.0, %v2226
        %v2228 = vpop.f32.mrb[0].mxu0
        %2229 = vmatprep.mubr.bf16.mxu0 0
        %2230 = vmatmul.mubr.bf16.gmra.mrb[0].mxu0 %v2178
        %v2231 = vpop.f32.mrb[0].mxu0
        %v2232 = vadd.f32 0.0, %v2231
        %v2233 = vpop.f32.mrb[0].mxu0
        %v2234 = vpop.f32.mrb[0].mxu0
        %v2235 = vadd.f32 0.0, %v2234
        %v2236 = vpop.f32.mrb[0].mxu0
        %2237 = vmatprep.mubr.bf16.mxu0 0
        %2238 = vmatmul.mubr.bf16.gmra.mrb[0].mxu0 %v2181
        %v2239 = vpop.f32.mrb[0].mxu0
        %v2240 = vadd.f32 0.0, %v2239
        %v2241 = vpop.f32.mrb[0].mxu0
        %v2242 = vpop.f32.mrb[0].mxu0
        %v2243 = vadd.f32 0.0, %v2242
        %v2244 = vpop.f32.mrb[0].mxu0
        %2245 = vmatprep.mubr.bf16.mxu0 0
        %2246 = vmatmul.mubr.bf16.gmra.mrb[0].mxu0 %v2184
        %v2247 = vpop.f32.mrb[0].mxu0
        %v2248 = vadd.f32 0.0, %v2247
        %v2249 = vpop.f32.mrb[0].mxu0
        %v2250 = vpop.f32.mrb[0].mxu0
        %v2251 = vadd.f32 0.0, %v2250
        %v2252 = vpop.f32.mrb[0].mxu0
        %2253 = vdwg.mxu0
        %v2254 = vadd.f32 %v2145, %v2224
        %v2255 = vadd.f32 %v2146, %v2227
        %v2256 = vadd.f32 %v2147, %v2232
        %v2257 = vadd.f32 %v2148, %v2235
        %v2258 = vadd.f32 %v2149, %v2240
        %v2259 = vadd.f32 %v2150, %v2243
        %v2260 = vadd.f32 %v2151, %v2248
        %v2261 = vadd.f32 %v2152, %v2251
        %v2262 = vld [vmem:[%s1134 + $0x8] sm:$0xf0]
        %v2263 = vld [vmem:[%s1134 + $0x28] sm:$0x1f]
        %s2264 = scalar_lea.vmem %s7, 32
        %v2265 = vld [vmem:[%s2264] sm:$0xf]
        %v2267 = vshrl.u32 %v2262, 16
        %v2269 = vrot.slane %v2267, 4
        %v2270 = vshll.u32 %v2262, 16
        %v2272 = vrot.slane %v2270, 5
        %v2273 = vor.u32 %v2269, %v2272
        %v2274 = vrot.slane %v1902, 4
        %v2275 = vrot.slane %v1898, 5
        %v2276 = vor.u32 %v2274, %v2275
        %v2277 = vsel %vm1635, %v2273, %v2276
        %v2278 = vrot.slane %v1910, 4
        %v2279 = vrot.slane %v1906, 5
        %v2280 = vor.u32 %v2278, %v2279
        %v2281 = vsel %vm1635, %v2276, %v2280
        %v2282 = vrot.slane %v1918, 4
        %v2283 = vrot.slane %v1914, 5
        %v2284 = vor.u32 %v2282, %v2283
        %v2285 = vsel %vm1635, %v2280, %v2284
        %v2287 = vshrl.u32 %v2263, 16
        %v2289 = vrot.slane %v2287, 4
        %v2290 = vshll.u32 %v2263, 16
        %v2292 = vrot.slane %v2290, 5
        %v2293 = vor.u32 %v2289, %v2292
        %v2294 = vsel %vm1635, %v2284, %v2293
        %v2296 = vsel %vm731, %v2277, 0
        %v2299 = vsel %vm731, %v2281, 0
        %v2302 = vsel %vm731, %v2285, 0
        %v2305 = vsel %vm731, %v2294, 0
        %v2308 = vsel %vm744, %v2265, 0
        %2310 = vmatprep.subr.bf16.mxu0 0
        %2311 = vmatpush1.bf16.msra.mxu0 %v2308
        %2312 = vmatprep.subr.bf16.mxu0 0
        %2313 = vmatpush1.bf16.msra.mxu0 0
        %2314 = vmatprep.subr.bf16.mxu0 0
        %2315 = vmatpush1.bf16.msra.mxu0 0
        %2316 = vmatprep.subr.bf16.mxu0 0
        %2317 = vmatpush1.bf16.msra.mxu0 0
        %2318 = vmatprep.subr.bf16.mxu0 0
        %2319 = vmatpush1.bf16.msra.mxu0 0
        %2320 = vmatprep.subr.bf16.mxu0 0
        %2321 = vmatpush1.bf16.msra.mxu0 0
        %2322 = vmatprep.subr.bf16.mxu0 0
        %2323 = vmatpush1.bf16.msra.mxu0 0
        %2324 = vmatprep.subr.bf16.mxu0 0
        %2325 = vmatpush1.bf16.msra.mxu0 0
        %2326 = vmatprep.subr.bf16.mxu0 0
        %2327 = vmatpush1.bf16.msra.mxu0 0
        %2328 = vmatprep.subr.bf16.mxu0 0
        %2329 = vmatpush1.bf16.msra.mxu0 0
        %2330 = vmatprep.subr.bf16.mxu0 0
        %2331 = vmatpush1.bf16.msra.mxu0 0
        %2332 = vmatprep.subr.bf16.mxu0 0
        %2333 = vmatpush1.bf16.msra.mxu0 0
        %2334 = vmatprep.subr.bf16.mxu0 0
        %2335 = vmatpush1.bf16.msra.mxu0 0
        %2336 = vmatprep.subr.bf16.mxu0 0
        %2337 = vmatpush1.bf16.msra.mxu0 0
        %2338 = vmatprep.subr.bf16.mxu0 0
        %2339 = vmatpush1.bf16.msra.mxu0 0
        %2340 = vmatprep.subr.bf16.mxu0 0
        %2341 = vmatpush1.bf16.msra.mxu0 0
        %2342 = vmatprep.mubr.bf16.mxu0 0
        %2343 = vmatmul.mubr.bf16.gmra.mrb[0].mxu0 %v2296
        %v2344 = vpop.f32.mrb[0].mxu0
        %v2345 = vadd.f32 0.0, %v2344
        %v2346 = vpop.f32.mrb[0].mxu0
        %v2347 = vpop.f32.mrb[0].mxu0
        %v2348 = vadd.f32 0.0, %v2347
        %v2349 = vpop.f32.mrb[0].mxu0
        %2350 = vmatprep.mubr.bf16.mxu0 0
        %2351 = vmatmul.mubr.bf16.gmra.mrb[0].mxu0 %v2299
        %v2352 = vpop.f32.mrb[0].mxu0
        %v2353 = vadd.f32 0.0, %v2352
        %v2354 = vpop.f32.mrb[0].mxu0
        %v2355 = vpop.f32.mrb[0].mxu0
        %v2356 = vadd.f32 0.0, %v2355
        %v2357 = vpop.f32.mrb[0].mxu0
        %2358 = vmatprep.mubr.bf16.mxu0 0
        %2359 = vmatmul.mubr.bf16.gmra.mrb[0].mxu0 %v2302
        %v2360 = vpop.f32.mrb[0].mxu0
        %v2361 = vadd.f32 0.0, %v2360
        %v2362 = vpop.f32.mrb[0].mxu0
        %v2363 = vpop.f32.mrb[0].mxu0
        %v2364 = vadd.f32 0.0, %v2363
        %v2365 = vpop.f32.mrb[0].mxu0
        %2366 = vmatprep.mubr.bf16.mxu0 0
        %2367 = vmatmul.mubr.bf16.gmra.mrb[0].mxu0 %v2305
        %v2368 = vpop.f32.mrb[0].mxu0
        %v2369 = vadd.f32 0.0, %v2368
        %v2370 = vpop.f32.mrb[0].mxu0
        %v2371 = vpop.f32.mrb[0].mxu0
        %v2372 = vadd.f32 0.0, %v2371
        %v2373 = vpop.f32.mrb[0].mxu0
        %2374 = vdwg.mxu0
        %v2375 = vadd.f32 %v2254, %v2345
        %v2376 = vadd.f32 %v2255, %v2348
        %v2377 = vadd.f32 %v2256, %v2353
        %v2378 = vadd.f32 %v2257, %v2356
        %v2379 = vadd.f32 %v2258, %v2361
        %v2380 = vadd.f32 %v2259, %v2364
        %v2381 = vadd.f32 %v2260, %v2369
        %v2382 = vadd.f32 %v2261, %v2372
        %v2383 = vld [vmem:[%s8] sm:$0x1]
        %v2385 = vlaneseq
        %v2386 = vshrl.u32 %v2385, 7
        %v2387 = vsub.s32 0, %v2386
        %v2388 = vrot.slane %v2383, %v2387
        %v2390 = vadd.f32 %v2375, %v2388
        %v2391 = vadd.f32 %v2376, %v2388
        %v2392 = vadd.f32 %v2377, %v2388
        %v2393 = vadd.f32 %v2378, %v2388
        %v2394 = vadd.f32 %v2379, %v2388
        %v2395 = vadd.f32 %v2380, %v2388
        %v2396 = vadd.f32 %v2381, %v2388
        %v2397 = vadd.f32 %v2382, %v2388
        %v2398 = vxor.u32 %v2390, 2147483648
        %v2399 = vxor.u32 %v2391, 2147483648
        %v2400 = vxor.u32 %v2392, 2147483648
        %v2401 = vxor.u32 %v2393, 2147483648
        %v2402 = vxor.u32 %v2394, 2147483648
        %v2403 = vxor.u32 %v2395, 2147483648
        %v2404 = vxor.u32 %v2396, 2147483648
        %v2405 = vxor.u32 %v2397, 2147483648
        %v2406 = vmul.f32 %v2398, 1.442695
        %v2407 = vpow.pop %v2406
        %v2408 = vmul.f32 %v2399, 1.442695
        %v2409 = vpow.pop %v2408
        %v2410 = vmul.f32 %v2400, 1.442695
        %v2411 = vpow.pop %v2410
        %v2412 = vmul.f32 %v2401, 1.442695
        %v2413 = vpow.pop %v2412
        %v2414 = vmul.f32 %v2402, 1.442695
        %v2415 = vpow.pop %v2414
        %v2416 = vmul.f32 %v2403, 1.442695
        %v2417 = vpow.pop %v2416
        %v2418 = vmul.f32 %v2404, 1.442695
        %v2419 = vpow.pop %v2418
        %v2420 = vmul.f32 %v2405, 1.442695
        %v2421 = vpow.pop %v2420
        %v2422 = vadd.f32 %v2407, 1.0
        %v2423 = vadd.f32 %v2409, 1.0
        %v2424 = vadd.f32 %v2411, 1.0
        %v2425 = vadd.f32 %v2413, 1.0
        %v2426 = vadd.f32 %v2415, 1.0
        %v2427 = vadd.f32 %v2417, 1.0
        %v2428 = vadd.f32 %v2419, 1.0
        %v2429 = vadd.f32 %v2421, 1.0
        %v2430 = vrcp.pop %v2422
        %v2431 = vmul.f32 1.0, %v2430
        %v2432 = vrcp.pop %v2423
        %v2433 = vmul.f32 1.0, %v2432
        %v2434 = vrcp.pop %v2424
        %v2435 = vmul.f32 1.0, %v2434
        %v2436 = vrcp.pop %v2425
        %v2437 = vmul.f32 1.0, %v2436
        %v2438 = vrcp.pop %v2426
        %v2439 = vmul.f32 1.0, %v2438
        %v2440 = vrcp.pop %v2427
        %v2441 = vmul.f32 1.0, %v2440
        %v2442 = vrcp.pop %v2428
        %v2443 = vmul.f32 1.0, %v2442
        %v2444 = vrcp.pop %v2429
        %v2445 = vmul.f32 1.0, %v2444
        %v2446 = vmul.f32 %v2390, %v2431
        %v2447 = vmul.f32 %v2391, %v2433
        %v2448 = vmul.f32 %v2392, %v2435
        %v2449 = vmul.f32 %v2393, %v2437
        %v2450 = vmul.f32 %v2394, %v2439
        %v2451 = vmul.f32 %v2395, %v2441
        %v2452 = vmul.f32 %v2396, %v2443
        %v2453 = vmul.f32 %v2397, %v2445
        %v2454 = vld [vmem:[%s9] sm:$0xf]
        %v2455 = vpack.c.bf16 %v2447, %v2446
        %v2456 = vpack.c.bf16 %v2449, %v2448
        %v2457 = vpack.c.bf16 %v2451, %v2450
        %v2458 = vpack.c.bf16 %v2453, %v2452
        %v2459 = vld [vmem:[%s10] sm:$0x1]
        %v2461 = vlaneseq
        %v2462 = vshrl.u32 %v2461, 7
        %v2463 = vsub.s32 0, %v2462
        %v2464 = vrot.slane %v2459, %v2463
        %v2467 = vsel %vm731, %v2455, 0
        %v2470 = vsel %vm731, %v2456, 0
        %v2473 = vsel %vm731, %v2457, 0
        %v2476 = vsel %vm731, %v2458, 0
        %v2479 = vsel %vm744, %v2454, 0
        %2481 = vmatprep.subr.bf16.mxu0 0
        %2482 = vmatpush1.bf16.msra.mxu0 %v2479
        %2483 = vmatprep.subr.bf16.mxu0 0
        %2484 = vmatpush1.bf16.msra.mxu0 0
        %2485 = vmatprep.subr.bf16.mxu0 0
        %2486 = vmatpush1.bf16.msra.mxu0 0
        %2487 = vmatprep.subr.bf16.mxu0 0
        %2488 = vmatpush1.bf16.msra.mxu0 0
        %2489 = vmatprep.subr.bf16.mxu0 0
        %2490 = vmatpush1.bf16.msra.mxu0 0
        %2491 = vmatprep.subr.bf16.mxu0 0
        %2492 = vmatpush1.bf16.msra.mxu0 0
        %2493 = vmatprep.subr.bf16.mxu0 0
        %2494 = vmatpush1.bf16.msra.mxu0 0
        %2495 = vmatprep.subr.bf16.mxu0 0
        %2496 = vmatpush1.bf16.msra.mxu0 0
        %2497 = vmatprep.subr.bf16.mxu0 0
        %2498 = vmatpush1.bf16.msra.mxu0 0
        %2499 = vmatprep.subr.bf16.mxu0 0
        %2500 = vmatpush1.bf16.msra.mxu0 0
        %2501 = vmatprep.subr.bf16.mxu0 0
        %2502 = vmatpush1.bf16.msra.mxu0 0
        %2503 = vmatprep.subr.bf16.mxu0 0
        %2504 = vmatpush1.bf16.msra.mxu0 0
        %2505 = vmatprep.subr.bf16.mxu0 0
        %2506 = vmatpush1.bf16.msra.mxu0 0
        %2507 = vmatprep.subr.bf16.mxu0 0
        %2508 = vmatpush1.bf16.msra.mxu0 0
        %2509 = vmatprep.subr.bf16.mxu0 0
        %2510 = vmatpush1.bf16.msra.mxu0 0
        %2511 = vmatprep.subr.bf16.mxu0 0
        %2512 = vmatpush1.bf16.msra.mxu0 0
        %2513 = vmatprep.mubr.bf16.mxu0 0
        %2514 = vmatmul.mubr.bf16.gmra.mrb[0].mxu0 %v2467
        %v2515 = vpop.f32.mrb[0].mxu0
        %v2516 = vadd.f32 %v2464, %v2515
        %v2517 = vpop.f32.mrb[0].mxu0
        %v2518 = vpop.f32.mrb[0].mxu0
        %v2519 = vadd.f32 %v2464, %v2518
        %v2520 = vpop.f32.mrb[0].mxu0
        %2521 = vmatprep.mubr.bf16.mxu0 0
        %2522 = vmatmul.mubr.bf16.gmra.mrb[0].mxu0 %v2470
        %v2523 = vpop.f32.mrb[0].mxu0
        %v2524 = vadd.f32 %v2464, %v2523
        %v2525 = vpop.f32.mrb[0].mxu0
        %v2526 = vpop.f32.mrb[0].mxu0
        %v2527 = vadd.f32 %v2464, %v2526
        %v2528 = vpop.f32.mrb[0].mxu0
        %2529 = vmatprep.mubr.bf16.mxu0 0
        %2530 = vmatmul.mubr.bf16.gmra.mrb[0].mxu0 %v2473
        %v2531 = vpop.f32.mrb[0].mxu0
        %v2532 = vadd.f32 %v2464, %v2531
        %v2533 = vpop.f32.mrb[0].mxu0
        %v2534 = vpop.f32.mrb[0].mxu0
        %v2535 = vadd.f32 %v2464, %v2534
        %v2536 = vpop.f32.mrb[0].mxu0
        %2537 = vmatprep.mubr.bf16.mxu0 0
        %2538 = vmatmul.mubr.bf16.gmra.mrb[0].mxu0 %v2476
        %v2539 = vpop.f32.mrb[0].mxu0
        %v2540 = vadd.f32 %v2464, %v2539
        %v2541 = vpop.f32.mrb[0].mxu0
        %v2542 = vpop.f32.mrb[0].mxu0
        %v2543 = vadd.f32 %v2464, %v2542
        %v2544 = vpop.f32.mrb[0].mxu0
        %2545 = vdwg.mxu0
        %v2546 = vxor.u32 %v2516, 2147483648
        %v2547 = vxor.u32 %v2519, 2147483648
        %v2548 = vxor.u32 %v2524, 2147483648
        %v2549 = vxor.u32 %v2527, 2147483648
        %v2550 = vxor.u32 %v2532, 2147483648
        %v2551 = vxor.u32 %v2535, 2147483648
        %v2552 = vxor.u32 %v2540, 2147483648
        %v2553 = vxor.u32 %v2543, 2147483648
        %v2554 = vmul.f32 %v2546, 1.442695
        %v2555 = vpow.pop %v2554
        %v2556 = vmul.f32 %v2547, 1.442695
        %v2557 = vpow.pop %v2556
        %v2558 = vmul.f32 %v2548, 1.442695
        %v2559 = vpow.pop %v2558
        %v2560 = vmul.f32 %v2549, 1.442695
        %v2561 = vpow.pop %v2560
        %v2562 = vmul.f32 %v2550, 1.442695
        %v2563 = vpow.pop %v2562
        %v2564 = vmul.f32 %v2551, 1.442695
        %v2565 = vpow.pop %v2564
        %v2566 = vmul.f32 %v2552, 1.442695
        %v2567 = vpow.pop %v2566
        %v2568 = vmul.f32 %v2553, 1.442695
        %v2569 = vpow.pop %v2568
        %v2570 = vadd.f32 %v2555, 1.0
        %v2571 = vadd.f32 %v2557, 1.0
        %v2572 = vadd.f32 %v2559, 1.0
        %v2573 = vadd.f32 %v2561, 1.0
        %v2574 = vadd.f32 %v2563, 1.0
        %v2575 = vadd.f32 %v2565, 1.0
        %v2576 = vadd.f32 %v2567, 1.0
        %v2577 = vadd.f32 %v2569, 1.0
        %v2578 = vrcp.pop %v2570
        %v2579 = vmul.f32 1.0, %v2578
        %v2580 = vrcp.pop %v2571
        %v2581 = vmul.f32 1.0, %v2580
        %v2582 = vrcp.pop %v2572
        %v2583 = vmul.f32 1.0, %v2582
        %v2584 = vrcp.pop %v2573
        %v2585 = vmul.f32 1.0, %v2584
        %v2586 = vrcp.pop %v2574
        %v2587 = vmul.f32 1.0, %v2586
        %v2588 = vrcp.pop %v2575
        %v2589 = vmul.f32 1.0, %v2588
        %v2590 = vrcp.pop %v2576
        %v2591 = vmul.f32 1.0, %v2590
        %v2592 = vrcp.pop %v2577
        %v2593 = vmul.f32 1.0, %v2592
        %v2594 = vmul.f32 %v2516, %v2579
        %v2595 = vmul.f32 %v2519, %v2581
        %v2596 = vmul.f32 %v2524, %v2583
        %v2597 = vmul.f32 %v2527, %v2585
        %v2598 = vmul.f32 %v2532, %v2587
        %v2599 = vmul.f32 %v2535, %v2589
        %v2600 = vmul.f32 %v2540, %v2591
        %v2601 = vmul.f32 %v2543, %v2593
        %v2602 = vpack.c.bf16 %v2595, %v2594
        %v2603 = vpack.c.bf16 %v2597, %v2596
        %v2604 = vpack.c.bf16 %v2599, %v2598
        %v2605 = vpack.c.bf16 %v2601, %v2600
        %2606 = vst.msk [vmem:[#allocation2 + $0x8] sm:$0xff] %vm731, %v2602
        %2607 = vst.msk [vmem:[#allocation2 + $0x10] sm:$0xff] %vm731, %v2603
        %2608 = vst.msk [vmem:[#allocation2 + $0x18] sm:$0xff] %vm731, %v2604
        %2609 = vst.msk [vmem:[#allocation2 + $0x20] sm:$0xff] %vm731, %v2605
        %v2610 = vmul.bf16 %v2602, %v1125
        %v2611 = vmul.bf16 %v2603, %v1126
        %v2612 = vmul.bf16 %v2604, %v1127
        %v2613 = vmul.bf16 %v2605, %v1128
        %2614 = vst.msk [vmem:[%s1131 + $0x8] sm:$0xff] %vm731, %v2610
        %2615 = vst.msk [vmem:[%s1131 + $0x10] sm:$0xff] %vm731, %v2611
        %2616 = vst.msk [vmem:[%s1131 + $0x18] sm:$0xff] %vm731, %v2612
        %2617 = vst.msk [vmem:[%s1131 + $0x20] sm:$0xff] %vm731, %v2613
        %v2618 = vmul.bf16 %v2602, %v1097
        %v2619 = vmul.bf16 %v2603, %v1098
        %v2620 = vmul.bf16 %v2604, %v1099
        %v2621 = vmul.bf16 %v2605, %v1100
        %2622 = vst.msk [vmem:[%s1134 + $0x8] sm:$0xff] %vm731, %v2618
        %2623 = vst.msk [vmem:[%s1134 + $0x10] sm:$0xff] %vm731, %v2619
        %2624 = vst.msk [vmem:[%s1134 + $0x18] sm:$0xff] %vm731, %v2620
        %2625 = vst.msk [vmem:[%s1134 + $0x20] sm:$0xff] %vm731, %v2621
        %s2626 = scalar_lea.vmem %s11, 16
        %v2627 = vld [vmem:[%s2626] sm:$0xf]
        %v2628 = vld [vmem:[%s1131] sm:$0xf8]
        %v2629 = vld [vmem:[%s1131 + $0x8] sm:$0xff]
        %v2630 = vld [vmem:[%s1131 + $0x10] sm:$0xff]
        %v2631 = vld [vmem:[%s1131 + $0x18] sm:$0xff]
        %v2632 = vld [vmem:[%s1131 + $0x20] sm:$0xf]
        %v2633 = vld [vmem:[%s11] sm:$0xf]
        %v2635 = vshrl.u32 %v2628, 16
        %v2637 = vrot.slane %v2635, 3
        %v2638 = vshll.u32 %v2628, 16
        %v2640 = vrot.slane %v2638, 4
        %v2641 = vor.u32 %v2637, %v2640
        %v2643 = vshrl.u32 %v2629, 16
        %v2645 = vrot.slane %v2643, 3
        %v2646 = vshll.u32 %v2629, 16
        %v2648 = vrot.slane %v2646, 4
        %v2649 = vor.u32 %v2645, %v2648
        %v2650 = vsel %vm1313, %v2641, %v2649
        %v2652 = vshrl.u32 %v2630, 16
        %v2654 = vrot.slane %v2652, 3
        %v2655 = vshll.u32 %v2630, 16
        %v2657 = vrot.slane %v2655, 4
        %v2658 = vor.u32 %v2654, %v2657
        %v2659 = vsel %vm1313, %v2649, %v2658
        %v2661 = vshrl.u32 %v2631, 16
        %v2663 = vrot.slane %v2661, 3
        %v2664 = vshll.u32 %v2631, 16
        %v2666 = vrot.slane %v2664, 4
        %v2667 = vor.u32 %v2663, %v2666
        %v2668 = vsel %vm1313, %v2658, %v2667
        %v2670 = vshrl.u32 %v2632, 16
        %v2672 = vrot.slane %v2670, 3
        %v2673 = vshll.u32 %v2632, 16
        %v2675 = vrot.slane %v2673, 4
        %v2676 = vor.u32 %v2672, %v2675
        %v2677 = vsel %vm1313, %v2667, %v2676
        %v2679 = vsel %vm731, %v2650, 0
        %v2682 = vsel %vm731, %v2659, 0
        %v2685 = vsel %vm731, %v2668, 0
        %v2688 = vsel %vm731, %v2677, 0
        %v2691 = vsel %vm744, %v2633, 0
        %2693 = vmatprep.subr.bf16.mxu0 0
        %2694 = vmatpush1.bf16.msra.mxu0 %v2691
        %2695 = vmatprep.subr.bf16.mxu0 0
        %2696 = vmatpush1.bf16.msra.mxu0 0
        %2697 = vmatprep.subr.bf16.mxu0 0
        %2698 = vmatpush1.bf16.msra.mxu0 0
        %2699 = vmatprep.subr.bf16.mxu0 0
        %2700 = vmatpush1.bf16.msra.mxu0 0
        %2701 = vmatprep.subr.bf16.mxu0 0
        %2702 = vmatpush1.bf16.msra.mxu0 0
        %2703 = vmatprep.subr.bf16.mxu0 0
        %2704 = vmatpush1.bf16.msra.mxu0 0
        %2705 = vmatprep.subr.bf16.mxu0 0
        %2706 = vmatpush1.bf16.msra.mxu0 0
        %2707 = vmatprep.subr.bf16.mxu0 0
        %2708 = vmatpush1.bf16.msra.mxu0 0
        %2709 = vmatprep.subr.bf16.mxu0 0
        %2710 = vmatpush1.bf16.msra.mxu0 0
        %2711 = vmatprep.subr.bf16.mxu0 0
        %2712 = vmatpush1.bf16.msra.mxu0 0
        %2713 = vmatprep.subr.bf16.mxu0 0
        %2714 = vmatpush1.bf16.msra.mxu0 0
        %2715 = vmatprep.subr.bf16.mxu0 0
        %2716 = vmatpush1.bf16.msra.mxu0 0
        %2717 = vmatprep.subr.bf16.mxu0 0
        %2718 = vmatpush1.bf16.msra.mxu0 0
        %2719 = vmatprep.subr.bf16.mxu0 0
        %2720 = vmatpush1.bf16.msra.mxu0 0
        %2721 = vmatprep.subr.bf16.mxu0 0
        %2722 = vmatpush1.bf16.msra.mxu0 0
        %2723 = vmatprep.subr.bf16.mxu0 0
        %2724 = vmatpush1.bf16.msra.mxu0 0
        %2725 = vmatprep.mubr.bf16.mxu0 0
        %2726 = vmatmul.mubr.bf16.gmra.mrb[0].mxu0 %v2679
        %v2727 = vpop.f32.mrb[0].mxu0
        %v2728 = vadd.f32 0.0, %v2727
        %v2729 = vpop.f32.mrb[0].mxu0
        %v2730 = vpop.f32.mrb[0].mxu0
        %v2731 = vadd.f32 0.0, %v2730
        %v2732 = vpop.f32.mrb[0].mxu0
        %2733 = vmatprep.mubr.bf16.mxu0 0
        %2734 = vmatmul.mubr.bf16.gmra.mrb[0].mxu0 %v2682
        %v2735 = vpop.f32.mrb[0].mxu0
        %v2736 = vadd.f32 0.0, %v2735
        %v2737 = vpop.f32.mrb[0].mxu0
        %v2738 = vpop.f32.mrb[0].mxu0
        %v2739 = vadd.f32 0.0, %v2738
        %v2740 = vpop.f32.mrb[0].mxu0
        %2741 = vmatprep.mubr.bf16.mxu0 0
        %2742 = vmatmul.mubr.bf16.gmra.mrb[0].mxu0 %v2685
        %v2743 = vpop.f32.mrb[0].mxu0
        %v2744 = vadd.f32 0.0, %v2743
        %v2745 = vpop.f32.mrb[0].mxu0
        %v2746 = vpop.f32.mrb[0].mxu0
        %v2747 = vadd.f32 0.0, %v2746
        %v2748 = vpop.f32.mrb[0].mxu0
        %2749 = vmatprep.mubr.bf16.mxu0 0
        %2750 = vmatmul.mubr.bf16.gmra.mrb[0].mxu0 %v2688
        %v2751 = vpop.f32.mrb[0].mxu0
        %v2752 = vadd.f32 0.0, %v2751
        %v2753 = vpop.f32.mrb[0].mxu0
        %v2754 = vpop.f32.mrb[0].mxu0
        %v2755 = vadd.f32 0.0, %v2754
        %v2756 = vpop.f32.mrb[0].mxu0
        %2757 = vdwg.mxu0
        %v2759 = vsel %vm731, %v2602, 0
        %v2762 = vsel %vm731, %v2603, 0
        %v2765 = vsel %vm731, %v2604, 0
        %v2768 = vsel %vm731, %v2605, 0
        %v2771 = vsel %vm744, %v2627, 0
        %2773 = vmatprep.subr.bf16.mxu0 0
        %2774 = vmatpush1.bf16.msra.mxu0 %v2771
        %2775 = vmatprep.subr.bf16.mxu0 0
        %2776 = vmatpush1.bf16.msra.mxu0 0
        %2777 = vmatprep.subr.bf16.mxu0 0
        %2778 = vmatpush1.bf16.msra.mxu0 0
        %2779 = vmatprep.subr.bf16.mxu0 0
        %2780 = vmatpush1.bf16.msra.mxu0 0
        %2781 = vmatprep.subr.bf16.mxu0 0
        %2782 = vmatpush1.bf16.msra.mxu0 0
        %2783 = vmatprep.subr.bf16.mxu0 0
        %2784 = vmatpush1.bf16.msra.mxu0 0
        %2785 = vmatprep.subr.bf16.mxu0 0
        %2786 = vmatpush1.bf16.msra.mxu0 0
        %2787 = vmatprep.subr.bf16.mxu0 0
        %2788 = vmatpush1.bf16.msra.mxu0 0
        %2789 = vmatprep.subr.bf16.mxu0 0
        %2790 = vmatpush1.bf16.msra.mxu0 0
        %2791 = vmatprep.subr.bf16.mxu0 0
        %2792 = vmatpush1.bf16.msra.mxu0 0
        %2793 = vmatprep.subr.bf16.mxu0 0
        %2794 = vmatpush1.bf16.msra.mxu0 0
        %2795 = vmatprep.subr.bf16.mxu0 0
        %2796 = vmatpush1.bf16.msra.mxu0 0
        %2797 = vmatprep.subr.bf16.mxu0 0
        %2798 = vmatpush1.bf16.msra.mxu0 0
        %2799 = vmatprep.subr.bf16.mxu0 0
        %2800 = vmatpush1.bf16.msra.mxu0 0
        %2801 = vmatprep.subr.bf16.mxu0 0
        %2802 = vmatpush1.bf16.msra.mxu0 0
        %2803 = vmatprep.subr.bf16.mxu0 0
        %2804 = vmatpush1.bf16.msra.mxu0 0
        %2805 = vmatprep.mubr.bf16.mxu0 0
        %2806 = vmatmul.mubr.bf16.gmra.mrb[0].mxu0 %v2759
        %v2807 = vpop.f32.mrb[0].mxu0
        %v2808 = vadd.f32 %v2728, %v2807
        %v2809 = vpop.f32.mrb[0].mxu0
        %v2810 = vpop.f32.mrb[0].mxu0
        %v2811 = vadd.f32 %v2731, %v2810
        %v2812 = vpop.f32.mrb[0].mxu0
        %2813 = vmatprep.mubr.bf16.mxu0 0
        %2814 = vmatmul.mubr.bf16.gmra.mrb[0].mxu0 %v2762
        %v2815 = vpop.f32.mrb[0].mxu0
        %v2816 = vadd.f32 %v2736, %v2815
        %v2817 = vpop.f32.mrb[0].mxu0
        %v2818 = vpop.f32.mrb[0].mxu0
        %v2819 = vadd.f32 %v2739, %v2818
        %v2820 = vpop.f32.mrb[0].mxu0
        %2821 = vmatprep.mubr.bf16.mxu0 0
        %2822 = vmatmul.mubr.bf16.gmra.mrb[0].mxu0 %v2765
        %v2823 = vpop.f32.mrb[0].mxu0
        %v2824 = vadd.f32 %v2744, %v2823
        %v2825 = vpop.f32.mrb[0].mxu0
        %v2826 = vpop.f32.mrb[0].mxu0
        %v2827 = vadd.f32 %v2747, %v2826
        %v2828 = vpop.f32.mrb[0].mxu0
        %2829 = vmatprep.mubr.bf16.mxu0 0
        %2830 = vmatmul.mubr.bf16.gmra.mrb[0].mxu0 %v2768
        %v2831 = vpop.f32.mrb[0].mxu0
        %v2832 = vadd.f32 %v2752, %v2831
        %v2833 = vpop.f32.mrb[0].mxu0
        %v2834 = vpop.f32.mrb[0].mxu0
        %v2835 = vadd.f32 %v2755, %v2834
        %v2836 = vpop.f32.mrb[0].mxu0
        %2837 = vdwg.mxu0
        %v2838 = vld [vmem:[#allocation2] sm:$0xf0]
        %v2839 = vld [vmem:[#allocation2 + $0x8] sm:$0xff]
        %v2840 = vld [vmem:[#allocation2 + $0x10] sm:$0xff]
        %v2841 = vld [vmem:[#allocation2 + $0x18] sm:$0xff]
        %v2842 = vld [vmem:[#allocation2 + $0x20] sm:$0xf]
        %s2843 = scalar_lea.vmem %s11, 4
        %v2844 = vld [vmem:[%s2843] sm:$0xf]
        %v2850 = vrot.slane %v2838, 4
        %v2851 = vrot.slane %v2839, 4
        %v2852 = vsel %vm1530, %v2850, %v2851
        %v2853 = vrot.slane %v2840, 4
        %v2854 = vsel %vm1530, %v2851, %v2853
        %v2855 = vrot.slane %v2841, 4
        %v2856 = vsel %vm1530, %v2853, %v2855
        %v2857 = vrot.slane %v2842, 4
        %v2858 = vsel %vm1530, %v2855, %v2857
        %v2860 = vsel %vm731, %v2852, 0
        %v2863 = vsel %vm731, %v2854, 0
        %v2866 = vsel %vm731, %v2856, 0
        %v2869 = vsel %vm731, %v2858, 0
        %v2872 = vsel %vm744, %v2844, 0
        %2874 = vmatprep.subr.bf16.mxu0 0
        %2875 = vmatpush1.bf16.msra.mxu0 %v2872
        %2876 = vmatprep.subr.bf16.mxu0 0
        %2877 = vmatpush1.bf16.msra.mxu0 0
        %2878 = vmatprep.subr.bf16.mxu0 0
        %2879 = vmatpush1.bf16.msra.mxu0 0
        %2880 = vmatprep.subr.bf16.mxu0 0
        %2881 = vmatpush1.bf16.msra.mxu0 0
        %2882 = vmatprep.subr.bf16.mxu0 0
        %2883 = vmatpush1.bf16.msra.mxu0 0
        %2884 = vmatprep.subr.bf16.mxu0 0
        %2885 = vmatpush1.bf16.msra.mxu0 0
        %2886 = vmatprep.subr.bf16.mxu0 0
        %2887 = vmatpush1.bf16.msra.mxu0 0
        %2888 = vmatprep.subr.bf16.mxu0 0
        %2889 = vmatpush1.bf16.msra.mxu0 0
        %2890 = vmatprep.subr.bf16.mxu0 0
        %2891 = vmatpush1.bf16.msra.mxu0 0
        %2892 = vmatprep.subr.bf16.mxu0 0
        %2893 = vmatpush1.bf16.msra.mxu0 0
        %2894 = vmatprep.subr.bf16.mxu0 0
        %2895 = vmatpush1.bf16.msra.mxu0 0
        %2896 = vmatprep.subr.bf16.mxu0 0
        %2897 = vmatpush1.bf16.msra.mxu0 0
        %2898 = vmatprep.subr.bf16.mxu0 0
        %2899 = vmatpush1.bf16.msra.mxu0 0
        %2900 = vmatprep.subr.bf16.mxu0 0
        %2901 = vmatpush1.bf16.msra.mxu0 0
        %2902 = vmatprep.subr.bf16.mxu0 0
        %2903 = vmatpush1.bf16.msra.mxu0 0
        %2904 = vmatprep.subr.bf16.mxu0 0
        %2905 = vmatpush1.bf16.msra.mxu0 0
        %2906 = vmatprep.mubr.bf16.mxu0 0
        %2907 = vmatmul.mubr.bf16.gmra.mrb[0].mxu0 %v2860
        %v2908 = vpop.f32.mrb[0].mxu0
        %v2909 = vadd.f32 0.0, %v2908
        %v2910 = vpop.f32.mrb[0].mxu0
        %v2911 = vpop.f32.mrb[0].mxu0
        %v2912 = vadd.f32 0.0, %v2911
        %v2913 = vpop.f32.mrb[0].mxu0
        %2914 = vmatprep.mubr.bf16.mxu0 0
        %2915 = vmatmul.mubr.bf16.gmra.mrb[0].mxu0 %v2863
        %v2916 = vpop.f32.mrb[0].mxu0
        %v2917 = vadd.f32 0.0, %v2916
        %v2918 = vpop.f32.mrb[0].mxu0
        %v2919 = vpop.f32.mrb[0].mxu0
        %v2920 = vadd.f32 0.0, %v2919
        %v2921 = vpop.f32.mrb[0].mxu0
        %2922 = vmatprep.mubr.bf16.mxu0 0
        %2923 = vmatmul.mubr.bf16.gmra.mrb[0].mxu0 %v2866
        %v2924 = vpop.f32.mrb[0].mxu0
        %v2925 = vadd.f32 0.0, %v2924
        %v2926 = vpop.f32.mrb[0].mxu0
        %v2927 = vpop.f32.mrb[0].mxu0
        %v2928 = vadd.f32 0.0, %v2927
        %v2929 = vpop.f32.mrb[0].mxu0
        %2930 = vmatprep.mubr.bf16.mxu0 0
        %2931 = vmatmul.mubr.bf16.gmra.mrb[0].mxu0 %v2869
        %v2932 = vpop.f32.mrb[0].mxu0
        %v2933 = vadd.f32 0.0, %v2932
        %v2934 = vpop.f32.mrb[0].mxu0
        %v2935 = vpop.f32.mrb[0].mxu0
        %v2936 = vadd.f32 0.0, %v2935
        %v2937 = vpop.f32.mrb[0].mxu0
        %2938 = vdwg.mxu0
        %v2939 = vadd.f32 %v2808, %v2909
        %v2940 = vadd.f32 %v2811, %v2912
        %v2941 = vadd.f32 %v2816, %v2917
        %v2942 = vadd.f32 %v2819, %v2920
        %v2943 = vadd.f32 %v2824, %v2925
        %v2944 = vadd.f32 %v2827, %v2928
        %v2945 = vadd.f32 %v2832, %v2933
        %v2946 = vadd.f32 %v2835, %v2936
        %v2947 = vld [vmem:[%s1134] sm:$0xf0]
        %v2948 = vld [vmem:[%s1134 + $0x8] sm:$0xff]
        %v2949 = vld [vmem:[%s1134 + $0x10] sm:$0xff]
        %v2950 = vld [vmem:[%s1134 + $0x18] sm:$0xff]
        %v2951 = vld [vmem:[%s1134 + $0x20] sm:$0x1f]
        %s2952 = scalar_lea.vmem %s11, 8
        %v2953 = vld [vmem:[%s2952] sm:$0xf]
        %v2955 = vshrl.u32 %v2947, 16
        %v2957 = vrot.slane %v2955, 4
        %v2958 = vshll.u32 %v2947, 16
        %v2960 = vrot.slane %v2958, 5
        %v2961 = vor.u32 %v2957, %v2960
        %v2963 = vshrl.u32 %v2948, 16
        %v2965 = vrot.slane %v2963, 4
        %v2966 = vshll.u32 %v2948, 16
        %v2968 = vrot.slane %v2966, 5
        %v2969 = vor.u32 %v2965, %v2968
        %v2970 = vsel %vm1635, %v2961, %v2969
        %v2972 = vshrl.u32 %v2949, 16
        %v2974 = vrot.slane %v2972, 4
        %v2975 = vshll.u32 %v2949, 16
        %v2977 = vrot.slane %v2975, 5
        %v2978 = vor.u32 %v2974, %v2977
        %v2979 = vsel %vm1635, %v2969, %v2978
        %v2981 = vshrl.u32 %v2950, 16
        %v2983 = vrot.slane %v2981, 4
        %v2984 = vshll.u32 %v2950, 16
        %v2986 = vrot.slane %v2984, 5
        %v2987 = vor.u32 %v2983, %v2986
        %v2988 = vsel %vm1635, %v2978, %v2987
        %v2990 = vshrl.u32 %v2951, 16
        %v2992 = vrot.slane %v2990, 4
        %v2993 = vshll.u32 %v2951, 16
        %v2995 = vrot.slane %v2993, 5
        %v2996 = vor.u32 %v2992, %v2995
        %v2997 = vsel %vm1635, %v2987, %v2996
        %v2999 = vsel %vm731, %v2970, 0
        %v3002 = vsel %vm731, %v2979, 0
        %v3005 = vsel %vm731, %v2988, 0
        %v3008 = vsel %vm731, %v2997, 0
        %v3011 = vsel %vm744, %v2953, 0
        %3013 = vmatprep.subr.bf16.mxu0 0
        %3014 = vmatpush1.bf16.msra.mxu0 %v3011
        %3015 = vmatprep.subr.bf16.mxu0 0
        %3016 = vmatpush1.bf16.msra.mxu0 0
        %3017 = vmatprep.subr.bf16.mxu0 0
        %3018 = vmatpush1.bf16.msra.mxu0 0
        %3019 = vmatprep.subr.bf16.mxu0 0
        %3020 = vmatpush1.bf16.msra.mxu0 0
        %3021 = vmatprep.subr.bf16.mxu0 0
        %3022 = vmatpush1.bf16.msra.mxu0 0
        %3023 = vmatprep.subr.bf16.mxu0 0
        %3024 = vmatpush1.bf16.msra.mxu0 0
        %3025 = vmatprep.subr.bf16.mxu0 0
        %3026 = vmatpush1.bf16.msra.mxu0 0
        %3027 = vmatprep.subr.bf16.mxu0 0
        %3028 = vmatpush1.bf16.msra.mxu0 0
        %3029 = vmatprep.subr.bf16.mxu0 0
        %3030 = vmatpush1.bf16.msra.mxu0 0
        %3031 = vmatprep.subr.bf16.mxu0 0
        %3032 = vmatpush1.bf16.msra.mxu0 0
        %3033 = vmatprep.subr.bf16.mxu0 0
        %3034 = vmatpush1.bf16.msra.mxu0 0
        %3035 = vmatprep.subr.bf16.mxu0 0
        %3036 = vmatpush1.bf16.msra.mxu0 0
        %3037 = vmatprep.subr.bf16.mxu0 0
        %3038 = vmatpush1.bf16.msra.mxu0 0
        %3039 = vmatprep.subr.bf16.mxu0 0
        %3040 = vmatpush1.bf16.msra.mxu0 0
        %3041 = vmatprep.subr.bf16.mxu0 0
        %3042 = vmatpush1.bf16.msra.mxu0 0
        %3043 = vmatprep.subr.bf16.mxu0 0
        %3044 = vmatpush1.bf16.msra.mxu0 0
        %3045 = vmatprep.mubr.bf16.mxu0 0
        %3046 = vmatmul.mubr.bf16.gmra.mrb[0].mxu0 %v2999
        %v3047 = vpop.f32.mrb[0].mxu0
        %v3048 = vadd.f32 0.0, %v3047
        %v3049 = vpop.f32.mrb[0].mxu0
        %v3050 = vpop.f32.mrb[0].mxu0
        %v3051 = vadd.f32 0.0, %v3050
        %v3052 = vpop.f32.mrb[0].mxu0
        %3053 = vmatprep.mubr.bf16.mxu0 0
        %3054 = vmatmul.mubr.bf16.gmra.mrb[0].mxu0 %v3002
        %v3055 = vpop.f32.mrb[0].mxu0
        %v3056 = vadd.f32 0.0, %v3055
        %v3057 = vpop.f32.mrb[0].mxu0
        %v3058 = vpop.f32.mrb[0].mxu0
        %v3059 = vadd.f32 0.0, %v3058
        %v3060 = vpop.f32.mrb[0].mxu0
        %3061 = vmatprep.mubr.bf16.mxu0 0
        %3062 = vmatmul.mubr.bf16.gmra.mrb[0].mxu0 %v3005
        %v3063 = vpop.f32.mrb[0].mxu0
        %v3064 = vadd.f32 0.0, %v3063
        %v3065 = vpop.f32.mrb[0].mxu0
        %v3066 = vpop.f32.mrb[0].mxu0
        %v3067 = vadd.f32 0.0, %v3066
        %v3068 = vpop.f32.mrb[0].mxu0
        %3069 = vmatprep.mubr.bf16.mxu0 0
        %3070 = vmatmul.mubr.bf16.gmra.mrb[0].mxu0 %v3008
        %v3071 = vpop.f32.mrb[0].mxu0
        %v3072 = vadd.f32 0.0, %v3071
        %v3073 = vpop.f32.mrb[0].mxu0
        %v3074 = vpop.f32.mrb[0].mxu0
        %v3075 = vadd.f32 0.0, %v3074
        %v3076 = vpop.f32.mrb[0].mxu0
        %3077 = vdwg.mxu0
        %v3078 = vadd.f32 %v2939, %v3048
        %v3079 = vadd.f32 %v2940, %v3051
        %v3080 = vadd.f32 %v2941, %v3056
        %v3081 = vadd.f32 %v2942, %v3059
        %v3082 = vadd.f32 %v2943, %v3064
        %v3083 = vadd.f32 %v2944, %v3067
        %v3084 = vadd.f32 %v2945, %v3072
        %v3085 = vadd.f32 %v2946, %v3075
        %v3086 = vld [vmem:[%s1131] sm:$0x80]
        %v3087 = vld [vmem:[%s1131 + $0x20] sm:$0xff]
        %s3088 = scalar_lea.vmem %s11, 12
        %v3089 = vld [vmem:[%s3088] sm:$0xf]
        %v3091 = vshrl.u32 %v3086, 16
        %v3093 = vrot.slane %v3091, 7
        %v3094 = vrot.slane %v2643, 7
        %v3095 = vor.u32 %v3094, %v2646
        %v3096 = vsel %vm1772, %v3093, %v3095
        %v3097 = vrot.slane %v2652, 7
        %v3098 = vor.u32 %v3097, %v2655
        %v3099 = vsel %vm1772, %v3094, %v3098
        %v3100 = vrot.slane %v2661, 7
        %v3101 = vor.u32 %v3100, %v2664
        %v3102 = vsel %vm1772, %v3097, %v3101
        %v3104 = vshrl.u32 %v3087, 16
        %v3106 = vrot.slane %v3104, 7
        %v3107 = vshll.u32 %v3087, 16
        %v3109 = vor.u32 %v3106, %v3107
        %v3110 = vsel %vm1772, %v3100, %v3109
        %v3112 = vsel %vm731, %v3096, 0
        %v3115 = vsel %vm731, %v3099, 0
        %v3118 = vsel %vm731, %v3102, 0
        %v3121 = vsel %vm731, %v3110, 0
        %v3124 = vsel %vm744, %v3089, 0
        %3126 = vmatprep.subr.bf16.mxu0 0
        %3127 = vmatpush1.bf16.msra.mxu0 %v3124
        %3128 = vmatprep.subr.bf16.mxu0 0
        %3129 = vmatpush1.bf16.msra.mxu0 0
        %3130 = vmatprep.subr.bf16.mxu0 0
        %3131 = vmatpush1.bf16.msra.mxu0 0
        %3132 = vmatprep.subr.bf16.mxu0 0
        %3133 = vmatpush1.bf16.msra.mxu0 0
        %3134 = vmatprep.subr.bf16.mxu0 0
        %3135 = vmatpush1.bf16.msra.mxu0 0
        %3136 = vmatprep.subr.bf16.mxu0 0
        %3137 = vmatpush1.bf16.msra.mxu0 0
        %3138 = vmatprep.subr.bf16.mxu0 0
        %3139 = vmatpush1.bf16.msra.mxu0 0
        %3140 = vmatprep.subr.bf16.mxu0 0
        %3141 = vmatpush1.bf16.msra.mxu0 0
        %3142 = vmatprep.subr.bf16.mxu0 0
        %3143 = vmatpush1.bf16.msra.mxu0 0
        %3144 = vmatprep.subr.bf16.mxu0 0
        %3145 = vmatpush1.bf16.msra.mxu0 0
        %3146 = vmatprep.subr.bf16.mxu0 0
        %3147 = vmatpush1.bf16.msra.mxu0 0
        %3148 = vmatprep.subr.bf16.mxu0 0
        %3149 = vmatpush1.bf16.msra.mxu0 0
        %3150 = vmatprep.subr.bf16.mxu0 0
        %3151 = vmatpush1.bf16.msra.mxu0 0
        %3152 = vmatprep.subr.bf16.mxu0 0
        %3153 = vmatpush1.bf16.msra.mxu0 0
        %3154 = vmatprep.subr.bf16.mxu0 0
        %3155 = vmatpush1.bf16.msra.mxu0 0
        %3156 = vmatprep.subr.bf16.mxu0 0
        %3157 = vmatpush1.bf16.msra.mxu0 0
        %3158 = vmatprep.mubr.bf16.mxu0 0
        %3159 = vmatmul.mubr.bf16.gmra.mrb[0].mxu0 %v3112
        %v3160 = vpop.f32.mrb[0].mxu0
        %v3161 = vadd.f32 0.0, %v3160
        %v3162 = vpop.f32.mrb[0].mxu0
        %v3163 = vpop.f32.mrb[0].mxu0
        %v3164 = vadd.f32 0.0, %v3163
        %v3165 = vpop.f32.mrb[0].mxu0
        %3166 = vmatprep.mubr.bf16.mxu0 0
        %3167 = vmatmul.mubr.bf16.gmra.mrb[0].mxu0 %v3115
        %v3168 = vpop.f32.mrb[0].mxu0
        %v3169 = vadd.f32 0.0, %v3168
        %v3170 = vpop.f32.mrb[0].mxu0
        %v3171 = vpop.f32.mrb[0].mxu0
        %v3172 = vadd.f32 0.0, %v3171
        %v3173 = vpop.f32.mrb[0].mxu0
        %3174 = vmatprep.mubr.bf16.mxu0 0
        %3175 = vmatmul.mubr.bf16.gmra.mrb[0].mxu0 %v3118
        %v3176 = vpop.f32.mrb[0].mxu0
        %v3177 = vadd.f32 0.0, %v3176
        %v3178 = vpop.f32.mrb[0].mxu0
        %v3179 = vpop.f32.mrb[0].mxu0
        %v3180 = vadd.f32 0.0, %v3179
        %v3181 = vpop.f32.mrb[0].mxu0
        %3182 = vmatprep.mubr.bf16.mxu0 0
        %3183 = vmatmul.mubr.bf16.gmra.mrb[0].mxu0 %v3121
        %v3184 = vpop.f32.mrb[0].mxu0
        %v3185 = vadd.f32 0.0, %v3184
        %v3186 = vpop.f32.mrb[0].mxu0
        %v3187 = vpop.f32.mrb[0].mxu0
        %v3188 = vadd.f32 0.0, %v3187
        %v3189 = vpop.f32.mrb[0].mxu0
        %3190 = vdwg.mxu0
        %v3191 = vadd.f32 %v3078, %v3161
        %v3192 = vadd.f32 %v3079, %v3164
        %v3193 = vadd.f32 %v3080, %v3169
        %v3194 = vadd.f32 %v3081, %v3172
        %v3195 = vadd.f32 %v3082, %v3177
        %v3196 = vadd.f32 %v3083, %v3180
        %v3197 = vadd.f32 %v3084, %v3185
        %v3198 = vadd.f32 %v3085, %v3188
        %v3199 = vld [vmem:[%s1134 + $0x8] sm:$0xff]
        %v3200 = vld [vmem:[%s1134 + $0x10] sm:$0xff]
        %v3201 = vld [vmem:[%s1134 + $0x18] sm:$0xff]
        %v3202 = vld [vmem:[%s1134 + $0x20] sm:$0xff]
        %v3203 = vld [vmem:[%s1134 + $0x28] sm:$0x1]
        %s3204 = scalar_lea.vmem %s11, 20
        %v3205 = vld [vmem:[%s3204] sm:$0xf]
        %v3207 = vshrl.u32 %v3199, 16
        %v3209 = vshll.u32 %v3199, 16
        %v3211 = vrot.slane %v3209, 1
        %v3212 = vor.u32 %v3207, %v3211
        %v3214 = vshll.u32 %v3200, 16
        %v3216 = vrot.slane %v3214, 1
        %v3217 = vsel %vm1889, %v3212, %v3216
        %v3218 = vshrl.u32 %v3200, 16
        %v3220 = vor.u32 %v3218, %v3216
        %v3222 = vshll.u32 %v3201, 16
        %v3224 = vrot.slane %v3222, 1
        %v3225 = vsel %vm1889, %v3220, %v3224
        %v3226 = vshrl.u32 %v3201, 16
        %v3228 = vor.u32 %v3226, %v3224
        %v3230 = vshll.u32 %v3202, 16
        %v3232 = vrot.slane %v3230, 1
        %v3233 = vsel %vm1889, %v3228, %v3232
        %v3234 = vshrl.u32 %v3202, 16
        %v3236 = vor.u32 %v3234, %v3232
        %v3238 = vshll.u32 %v3203, 16
        %v3240 = vrot.slane %v3238, 1
        %v3241 = vsel %vm1889, %v3236, %v3240
        %v3243 = vsel %vm731, %v3217, 0
        %v3246 = vsel %vm731, %v3225, 0
        %v3249 = vsel %vm731, %v3233, 0
        %v3252 = vsel %vm731, %v3241, 0
        %v3255 = vsel %vm744, %v3205, 0
        %3257 = vmatprep.subr.bf16.mxu0 0
        %3258 = vmatpush1.bf16.msra.mxu0 %v3255
        %3259 = vmatprep.subr.bf16.mxu0 0
        %3260 = vmatpush1.bf16.msra.mxu0 0
        %3261 = vmatprep.subr.bf16.mxu0 0
        %3262 = vmatpush1.bf16.msra.mxu0 0
        %3263 = vmatprep.subr.bf16.mxu0 0
        %3264 = vmatpush1.bf16.msra.mxu0 0
        %3265 = vmatprep.subr.bf16.mxu0 0
        %3266 = vmatpush1.bf16.msra.mxu0 0
        %3267 = vmatprep.subr.bf16.mxu0 0
        %3268 = vmatpush1.bf16.msra.mxu0 0
        %3269 = vmatprep.subr.bf16.mxu0 0
        %3270 = vmatpush1.bf16.msra.mxu0 0
        %3271 = vmatprep.subr.bf16.mxu0 0
        %3272 = vmatpush1.bf16.msra.mxu0 0
        %3273 = vmatprep.subr.bf16.mxu0 0
        %3274 = vmatpush1.bf16.msra.mxu0 0
        %3275 = vmatprep.subr.bf16.mxu0 0
        %3276 = vmatpush1.bf16.msra.mxu0 0
        %3277 = vmatprep.subr.bf16.mxu0 0
        %3278 = vmatpush1.bf16.msra.mxu0 0
        %3279 = vmatprep.subr.bf16.mxu0 0
        %3280 = vmatpush1.bf16.msra.mxu0 0
        %3281 = vmatprep.subr.bf16.mxu0 0
        %3282 = vmatpush1.bf16.msra.mxu0 0
        %3283 = vmatprep.subr.bf16.mxu0 0
        %3284 = vmatpush1.bf16.msra.mxu0 0
        %3285 = vmatprep.subr.bf16.mxu0 0
        %3286 = vmatpush1.bf16.msra.mxu0 0
        %3287 = vmatprep.subr.bf16.mxu0 0
        %3288 = vmatpush1.bf16.msra.mxu0 0
        %3289 = vmatprep.mubr.bf16.mxu0 0
        %3290 = vmatmul.mubr.bf16.gmra.mrb[0].mxu0 %v3243
        %v3291 = vpop.f32.mrb[0].mxu0
        %v3292 = vadd.f32 0.0, %v3291
        %v3293 = vpop.f32.mrb[0].mxu0
        %v3294 = vpop.f32.mrb[0].mxu0
        %v3295 = vadd.f32 0.0, %v3294
        %v3296 = vpop.f32.mrb[0].mxu0
        %3297 = vmatprep.mubr.bf16.mxu0 0
        %3298 = vmatmul.mubr.bf16.gmra.mrb[0].mxu0 %v3246
        %v3299 = vpop.f32.mrb[0].mxu0
        %v3300 = vadd.f32 0.0, %v3299
        %v3301 = vpop.f32.mrb[0].mxu0
        %v3302 = vpop.f32.mrb[0].mxu0
        %v3303 = vadd.f32 0.0, %v3302
        %v3304 = vpop.f32.mrb[0].mxu0
        %3305 = vmatprep.mubr.bf16.mxu0 0
        %3306 = vmatmul.mubr.bf16.gmra.mrb[0].mxu0 %v3249
        %v3307 = vpop.f32.mrb[0].mxu0
        %v3308 = vadd.f32 0.0, %v3307
        %v3309 = vpop.f32.mrb[0].mxu0
        %v3310 = vpop.f32.mrb[0].mxu0
        %v3311 = vadd.f32 0.0, %v3310
        %v3312 = vpop.f32.mrb[0].mxu0
        %3313 = vmatprep.mubr.bf16.mxu0 0
        %3314 = vmatmul.mubr.bf16.gmra.mrb[0].mxu0 %v3252
        %v3315 = vpop.f32.mrb[0].mxu0
        %v3316 = vadd.f32 0.0, %v3315
        %v3317 = vpop.f32.mrb[0].mxu0
        %v3318 = vpop.f32.mrb[0].mxu0
        %v3319 = vadd.f32 0.0, %v3318
        %v3320 = vpop.f32.mrb[0].mxu0
        %3321 = vdwg.mxu0
        %v3322 = vadd.f32 %v3191, %v3292
        %v3323 = vadd.f32 %v3192, %v3295
        %v3324 = vadd.f32 %v3193, %v3300
        %v3325 = vadd.f32 %v3194, %v3303
        %v3326 = vadd.f32 %v3195, %v3308
        %v3327 = vadd.f32 %v3196, %v3311
        %v3328 = vadd.f32 %v3197, %v3316
        %v3329 = vadd.f32 %v3198, %v3319
        %v3330 = vld [vmem:[%s1131 + $0x8] sm:$0xf8]
        %v3331 = vld [vmem:[%s1131 + $0x10] sm:$0xff]
        %v3332 = vld [vmem:[%s1131 + $0x18] sm:$0xff]
        %v3333 = vld [vmem:[%s1131 + $0x20] sm:$0xff]
        %v3334 = vld [vmem:[%s1131 + $0x28] sm:$0xf]
        %s3335 = scalar_lea.vmem %s11, 24
        %v3336 = vld [vmem:[%s3335] sm:$0xf]
        %v3338 = vshrl.u32 %v3330, 16
        %v3340 = vrot.slane %v3338, 3
        %v3341 = vshll.u32 %v3330, 16
        %v3343 = vrot.slane %v3341, 4
        %v3344 = vor.u32 %v3340, %v3343
        %v3346 = vshrl.u32 %v3331, 16
        %v3348 = vrot.slane %v3346, 3
        %v3349 = vshll.u32 %v3331, 16
        %v3351 = vrot.slane %v3349, 4
        %v3352 = vor.u32 %v3348, %v3351
        %v3353 = vsel %vm1313, %v3344, %v3352
        %v3355 = vshrl.u32 %v3332, 16
        %v3357 = vrot.slane %v3355, 3
        %v3358 = vshll.u32 %v3332, 16
        %v3360 = vrot.slane %v3358, 4
        %v3361 = vor.u32 %v3357, %v3360
        %v3362 = vsel %vm1313, %v3352, %v3361
        %v3364 = vshrl.u32 %v3333, 16
        %v3366 = vrot.slane %v3364, 3
        %v3367 = vshll.u32 %v3333, 16
        %v3369 = vrot.slane %v3367, 4
        %v3370 = vor.u32 %v3366, %v3369
        %v3371 = vsel %vm1313, %v3361, %v3370
        %v3373 = vshrl.u32 %v3334, 16
        %v3375 = vrot.slane %v3373, 3
        %v3376 = vshll.u32 %v3334, 16
        %v3378 = vrot.slane %v3376, 4
        %v3379 = vor.u32 %v3375, %v3378
        %v3380 = vsel %vm1313, %v3370, %v3379
        %v3382 = vsel %vm731, %v3353, 0
        %v3385 = vsel %vm731, %v3362, 0
        %v3388 = vsel %vm731, %v3371, 0
        %v3391 = vsel %vm731, %v3380, 0
        %v3394 = vsel %vm744, %v3336, 0
        %3396 = vmatprep.subr.bf16.mxu0 0
        %3397 = vmatpush1.bf16.msra.mxu0 %v3394
        %3398 = vmatprep.subr.bf16.mxu0 0
        %3399 = vmatpush1.bf16.msra.mxu0 0
        %3400 = vmatprep.subr.bf16.mxu0 0
        %3401 = vmatpush1.bf16.msra.mxu0 0
        %3402 = vmatprep.subr.bf16.mxu0 0
        %3403 = vmatpush1.bf16.msra.mxu0 0
        %3404 = vmatprep.subr.bf16.mxu0 0
        %3405 = vmatpush1.bf16.msra.mxu0 0
        %3406 = vmatprep.subr.bf16.mxu0 0
        %3407 = vmatpush1.bf16.msra.mxu0 0
        %3408 = vmatprep.subr.bf16.mxu0 0
        %3409 = vmatpush1.bf16.msra.mxu0 0
        %3410 = vmatprep.subr.bf16.mxu0 0
        %3411 = vmatpush1.bf16.msra.mxu0 0
        %3412 = vmatprep.subr.bf16.mxu0 0
        %3413 = vmatpush1.bf16.msra.mxu0 0
        %3414 = vmatprep.subr.bf16.mxu0 0
        %3415 = vmatpush1.bf16.msra.mxu0 0
        %3416 = vmatprep.subr.bf16.mxu0 0
        %3417 = vmatpush1.bf16.msra.mxu0 0
        %3418 = vmatprep.subr.bf16.mxu0 0
        %3419 = vmatpush1.bf16.msra.mxu0 0
        %3420 = vmatprep.subr.bf16.mxu0 0
        %3421 = vmatpush1.bf16.msra.mxu0 0
        %3422 = vmatprep.subr.bf16.mxu0 0
        %3423 = vmatpush1.bf16.msra.mxu0 0
        %3424 = vmatprep.subr.bf16.mxu0 0
        %3425 = vmatpush1.bf16.msra.mxu0 0
        %3426 = vmatprep.subr.bf16.mxu0 0
        %3427 = vmatpush1.bf16.msra.mxu0 0
        %3428 = vmatprep.mubr.bf16.mxu0 0
        %3429 = vmatmul.mubr.bf16.gmra.mrb[0].mxu0 %v3382
        %v3430 = vpop.f32.mrb[0].mxu0
        %v3431 = vadd.f32 0.0, %v3430
        %v3432 = vpop.f32.mrb[0].mxu0
        %v3433 = vpop.f32.mrb[0].mxu0
        %v3434 = vadd.f32 0.0, %v3433
        %v3435 = vpop.f32.mrb[0].mxu0
        %3436 = vmatprep.mubr.bf16.mxu0 0
        %3437 = vmatmul.mubr.bf16.gmra.mrb[0].mxu0 %v3385
        %v3438 = vpop.f32.mrb[0].mxu0
        %v3439 = vadd.f32 0.0, %v3438
        %v3440 = vpop.f32.mrb[0].mxu0
        %v3441 = vpop.f32.mrb[0].mxu0
        %v3442 = vadd.f32 0.0, %v3441
        %v3443 = vpop.f32.mrb[0].mxu0
        %3444 = vmatprep.mubr.bf16.mxu0 0
        %3445 = vmatmul.mubr.bf16.gmra.mrb[0].mxu0 %v3388
        %v3446 = vpop.f32.mrb[0].mxu0
        %v3447 = vadd.f32 0.0, %v3446
        %v3448 = vpop.f32.mrb[0].mxu0
        %v3449 = vpop.f32.mrb[0].mxu0
        %v3450 = vadd.f32 0.0, %v3449
        %v3451 = vpop.f32.mrb[0].mxu0
        %3452 = vmatprep.mubr.bf16.mxu0 0
        %3453 = vmatmul.mubr.bf16.gmra.mrb[0].mxu0 %v3391
        %v3454 = vpop.f32.mrb[0].mxu0
        %v3455 = vadd.f32 0.0, %v3454
        %v3456 = vpop.f32.mrb[0].mxu0
        %v3457 = vpop.f32.mrb[0].mxu0
        %v3458 = vadd.f32 0.0, %v3457
        %v3459 = vpop.f32.mrb[0].mxu0
        %3460 = vdwg.mxu0
        %v3461 = vadd.f32 %v3322, %v3431
        %v3462 = vadd.f32 %v3323, %v3434
        %v3463 = vadd.f32 %v3324, %v3439
        %v3464 = vadd.f32 %v3325, %v3442
        %v3465 = vadd.f32 %v3326, %v3447
        %v3466 = vadd.f32 %v3327, %v3450
        %v3467 = vadd.f32 %v3328, %v3455
        %v3468 = vadd.f32 %v3329, %v3458
        %v3469 = vld [vmem:[#allocation2 + $0x8] sm:$0xf0]
        %v3470 = vld [vmem:[#allocation2 + $0x10] sm:$0xff]
        %v3471 = vld [vmem:[#allocation2 + $0x18] sm:$0xff]
        %v3472 = vld [vmem:[#allocation2 + $0x20] sm:$0xff]
        %v3473 = vld [vmem:[#allocation2 + $0x28] sm:$0xf]
        %s3474 = scalar_lea.vmem %s11, 28
        %v3475 = vld [vmem:[%s3474] sm:$0xf]
        %v3481 = vrot.slane %v3469, 4
        %v3482 = vrot.slane %v3470, 4
        %v3483 = vsel %vm1530, %v3481, %v3482
        %v3484 = vrot.slane %v3471, 4
        %v3485 = vsel %vm1530, %v3482, %v3484
        %v3486 = vrot.slane %v3472, 4
        %v3487 = vsel %vm1530, %v3484, %v3486
        %v3488 = vrot.slane %v3473, 4
        %v3489 = vsel %vm1530, %v3486, %v3488
        %v3491 = vsel %vm731, %v3483, 0
        %v3494 = vsel %vm731, %v3485, 0
        %v3497 = vsel %vm731, %v3487, 0
        %v3500 = vsel %vm731, %v3489, 0
        %v3503 = vsel %vm744, %v3475, 0
        %3505 = vmatprep.subr.bf16.mxu0 0
        %3506 = vmatpush1.bf16.msra.mxu0 %v3503
        %3507 = vmatprep.subr.bf16.mxu0 0
        %3508 = vmatpush1.bf16.msra.mxu0 0
        %3509 = vmatprep.subr.bf16.mxu0 0
        %3510 = vmatpush1.bf16.msra.mxu0 0
        %3511 = vmatprep.subr.bf16.mxu0 0
        %3512 = vmatpush1.bf16.msra.mxu0 0
        %3513 = vmatprep.subr.bf16.mxu0 0
        %3514 = vmatpush1.bf16.msra.mxu0 0
        %3515 = vmatprep.subr.bf16.mxu0 0
        %3516 = vmatpush1.bf16.msra.mxu0 0
        %3517 = vmatprep.subr.bf16.mxu0 0
        %3518 = vmatpush1.bf16.msra.mxu0 0
        %3519 = vmatprep.subr.bf16.mxu0 0
        %3520 = vmatpush1.bf16.msra.mxu0 0
        %3521 = vmatprep.subr.bf16.mxu0 0
        %3522 = vmatpush1.bf16.msra.mxu0 0
        %3523 = vmatprep.subr.bf16.mxu0 0
        %3524 = vmatpush1.bf16.msra.mxu0 0
        %3525 = vmatprep.subr.bf16.mxu0 0
        %3526 = vmatpush1.bf16.msra.mxu0 0
        %3527 = vmatprep.subr.bf16.mxu0 0
        %3528 = vmatpush1.bf16.msra.mxu0 0
        %3529 = vmatprep.subr.bf16.mxu0 0
        %3530 = vmatpush1.bf16.msra.mxu0 0
        %3531 = vmatprep.subr.bf16.mxu0 0
        %3532 = vmatpush1.bf16.msra.mxu0 0
        %3533 = vmatprep.subr.bf16.mxu0 0
        %3534 = vmatpush1.bf16.msra.mxu0 0
        %3535 = vmatprep.subr.bf16.mxu0 0
        %3536 = vmatpush1.bf16.msra.mxu0 0
        %3537 = vmatprep.mubr.bf16.mxu0 0
        %3538 = vmatmul.mubr.bf16.gmra.mrb[0].mxu0 %v3491
        %v3539 = vpop.f32.mrb[0].mxu0
        %v3540 = vadd.f32 0.0, %v3539
        %v3541 = vpop.f32.mrb[0].mxu0
        %v3542 = vpop.f32.mrb[0].mxu0
        %v3543 = vadd.f32 0.0, %v3542
        %v3544 = vpop.f32.mrb[0].mxu0
        %3545 = vmatprep.mubr.bf16.mxu0 0
        %3546 = vmatmul.mubr.bf16.gmra.mrb[0].mxu0 %v3494
        %v3547 = vpop.f32.mrb[0].mxu0
        %v3548 = vadd.f32 0.0, %v3547
        %v3549 = vpop.f32.mrb[0].mxu0
        %v3550 = vpop.f32.mrb[0].mxu0
        %v3551 = vadd.f32 0.0, %v3550
        %v3552 = vpop.f32.mrb[0].mxu0
        %3553 = vmatprep.mubr.bf16.mxu0 0
        %3554 = vmatmul.mubr.bf16.gmra.mrb[0].mxu0 %v3497
        %v3555 = vpop.f32.mrb[0].mxu0
        %v3556 = vadd.f32 0.0, %v3555
        %v3557 = vpop.f32.mrb[0].mxu0
        %v3558 = vpop.f32.mrb[0].mxu0
        %v3559 = vadd.f32 0.0, %v3558
        %v3560 = vpop.f32.mrb[0].mxu0
        %3561 = vmatprep.mubr.bf16.mxu0 0
        %3562 = vmatmul.mubr.bf16.gmra.mrb[0].mxu0 %v3500
        %v3563 = vpop.f32.mrb[0].mxu0
        %v3564 = vadd.f32 0.0, %v3563
        %v3565 = vpop.f32.mrb[0].mxu0
        %v3566 = vpop.f32.mrb[0].mxu0
        %v3567 = vadd.f32 0.0, %v3566
        %v3568 = vpop.f32.mrb[0].mxu0
        %3569 = vdwg.mxu0
        %v3570 = vadd.f32 %v3461, %v3540
        %v3571 = vadd.f32 %v3462, %v3543
        %v3572 = vadd.f32 %v3463, %v3548
        %v3573 = vadd.f32 %v3464, %v3551
        %v3574 = vadd.f32 %v3465, %v3556
        %v3575 = vadd.f32 %v3466, %v3559
        %v3576 = vadd.f32 %v3467, %v3564
        %v3577 = vadd.f32 %v3468, %v3567
        %v3578 = vld [vmem:[%s1134 + $0x8] sm:$0xf0]
        %v3579 = vld [vmem:[%s1134 + $0x28] sm:$0x1f]
        %s3580 = scalar_lea.vmem %s11, 32
        %v3581 = vld [vmem:[%s3580] sm:$0xf]
        %v3583 = vshrl.u32 %v3578, 16
        %v3585 = vrot.slane %v3583, 4
        %v3586 = vshll.u32 %v3578, 16
        %v3588 = vrot.slane %v3586, 5
        %v3589 = vor.u32 %v3585, %v3588
        %v3590 = vrot.slane %v3218, 4
        %v3591 = vrot.slane %v3214, 5
        %v3592 = vor.u32 %v3590, %v3591
        %v3593 = vsel %vm1635, %v3589, %v3592
        %v3594 = vrot.slane %v3226, 4
        %v3595 = vrot.slane %v3222, 5
        %v3596 = vor.u32 %v3594, %v3595
        %v3597 = vsel %vm1635, %v3592, %v3596
        %v3598 = vrot.slane %v3234, 4
        %v3599 = vrot.slane %v3230, 5
        %v3600 = vor.u32 %v3598, %v3599
        %v3601 = vsel %vm1635, %v3596, %v3600
        %v3603 = vshrl.u32 %v3579, 16
        %v3605 = vrot.slane %v3603, 4
        %v3606 = vshll.u32 %v3579, 16
        %v3608 = vrot.slane %v3606, 5
        %v3609 = vor.u32 %v3605, %v3608
        %v3610 = vsel %vm1635, %v3600, %v3609
        %v3612 = vsel %vm731, %v3593, 0
        %v3615 = vsel %vm731, %v3597, 0
        %v3618 = vsel %vm731, %v3601, 0
        %v3621 = vsel %vm731, %v3610, 0
        %v3624 = vsel %vm744, %v3581, 0
        %3626 = vmatprep.subr.bf16.mxu0 0
        %3627 = vmatpush1.bf16.msra.mxu0 %v3624
        %3628 = vmatprep.subr.bf16.mxu0 0
        %3629 = vmatpush1.bf16.msra.mxu0 0
        %3630 = vmatprep.subr.bf16.mxu0 0
        %3631 = vmatpush1.bf16.msra.mxu0 0
        %3632 = vmatprep.subr.bf16.mxu0 0
        %3633 = vmatpush1.bf16.msra.mxu0 0
        %3634 = vmatprep.subr.bf16.mxu0 0
        %3635 = vmatpush1.bf16.msra.mxu0 0
        %3636 = vmatprep.subr.bf16.mxu0 0
        %3637 = vmatpush1.bf16.msra.mxu0 0
        %3638 = vmatprep.subr.bf16.mxu0 0
        %3639 = vmatpush1.bf16.msra.mxu0 0
        %3640 = vmatprep.subr.bf16.mxu0 0
        %3641 = vmatpush1.bf16.msra.mxu0 0
        %3642 = vmatprep.subr.bf16.mxu0 0
        %3643 = vmatpush1.bf16.msra.mxu0 0
        %3644 = vmatprep.subr.bf16.mxu0 0
        %3645 = vmatpush1.bf16.msra.mxu0 0
        %3646 = vmatprep.subr.bf16.mxu0 0
        %3647 = vmatpush1.bf16.msra.mxu0 0
        %3648 = vmatprep.subr.bf16.mxu0 0
        %3649 = vmatpush1.bf16.msra.mxu0 0
        %3650 = vmatprep.subr.bf16.mxu0 0
        %3651 = vmatpush1.bf16.msra.mxu0 0
        %3652 = vmatprep.subr.bf16.mxu0 0
        %3653 = vmatpush1.bf16.msra.mxu0 0
        %3654 = vmatprep.subr.bf16.mxu0 0
        %3655 = vmatpush1.bf16.msra.mxu0 0
        %3656 = vmatprep.subr.bf16.mxu0 0
        %3657 = vmatpush1.bf16.msra.mxu0 0
        %3658 = vmatprep.mubr.bf16.mxu0 0
        %3659 = vmatmul.mubr.bf16.gmra.mrb[0].mxu0 %v3612
        %v3660 = vpop.f32.mrb[0].mxu0
        %v3661 = vadd.f32 0.0, %v3660
        %v3662 = vpop.f32.mrb[0].mxu0
        %v3663 = vpop.f32.mrb[0].mxu0
        %v3664 = vadd.f32 0.0, %v3663
        %v3665 = vpop.f32.mrb[0].mxu0
        %3666 = vmatprep.mubr.bf16.mxu0 0
        %3667 = vmatmul.mubr.bf16.gmra.mrb[0].mxu0 %v3615
        %v3668 = vpop.f32.mrb[0].mxu0
        %v3669 = vadd.f32 0.0, %v3668
        %v3670 = vpop.f32.mrb[0].mxu0
        %v3671 = vpop.f32.mrb[0].mxu0
        %v3672 = vadd.f32 0.0, %v3671
        %v3673 = vpop.f32.mrb[0].mxu0
        %3674 = vmatprep.mubr.bf16.mxu0 0
        %3675 = vmatmul.mubr.bf16.gmra.mrb[0].mxu0 %v3618
        %v3676 = vpop.f32.mrb[0].mxu0
        %v3677 = vadd.f32 0.0, %v3676
        %v3678 = vpop.f32.mrb[0].mxu0
        %v3679 = vpop.f32.mrb[0].mxu0
        %v3680 = vadd.f32 0.0, %v3679
        %v3681 = vpop.f32.mrb[0].mxu0
        %3682 = vmatprep.mubr.bf16.mxu0 0
        %3683 = vmatmul.mubr.bf16.gmra.mrb[0].mxu0 %v3621
        %v3684 = vpop.f32.mrb[0].mxu0
        %v3685 = vadd.f32 0.0, %v3684
        %v3686 = vpop.f32.mrb[0].mxu0
        %v3687 = vpop.f32.mrb[0].mxu0
        %v3688 = vadd.f32 0.0, %v3687
        %v3689 = vpop.f32.mrb[0].mxu0
        %3690 = vdwg.mxu0
        %v3691 = vadd.f32 %v3570, %v3661
        %v3692 = vadd.f32 %v3571, %v3664
        %v3693 = vadd.f32 %v3572, %v3669
        %v3694 = vadd.f32 %v3573, %v3672
        %v3695 = vadd.f32 %v3574, %v3677
        %v3696 = vadd.f32 %v3575, %v3680
        %v3697 = vadd.f32 %v3576, %v3685
        %v3698 = vadd.f32 %v3577, %v3688
        %v3699 = vld [vmem:[%s12] sm:$0x1]
        %v3701 = vlaneseq
        %v3702 = vshrl.u32 %v3701, 7
        %v3703 = vsub.s32 0, %v3702
        %v3704 = vrot.slane %v3699, %v3703
        %v3706 = vadd.f32 %v3691, %v3704
        %v3707 = vadd.f32 %v3692, %v3704
        %v3708 = vadd.f32 %v3693, %v3704
        %v3709 = vadd.f32 %v3694, %v3704
        %v3710 = vadd.f32 %v3695, %v3704
        %v3711 = vadd.f32 %v3696, %v3704
        %v3712 = vadd.f32 %v3697, %v3704
        %v3713 = vadd.f32 %v3698, %v3704
        %v3714 = vxor.u32 %v3706, 2147483648
        %v3715 = vxor.u32 %v3707, 2147483648
        %v3716 = vxor.u32 %v3708, 2147483648
        %v3717 = vxor.u32 %v3709, 2147483648
        %v3718 = vxor.u32 %v3710, 2147483648
        %v3719 = vxor.u32 %v3711, 2147483648
        %v3720 = vxor.u32 %v3712, 2147483648
        %v3721 = vxor.u32 %v3713, 2147483648
        %v3722 = vmul.f32 %v3714, 1.442695
        %v3723 = vpow.pop %v3722
        %v3724 = vmul.f32 %v3715, 1.442695
        %v3725 = vpow.pop %v3724
        %v3726 = vmul.f32 %v3716, 1.442695
        %v3727 = vpow.pop %v3726
        %v3728 = vmul.f32 %v3717, 1.442695
        %v3729 = vpow.pop %v3728
        %v3730 = vmul.f32 %v3718, 1.442695
        %v3731 = vpow.pop %v3730
        %v3732 = vmul.f32 %v3719, 1.442695
        %v3733 = vpow.pop %v3732
        %v3734 = vmul.f32 %v3720, 1.442695
        %v3735 = vpow.pop %v3734
        %v3736 = vmul.f32 %v3721, 1.442695
        %v3737 = vpow.pop %v3736
        %v3738 = vadd.f32 %v3723, 1.0
        %v3739 = vadd.f32 %v3725, 1.0
        %v3740 = vadd.f32 %v3727, 1.0
        %v3741 = vadd.f32 %v3729, 1.0
        %v3742 = vadd.f32 %v3731, 1.0
        %v3743 = vadd.f32 %v3733, 1.0
        %v3744 = vadd.f32 %v3735, 1.0
        %v3745 = vadd.f32 %v3737, 1.0
        %v3746 = vrcp.pop %v3738
        %v3747 = vmul.f32 1.0, %v3746
        %v3748 = vrcp.pop %v3739
        %v3749 = vmul.f32 1.0, %v3748
        %v3750 = vrcp.pop %v3740
        %v3751 = vmul.f32 1.0, %v3750
        %v3752 = vrcp.pop %v3741
        %v3753 = vmul.f32 1.0, %v3752
        %v3754 = vrcp.pop %v3742
        %v3755 = vmul.f32 1.0, %v3754
        %v3756 = vrcp.pop %v3743
        %v3757 = vmul.f32 1.0, %v3756
        %v3758 = vrcp.pop %v3744
        %v3759 = vmul.f32 1.0, %v3758
        %v3760 = vrcp.pop %v3745
        %v3761 = vmul.f32 1.0, %v3760
        %v3762 = vmul.f32 %v3706, %v3747
        %v3763 = vmul.f32 %v3707, %v3749
        %v3764 = vmul.f32 %v3708, %v3751
        %v3765 = vmul.f32 %v3709, %v3753
        %v3766 = vmul.f32 %v3710, %v3755
        %v3767 = vmul.f32 %v3711, %v3757
        %v3768 = vmul.f32 %v3712, %v3759
        %v3769 = vmul.f32 %v3713, %v3761
        %v3770 = vld [vmem:[%s13] sm:$0xf]
        %v3771 = vpack.c.bf16 %v3763, %v3762
        %v3772 = vpack.c.bf16 %v3765, %v3764
        %v3773 = vpack.c.bf16 %v3767, %v3766
        %v3774 = vpack.c.bf16 %v3769, %v3768
        %v3775 = vld [vmem:[%s14] sm:$0x1]
        %v3777 = vlaneseq
        %v3778 = vshrl.u32 %v3777, 7
        %v3779 = vsub.s32 0, %v3778
        %v3780 = vrot.slane %v3775, %v3779
        %v3783 = vsel %vm731, %v3771, 0
        %v3786 = vsel %vm731, %v3772, 0
        %v3789 = vsel %vm731, %v3773, 0
        %v3792 = vsel %vm731, %v3774, 0
        %v3795 = vsel %vm744, %v3770, 0
        %3797 = vmatprep.subr.bf16.mxu0 0
        %3798 = vmatpush1.bf16.msra.mxu0 %v3795
        %3799 = vmatprep.subr.bf16.mxu0 0
        %3800 = vmatpush1.bf16.msra.mxu0 0
        %3801 = vmatprep.subr.bf16.mxu0 0
        %3802 = vmatpush1.bf16.msra.mxu0 0
        %3803 = vmatprep.subr.bf16.mxu0 0
        %3804 = vmatpush1.bf16.msra.mxu0 0
        %3805 = vmatprep.subr.bf16.mxu0 0
        %3806 = vmatpush1.bf16.msra.mxu0 0
        %3807 = vmatprep.subr.bf16.mxu0 0
        %3808 = vmatpush1.bf16.msra.mxu0 0
        %3809 = vmatprep.subr.bf16.mxu0 0
        %3810 = vmatpush1.bf16.msra.mxu0 0
        %3811 = vmatprep.subr.bf16.mxu0 0
        %3812 = vmatpush1.bf16.msra.mxu0 0
        %3813 = vmatprep.subr.bf16.mxu0 0
        %3814 = vmatpush1.bf16.msra.mxu0 0
        %3815 = vmatprep.subr.bf16.mxu0 0
        %3816 = vmatpush1.bf16.msra.mxu0 0
        %3817 = vmatprep.subr.bf16.mxu0 0
        %3818 = vmatpush1.bf16.msra.mxu0 0
        %3819 = vmatprep.subr.bf16.mxu0 0
        %3820 = vmatpush1.bf16.msra.mxu0 0
        %3821 = vmatprep.subr.bf16.mxu0 0
        %3822 = vmatpush1.bf16.msra.mxu0 0
        %3823 = vmatprep.subr.bf16.mxu0 0
        %3824 = vmatpush1.bf16.msra.mxu0 0
        %3825 = vmatprep.subr.bf16.mxu0 0
        %3826 = vmatpush1.bf16.msra.mxu0 0
        %3827 = vmatprep.subr.bf16.mxu0 0
        %3828 = vmatpush1.bf16.msra.mxu0 0
        %3829 = vmatprep.mubr.bf16.mxu0 0
        %3830 = vmatmul.mubr.bf16.gmra.mrb[0].mxu0 %v3783
        %v3831 = vpop.f32.mrb[0].mxu0
        %v3832 = vadd.f32 %v3780, %v3831
        %v3833 = vpop.f32.mrb[0].mxu0
        %v3834 = vpop.f32.mrb[0].mxu0
        %v3835 = vadd.f32 %v3780, %v3834
        %v3836 = vpop.f32.mrb[0].mxu0
        %3837 = vmatprep.mubr.bf16.mxu0 0
        %3838 = vmatmul.mubr.bf16.gmra.mrb[0].mxu0 %v3786
        %v3839 = vpop.f32.mrb[0].mxu0
        %v3840 = vadd.f32 %v3780, %v3839
        %v3841 = vpop.f32.mrb[0].mxu0
        %v3842 = vpop.f32.mrb[0].mxu0
        %v3843 = vadd.f32 %v3780, %v3842
        %v3844 = vpop.f32.mrb[0].mxu0
        %3845 = vmatprep.mubr.bf16.mxu0 0
        %3846 = vmatmul.mubr.bf16.gmra.mrb[0].mxu0 %v3789
        %v3847 = vpop.f32.mrb[0].mxu0
        %v3848 = vadd.f32 %v3780, %v3847
        %v3849 = vpop.f32.mrb[0].mxu0
        %v3850 = vpop.f32.mrb[0].mxu0
        %v3851 = vadd.f32 %v3780, %v3850
        %v3852 = vpop.f32.mrb[0].mxu0
        %3853 = vmatprep.mubr.bf16.mxu0 0
        %3854 = vmatmul.mubr.bf16.gmra.mrb[0].mxu0 %v3792
        %v3855 = vpop.f32.mrb[0].mxu0
        %v3856 = vadd.f32 %v3780, %v3855
        %v3857 = vpop.f32.mrb[0].mxu0
        %v3858 = vpop.f32.mrb[0].mxu0
        %v3859 = vadd.f32 %v3780, %v3858
        %v3860 = vpop.f32.mrb[0].mxu0
        %3861 = vdwg.mxu0
        %v3862 = vxor.u32 %v3832, 2147483648
        %v3863 = vxor.u32 %v3835, 2147483648
        %v3864 = vxor.u32 %v3840, 2147483648
        %v3865 = vxor.u32 %v3843, 2147483648
        %v3866 = vxor.u32 %v3848, 2147483648
        %v3867 = vxor.u32 %v3851, 2147483648
        %v3868 = vxor.u32 %v3856, 2147483648
        %v3869 = vxor.u32 %v3859, 2147483648
        %v3870 = vmul.f32 %v3862, 1.442695
        %v3871 = vpow.pop %v3870
        %v3872 = vmul.f32 %v3863, 1.442695
        %v3873 = vpow.pop %v3872
        %v3874 = vmul.f32 %v3864, 1.442695
        %v3875 = vpow.pop %v3874
        %v3876 = vmul.f32 %v3865, 1.442695
        %v3877 = vpow.pop %v3876
        %v3878 = vmul.f32 %v3866, 1.442695
        %v3879 = vpow.pop %v3878
        %v3880 = vmul.f32 %v3867, 1.442695
        %v3881 = vpow.pop %v3880
        %v3882 = vmul.f32 %v3868, 1.442695
        %v3883 = vpow.pop %v3882
        %v3884 = vmul.f32 %v3869, 1.442695
        %v3885 = vpow.pop %v3884
        %v3886 = vadd.f32 %v3871, 1.0
        %v3887 = vadd.f32 %v3873, 1.0
        %v3888 = vadd.f32 %v3875, 1.0
        %v3889 = vadd.f32 %v3877, 1.0
        %v3890 = vadd.f32 %v3879, 1.0
        %v3891 = vadd.f32 %v3881, 1.0
        %v3892 = vadd.f32 %v3883, 1.0
        %v3893 = vadd.f32 %v3885, 1.0
        %v3894 = vrcp.pop %v3886
        %v3895 = vmul.f32 1.0, %v3894
        %v3896 = vrcp.pop %v3887
        %v3897 = vmul.f32 1.0, %v3896
        %v3898 = vrcp.pop %v3888
        %v3899 = vmul.f32 1.0, %v3898
        %v3900 = vrcp.pop %v3889
        %v3901 = vmul.f32 1.0, %v3900
        %v3902 = vrcp.pop %v3890
        %v3903 = vmul.f32 1.0, %v3902
        %v3904 = vrcp.pop %v3891
        %v3905 = vmul.f32 1.0, %v3904
        %v3906 = vrcp.pop %v3892
        %v3907 = vmul.f32 1.0, %v3906
        %v3908 = vrcp.pop %v3893
        %v3909 = vmul.f32 1.0, %v3908
        %v3910 = vmul.f32 %v3832, %v3895
        %v3911 = vmul.f32 %v3835, %v3897
        %v3912 = vmul.f32 %v3840, %v3899
        %v3913 = vmul.f32 %v3843, %v3901
        %v3914 = vmul.f32 %v3848, %v3903
        %v3915 = vmul.f32 %v3851, %v3905
        %v3916 = vmul.f32 %v3856, %v3907
        %v3917 = vmul.f32 %v3859, %v3909
        %v3918 = vpack.c.bf16 %v3911, %v3910
        %v3919 = vpack.c.bf16 %v3913, %v3912
        %v3920 = vpack.c.bf16 %v3915, %v3914
        %v3921 = vpack.c.bf16 %v3917, %v3916
        %3922 = vst.msk [vmem:[#allocation2 + $0x8] sm:$0xff] %vm731, %v3918
        %3923 = vst.msk [vmem:[#allocation2 + $0x10] sm:$0xff] %vm731, %v3919
        %3924 = vst.msk [vmem:[#allocation2 + $0x18] sm:$0xff] %vm731, %v3920
        %3925 = vst.msk [vmem:[#allocation2 + $0x20] sm:$0xff] %vm731, %v3921
        %v3926 = vmul.bf16 %v3918, %v1125
        %v3927 = vmul.bf16 %v3919, %v1126
        %v3928 = vmul.bf16 %v3920, %v1127
        %v3929 = vmul.bf16 %v3921, %v1128
        %3930 = vst.msk [vmem:[%s1131 + $0x8] sm:$0xff] %vm731, %v3926
        %3931 = vst.msk [vmem:[%s1131 + $0x10] sm:$0xff] %vm731, %v3927
        %3932 = vst.msk [vmem:[%s1131 + $0x18] sm:$0xff] %vm731, %v3928
        %3933 = vst.msk [vmem:[%s1131 + $0x20] sm:$0xff] %vm731, %v3929
        %v3934 = vmul.bf16 %v3918, %v1097
        %v3935 = vmul.bf16 %v3919, %v1098
        %v3936 = vmul.bf16 %v3920, %v1099
        %v3937 = vmul.bf16 %v3921, %v1100
        %3938 = vst.msk [vmem:[%s1134 + $0x8] sm:$0xff] %vm731, %v3934
        %3939 = vst.msk [vmem:[%s1134 + $0x10] sm:$0xff] %vm731, %v3935
        %3940 = vst.msk [vmem:[%s1134 + $0x18] sm:$0xff] %vm731, %v3936
        %3941 = vst.msk [vmem:[%s1134 + $0x20] sm:$0xff] %vm731, %v3937
        %s3942 = scalar_lea.vmem %s15, 16
        %v3943 = vld [vmem:[%s3942] sm:$0xf]
        %v3944 = vld [vmem:[%s1131] sm:$0xf8]
        %v3945 = vld [vmem:[%s1131 + $0x8] sm:$0xff]
        %v3946 = vld [vmem:[%s1131 + $0x10] sm:$0xff]
        %v3947 = vld [vmem:[%s1131 + $0x18] sm:$0xff]
        %v3948 = vld [vmem:[%s1131 + $0x20] sm:$0xf]
        %v3949 = vld [vmem:[%s15] sm:$0xf]
        %v3951 = vshrl.u32 %v3944, 16
        %v3953 = vrot.slane %v3951, 3
        %v3954 = vshll.u32 %v3944, 16
        %v3956 = vrot.slane %v3954, 4
        %v3957 = vor.u32 %v3953, %v3956
        %v3959 = vshrl.u32 %v3945, 16
        %v3961 = vrot.slane %v3959, 3
        %v3962 = vshll.u32 %v3945, 16
        %v3964 = vrot.slane %v3962, 4
        %v3965 = vor.u32 %v3961, %v3964
        %v3966 = vsel %vm1313, %v3957, %v3965
        %v3968 = vshrl.u32 %v3946, 16
        %v3970 = vrot.slane %v3968, 3
        %v3971 = vshll.u32 %v3946, 16
        %v3973 = vrot.slane %v3971, 4
        %v3974 = vor.u32 %v3970, %v3973
        %v3975 = vsel %vm1313, %v3965, %v3974
        %v3977 = vshrl.u32 %v3947, 16
        %v3979 = vrot.slane %v3977, 3
        %v3980 = vshll.u32 %v3947, 16
        %v3982 = vrot.slane %v3980, 4
        %v3983 = vor.u32 %v3979, %v3982
        %v3984 = vsel %vm1313, %v3974, %v3983
        %v3986 = vshrl.u32 %v3948, 16
        %v3988 = vrot.slane %v3986, 3
        %v3989 = vshll.u32 %v3948, 16
        %v3991 = vrot.slane %v3989, 4
        %v3992 = vor.u32 %v3988, %v3991
        %v3993 = vsel %vm1313, %v3983, %v3992
        %v3995 = vsel %vm731, %v3966, 0
        %v3998 = vsel %vm731, %v3975, 0
        %v4001 = vsel %vm731, %v3984, 0
        %v4004 = vsel %vm731, %v3993, 0
        %v4007 = vsel %vm744, %v3949, 0
        %4009 = vmatprep.subr.bf16.mxu0 0
        %4010 = vmatpush1.bf16.msra.mxu0 %v4007
        %4011 = vmatprep.subr.bf16.mxu0 0
        %4012 = vmatpush1.bf16.msra.mxu0 0
        %4013 = vmatprep.subr.bf16.mxu0 0
        %4014 = vmatpush1.bf16.msra.mxu0 0
        %4015 = vmatprep.subr.bf16.mxu0 0
        %4016 = vmatpush1.bf16.msra.mxu0 0
        %4017 = vmatprep.subr.bf16.mxu0 0
        %4018 = vmatpush1.bf16.msra.mxu0 0
        %4019 = vmatprep.subr.bf16.mxu0 0
        %4020 = vmatpush1.bf16.msra.mxu0 0
        %4021 = vmatprep.subr.bf16.mxu0 0
        %4022 = vmatpush1.bf16.msra.mxu0 0
        %4023 = vmatprep.subr.bf16.mxu0 0
        %4024 = vmatpush1.bf16.msra.mxu0 0
        %4025 = vmatprep.subr.bf16.mxu0 0
        %4026 = vmatpush1.bf16.msra.mxu0 0
        %4027 = vmatprep.subr.bf16.mxu0 0
        %4028 = vmatpush1.bf16.msra.mxu0 0
        %4029 = vmatprep.subr.bf16.mxu0 0
        %4030 = vmatpush1.bf16.msra.mxu0 0
        %4031 = vmatprep.subr.bf16.mxu0 0
        %4032 = vmatpush1.bf16.msra.mxu0 0
        %4033 = vmatprep.subr.bf16.mxu0 0
        %4034 = vmatpush1.bf16.msra.mxu0 0
        %4035 = vmatprep.subr.bf16.mxu0 0
        %4036 = vmatpush1.bf16.msra.mxu0 0
        %4037 = vmatprep.subr.bf16.mxu0 0
        %4038 = vmatpush1.bf16.msra.mxu0 0
        %4039 = vmatprep.subr.bf16.mxu0 0
        %4040 = vmatpush1.bf16.msra.mxu0 0
        %4041 = vmatprep.mubr.bf16.mxu0 0
        %4042 = vmatmul.mubr.bf16.gmra.mrb[0].mxu0 %v3995
        %v4043 = vpop.f32.mrb[0].mxu0
        %v4044 = vadd.f32 0.0, %v4043
        %v4045 = vpop.f32.mrb[0].mxu0
        %v4046 = vpop.f32.mrb[0].mxu0
        %v4047 = vadd.f32 0.0, %v4046
        %v4048 = vpop.f32.mrb[0].mxu0
        %4049 = vmatprep.mubr.bf16.mxu0 0
        %4050 = vmatmul.mubr.bf16.gmra.mrb[0].mxu0 %v3998
        %v4051 = vpop.f32.mrb[0].mxu0
        %v4052 = vadd.f32 0.0, %v4051
        %v4053 = vpop.f32.mrb[0].mxu0
        %v4054 = vpop.f32.mrb[0].mxu0
        %v4055 = vadd.f32 0.0, %v4054
        %v4056 = vpop.f32.mrb[0].mxu0
        %4057 = vmatprep.mubr.bf16.mxu0 0
        %4058 = vmatmul.mubr.bf16.gmra.mrb[0].mxu0 %v4001
        %v4059 = vpop.f32.mrb[0].mxu0
        %v4060 = vadd.f32 0.0, %v4059
        %v4061 = vpop.f32.mrb[0].mxu0
        %v4062 = vpop.f32.mrb[0].mxu0
        %v4063 = vadd.f32 0.0, %v4062
        %v4064 = vpop.f32.mrb[0].mxu0
        %4065 = vmatprep.mubr.bf16.mxu0 0
        %4066 = vmatmul.mubr.bf16.gmra.mrb[0].mxu0 %v4004
        %v4067 = vpop.f32.mrb[0].mxu0
        %v4068 = vadd.f32 0.0, %v4067
        %v4069 = vpop.f32.mrb[0].mxu0
        %v4070 = vpop.f32.mrb[0].mxu0
        %v4071 = vadd.f32 0.0, %v4070
        %v4072 = vpop.f32.mrb[0].mxu0
        %4073 = vdwg.mxu0
        %v4075 = vsel %vm731, %v3918, 0
        %v4078 = vsel %vm731, %v3919, 0
        %v4081 = vsel %vm731, %v3920, 0
        %v4084 = vsel %vm731, %v3921, 0
        %v4087 = vsel %vm744, %v3943, 0
        %4089 = vmatprep.subr.bf16.mxu0 0
        %4090 = vmatpush1.bf16.msra.mxu0 %v4087
        %4091 = vmatprep.subr.bf16.mxu0 0
        %4092 = vmatpush1.bf16.msra.mxu0 0
        %4093 = vmatprep.subr.bf16.mxu0 0
        %4094 = vmatpush1.bf16.msra.mxu0 0
        %4095 = vmatprep.subr.bf16.mxu0 0
        %4096 = vmatpush1.bf16.msra.mxu0 0
        %4097 = vmatprep.subr.bf16.mxu0 0
        %4098 = vmatpush1.bf16.msra.mxu0 0
        %4099 = vmatprep.subr.bf16.mxu0 0
        %4100 = vmatpush1.bf16.msra.mxu0 0
        %4101 = vmatprep.subr.bf16.mxu0 0
        %4102 = vmatpush1.bf16.msra.mxu0 0
        %4103 = vmatprep.subr.bf16.mxu0 0
        %4104 = vmatpush1.bf16.msra.mxu0 0
        %4105 = vmatprep.subr.bf16.mxu0 0
        %4106 = vmatpush1.bf16.msra.mxu0 0
        %4107 = vmatprep.subr.bf16.mxu0 0
        %4108 = vmatpush1.bf16.msra.mxu0 0
        %4109 = vmatprep.subr.bf16.mxu0 0
        %4110 = vmatpush1.bf16.msra.mxu0 0
        %4111 = vmatprep.subr.bf16.mxu0 0
        %4112 = vmatpush1.bf16.msra.mxu0 0
        %4113 = vmatprep.subr.bf16.mxu0 0
        %4114 = vmatpush1.bf16.msra.mxu0 0
        %4115 = vmatprep.subr.bf16.mxu0 0
        %4116 = vmatpush1.bf16.msra.mxu0 0
        %4117 = vmatprep.subr.bf16.mxu0 0
        %4118 = vmatpush1.bf16.msra.mxu0 0
        %4119 = vmatprep.subr.bf16.mxu0 0
        %4120 = vmatpush1.bf16.msra.mxu0 0
        %4121 = vmatprep.mubr.bf16.mxu0 0
        %4122 = vmatmul.mubr.bf16.gmra.mrb[0].mxu0 %v4075
        %v4123 = vpop.f32.mrb[0].mxu0
        %v4124 = vadd.f32 %v4044, %v4123
        %v4125 = vpop.f32.mrb[0].mxu0
        %v4126 = vpop.f32.mrb[0].mxu0
        %v4127 = vadd.f32 %v4047, %v4126
        %v4128 = vpop.f32.mrb[0].mxu0
        %4129 = vmatprep.mubr.bf16.mxu0 0
        %4130 = vmatmul.mubr.bf16.gmra.mrb[0].mxu0 %v4078
        %v4131 = vpop.f32.mrb[0].mxu0
        %v4132 = vadd.f32 %v4052, %v4131
        %v4133 = vpop.f32.mrb[0].mxu0
        %v4134 = vpop.f32.mrb[0].mxu0
        %v4135 = vadd.f32 %v4055, %v4134
        %v4136 = vpop.f32.mrb[0].mxu0
        %4137 = vmatprep.mubr.bf16.mxu0 0
        %4138 = vmatmul.mubr.bf16.gmra.mrb[0].mxu0 %v4081
        %v4139 = vpop.f32.mrb[0].mxu0
        %v4140 = vadd.f32 %v4060, %v4139
        %v4141 = vpop.f32.mrb[0].mxu0
        %v4142 = vpop.f32.mrb[0].mxu0
        %v4143 = vadd.f32 %v4063, %v4142
        %v4144 = vpop.f32.mrb[0].mxu0
        %4145 = vmatprep.mubr.bf16.mxu0 0
        %4146 = vmatmul.mubr.bf16.gmra.mrb[0].mxu0 %v4084
        %v4147 = vpop.f32.mrb[0].mxu0
        %v4148 = vadd.f32 %v4068, %v4147
        %v4149 = vpop.f32.mrb[0].mxu0
        %v4150 = vpop.f32.mrb[0].mxu0
        %v4151 = vadd.f32 %v4071, %v4150
        %v4152 = vpop.f32.mrb[0].mxu0
        %4153 = vdwg.mxu0
        %v4154 = vld [vmem:[#allocation2] sm:$0xf0]
        %v4155 = vld [vmem:[#allocation2 + $0x8] sm:$0xff]
        %v4156 = vld [vmem:[#allocation2 + $0x10] sm:$0xff]
        %v4157 = vld [vmem:[#allocation2 + $0x18] sm:$0xff]
        %v4158 = vld [vmem:[#allocation2 + $0x20] sm:$0xf]
        %s4159 = scalar_lea.vmem %s15, 4
        %v4160 = vld [vmem:[%s4159] sm:$0xf]
        %v4166 = vrot.slane %v4154, 4
        %v4167 = vrot.slane %v4155, 4
        %v4168 = vsel %vm1530, %v4166, %v4167
        %v4169 = vrot.slane %v4156, 4
        %v4170 = vsel %vm1530, %v4167, %v4169
        %v4171 = vrot.slane %v4157, 4
        %v4172 = vsel %vm1530, %v4169, %v4171
        %v4173 = vrot.slane %v4158, 4
        %v4174 = vsel %vm1530, %v4171, %v4173
        %v4176 = vsel %vm731, %v4168, 0
        %v4179 = vsel %vm731, %v4170, 0
        %v4182 = vsel %vm731, %v4172, 0
        %v4185 = vsel %vm731, %v4174, 0
        %v4188 = vsel %vm744, %v4160, 0
        %4190 = vmatprep.subr.bf16.mxu0 0
        %4191 = vmatpush1.bf16.msra.mxu0 %v4188
        %4192 = vmatprep.subr.bf16.mxu0 0
        %4193 = vmatpush1.bf16.msra.mxu0 0
        %4194 = vmatprep.subr.bf16.mxu0 0
        %4195 = vmatpush1.bf16.msra.mxu0 0
        %4196 = vmatprep.subr.bf16.mxu0 0
        %4197 = vmatpush1.bf16.msra.mxu0 0
        %4198 = vmatprep.subr.bf16.mxu0 0
        %4199 = vmatpush1.bf16.msra.mxu0 0
        %4200 = vmatprep.subr.bf16.mxu0 0
        %4201 = vmatpush1.bf16.msra.mxu0 0
        %4202 = vmatprep.subr.bf16.mxu0 0
        %4203 = vmatpush1.bf16.msra.mxu0 0
        %4204 = vmatprep.subr.bf16.mxu0 0
        %4205 = vmatpush1.bf16.msra.mxu0 0
        %4206 = vmatprep.subr.bf16.mxu0 0
        %4207 = vmatpush1.bf16.msra.mxu0 0
        %4208 = vmatprep.subr.bf16.mxu0 0
        %4209 = vmatpush1.bf16.msra.mxu0 0
        %4210 = vmatprep.subr.bf16.mxu0 0
        %4211 = vmatpush1.bf16.msra.mxu0 0
        %4212 = vmatprep.subr.bf16.mxu0 0
        %4213 = vmatpush1.bf16.msra.mxu0 0
        %4214 = vmatprep.subr.bf16.mxu0 0
        %4215 = vmatpush1.bf16.msra.mxu0 0
        %4216 = vmatprep.subr.bf16.mxu0 0
        %4217 = vmatpush1.bf16.msra.mxu0 0
        %4218 = vmatprep.subr.bf16.mxu0 0
        %4219 = vmatpush1.bf16.msra.mxu0 0
        %4220 = vmatprep.subr.bf16.mxu0 0
        %4221 = vmatpush1.bf16.msra.mxu0 0
        %4222 = vmatprep.mubr.bf16.mxu0 0
        %4223 = vmatmul.mubr.bf16.gmra.mrb[0].mxu0 %v4176
        %v4224 = vpop.f32.mrb[0].mxu0
        %v4225 = vadd.f32 0.0, %v4224
        %v4226 = vpop.f32.mrb[0].mxu0
        %v4227 = vpop.f32.mrb[0].mxu0
        %v4228 = vadd.f32 0.0, %v4227
        %v4229 = vpop.f32.mrb[0].mxu0
        %4230 = vmatprep.mubr.bf16.mxu0 0
        %4231 = vmatmul.mubr.bf16.gmra.mrb[0].mxu0 %v4179
        %v4232 = vpop.f32.mrb[0].mxu0
        %v4233 = vadd.f32 0.0, %v4232
        %v4234 = vpop.f32.mrb[0].mxu0
        %v4235 = vpop.f32.mrb[0].mxu0
        %v4236 = vadd.f32 0.0, %v4235
        %v4237 = vpop.f32.mrb[0].mxu0
        %4238 = vmatprep.mubr.bf16.mxu0 0
        %4239 = vmatmul.mubr.bf16.gmra.mrb[0].mxu0 %v4182
        %v4240 = vpop.f32.mrb[0].mxu0
        %v4241 = vadd.f32 0.0, %v4240
        %v4242 = vpop.f32.mrb[0].mxu0
        %v4243 = vpop.f32.mrb[0].mxu0
        %v4244 = vadd.f32 0.0, %v4243
        %v4245 = vpop.f32.mrb[0].mxu0
        %4246 = vmatprep.mubr.bf16.mxu0 0
        %4247 = vmatmul.mubr.bf16.gmra.mrb[0].mxu0 %v4185
        %v4248 = vpop.f32.mrb[0].mxu0
        %v4249 = vadd.f32 0.0, %v4248
        %v4250 = vpop.f32.mrb[0].mxu0
        %v4251 = vpop.f32.mrb[0].mxu0
        %v4252 = vadd.f32 0.0, %v4251
        %v4253 = vpop.f32.mrb[0].mxu0
        %4254 = vdwg.mxu0
        %v4255 = vadd.f32 %v4124, %v4225
        %v4256 = vadd.f32 %v4127, %v4228
        %v4257 = vadd.f32 %v4132, %v4233
        %v4258 = vadd.f32 %v4135, %v4236
        %v4259 = vadd.f32 %v4140, %v4241
        %v4260 = vadd.f32 %v4143, %v4244
        %v4261 = vadd.f32 %v4148, %v4249
        %v4262 = vadd.f32 %v4151, %v4252
        %v4263 = vld [vmem:[%s1134] sm:$0xf0]
        %v4264 = vld [vmem:[%s1134 + $0x8] sm:$0xff]
        %v4265 = vld [vmem:[%s1134 + $0x10] sm:$0xff]
        %v4266 = vld [vmem:[%s1134 + $0x18] sm:$0xff]
        %v4267 = vld [vmem:[%s1134 + $0x20] sm:$0x1f]
        %s4268 = scalar_lea.vmem %s15, 8
        %v4269 = vld [vmem:[%s4268] sm:$0xf]
        %v4271 = vshrl.u32 %v4263, 16
        %v4273 = vrot.slane %v4271, 4
        %v4274 = vshll.u32 %v4263, 16
        %v4276 = vrot.slane %v4274, 5
        %v4277 = vor.u32 %v4273, %v4276
        %v4279 = vshrl.u32 %v4264, 16
        %v4281 = vrot.slane %v4279, 4
        %v4282 = vshll.u32 %v4264, 16
        %v4284 = vrot.slane %v4282, 5
        %v4285 = vor.u32 %v4281, %v4284
        %v4286 = vsel %vm1635, %v4277, %v4285
        %v4288 = vshrl.u32 %v4265, 16
        %v4290 = vrot.slane %v4288, 4
        %v4291 = vshll.u32 %v4265, 16
        %v4293 = vrot.slane %v4291, 5
        %v4294 = vor.u32 %v4290, %v4293
        %v4295 = vsel %vm1635, %v4285, %v4294
        %v4297 = vshrl.u32 %v4266, 16
        %v4299 = vrot.slane %v4297, 4
        %v4300 = vshll.u32 %v4266, 16
        %v4302 = vrot.slane %v4300, 5
        %v4303 = vor.u32 %v4299, %v4302
        %v4304 = vsel %vm1635, %v4294, %v4303
        %v4306 = vshrl.u32 %v4267, 16
        %v4308 = vrot.slane %v4306, 4
        %v4309 = vshll.u32 %v4267, 16
        %v4311 = vrot.slane %v4309, 5
        %v4312 = vor.u32 %v4308, %v4311
        %v4313 = vsel %vm1635, %v4303, %v4312
        %v4315 = vsel %vm731, %v4286, 0
        %v4318 = vsel %vm731, %v4295, 0
        %v4321 = vsel %vm731, %v4304, 0
        %v4324 = vsel %vm731, %v4313, 0
        %v4327 = vsel %vm744, %v4269, 0
        %4329 = vmatprep.subr.bf16.mxu0 0
        %4330 = vmatpush1.bf16.msra.mxu0 %v4327
        %4331 = vmatprep.subr.bf16.mxu0 0
        %4332 = vmatpush1.bf16.msra.mxu0 0
        %4333 = vmatprep.subr.bf16.mxu0 0
        %4334 = vmatpush1.bf16.msra.mxu0 0
        %4335 = vmatprep.subr.bf16.mxu0 0
        %4336 = vmatpush1.bf16.msra.mxu0 0
        %4337 = vmatprep.subr.bf16.mxu0 0
        %4338 = vmatpush1.bf16.msra.mxu0 0
        %4339 = vmatprep.subr.bf16.mxu0 0
        %4340 = vmatpush1.bf16.msra.mxu0 0
        %4341 = vmatprep.subr.bf16.mxu0 0
        %4342 = vmatpush1.bf16.msra.mxu0 0
        %4343 = vmatprep.subr.bf16.mxu0 0
        %4344 = vmatpush1.bf16.msra.mxu0 0
        %4345 = vmatprep.subr.bf16.mxu0 0
        %4346 = vmatpush1.bf16.msra.mxu0 0
        %4347 = vmatprep.subr.bf16.mxu0 0
        %4348 = vmatpush1.bf16.msra.mxu0 0
        %4349 = vmatprep.subr.bf16.mxu0 0
        %4350 = vmatpush1.bf16.msra.mxu0 0
        %4351 = vmatprep.subr.bf16.mxu0 0
        %4352 = vmatpush1.bf16.msra.mxu0 0
        %4353 = vmatprep.subr.bf16.mxu0 0
        %4354 = vmatpush1.bf16.msra.mxu0 0
        %4355 = vmatprep.subr.bf16.mxu0 0
        %4356 = vmatpush1.bf16.msra.mxu0 0
        %4357 = vmatprep.subr.bf16.mxu0 0
        %4358 = vmatpush1.bf16.msra.mxu0 0
        %4359 = vmatprep.subr.bf16.mxu0 0
        %4360 = vmatpush1.bf16.msra.mxu0 0
        %4361 = vmatprep.mubr.bf16.mxu0 0
        %4362 = vmatmul.mubr.bf16.gmra.mrb[0].mxu0 %v4315
        %v4363 = vpop.f32.mrb[0].mxu0
        %v4364 = vadd.f32 0.0, %v4363
        %v4365 = vpop.f32.mrb[0].mxu0
        %v4366 = vpop.f32.mrb[0].mxu0
        %v4367 = vadd.f32 0.0, %v4366
        %v4368 = vpop.f32.mrb[0].mxu0
        %4369 = vmatprep.mubr.bf16.mxu0 0
        %4370 = vmatmul.mubr.bf16.gmra.mrb[0].mxu0 %v4318
        %v4371 = vpop.f32.mrb[0].mxu0
        %v4372 = vadd.f32 0.0, %v4371
        %v4373 = vpop.f32.mrb[0].mxu0
        %v4374 = vpop.f32.mrb[0].mxu0
        %v4375 = vadd.f32 0.0, %v4374
        %v4376 = vpop.f32.mrb[0].mxu0
        %4377 = vmatprep.mubr.bf16.mxu0 0
        %4378 = vmatmul.mubr.bf16.gmra.mrb[0].mxu0 %v4321
        %v4379 = vpop.f32.mrb[0].mxu0
        %v4380 = vadd.f32 0.0, %v4379
        %v4381 = vpop.f32.mrb[0].mxu0
        %v4382 = vpop.f32.mrb[0].mxu0
        %v4383 = vadd.f32 0.0, %v4382
        %v4384 = vpop.f32.mrb[0].mxu0
        %4385 = vmatprep.mubr.bf16.mxu0 0
        %4386 = vmatmul.mubr.bf16.gmra.mrb[0].mxu0 %v4324
        %v4387 = vpop.f32.mrb[0].mxu0
        %v4388 = vadd.f32 0.0, %v4387
        %v4389 = vpop.f32.mrb[0].mxu0
        %v4390 = vpop.f32.mrb[0].mxu0
        %v4391 = vadd.f32 0.0, %v4390
        %v4392 = vpop.f32.mrb[0].mxu0
        %4393 = vdwg.mxu0
        %v4394 = vadd.f32 %v4255, %v4364
        %v4395 = vadd.f32 %v4256, %v4367
        %v4396 = vadd.f32 %v4257, %v4372
        %v4397 = vadd.f32 %v4258, %v4375
        %v4398 = vadd.f32 %v4259, %v4380
        %v4399 = vadd.f32 %v4260, %v4383
        %v4400 = vadd.f32 %v4261, %v4388
        %v4401 = vadd.f32 %v4262, %v4391
        %v4402 = vld [vmem:[%s1131] sm:$0x80]
        %v4403 = vld [vmem:[%s1131 + $0x20] sm:$0xff]
        %s4404 = scalar_lea.vmem %s15, 12
        %v4405 = vld [vmem:[%s4404] sm:$0xf]
        %v4407 = vshrl.u32 %v4402, 16
        %v4409 = vrot.slane %v4407, 7
        %v4410 = vrot.slane %v3959, 7
        %v4411 = vor.u32 %v4410, %v3962
        %v4412 = vsel %vm1772, %v4409, %v4411
        %v4413 = vrot.slane %v3968, 7
        %v4414 = vor.u32 %v4413, %v3971
        %v4415 = vsel %vm1772, %v4410, %v4414
        %v4416 = vrot.slane %v3977, 7
        %v4417 = vor.u32 %v4416, %v3980
        %v4418 = vsel %vm1772, %v4413, %v4417
        %v4420 = vshrl.u32 %v4403, 16
        %v4422 = vrot.slane %v4420, 7
        %v4423 = vshll.u32 %v4403, 16
        %v4425 = vor.u32 %v4422, %v4423
        %v4426 = vsel %vm1772, %v4416, %v4425
        %v4428 = vsel %vm731, %v4412, 0
        %v4431 = vsel %vm731, %v4415, 0
        %v4434 = vsel %vm731, %v4418, 0
        %v4437 = vsel %vm731, %v4426, 0
        %v4440 = vsel %vm744, %v4405, 0
        %4442 = vmatprep.subr.bf16.mxu0 0
        %4443 = vmatpush1.bf16.msra.mxu0 %v4440
        %4444 = vmatprep.subr.bf16.mxu0 0
        %4445 = vmatpush1.bf16.msra.mxu0 0
        %4446 = vmatprep.subr.bf16.mxu0 0
        %4447 = vmatpush1.bf16.msra.mxu0 0
        %4448 = vmatprep.subr.bf16.mxu0 0
        %4449 = vmatpush1.bf16.msra.mxu0 0
        %4450 = vmatprep.subr.bf16.mxu0 0
        %4451 = vmatpush1.bf16.msra.mxu0 0
        %4452 = vmatprep.subr.bf16.mxu0 0
        %4453 = vmatpush1.bf16.msra.mxu0 0
        %4454 = vmatprep.subr.bf16.mxu0 0
        %4455 = vmatpush1.bf16.msra.mxu0 0
        %4456 = vmatprep.subr.bf16.mxu0 0
        %4457 = vmatpush1.bf16.msra.mxu0 0
        %4458 = vmatprep.subr.bf16.mxu0 0
        %4459 = vmatpush1.bf16.msra.mxu0 0
        %4460 = vmatprep.subr.bf16.mxu0 0
        %4461 = vmatpush1.bf16.msra.mxu0 0
        %4462 = vmatprep.subr.bf16.mxu0 0
        %4463 = vmatpush1.bf16.msra.mxu0 0
        %4464 = vmatprep.subr.bf16.mxu0 0
        %4465 = vmatpush1.bf16.msra.mxu0 0
        %4466 = vmatprep.subr.bf16.mxu0 0
        %4467 = vmatpush1.bf16.msra.mxu0 0
        %4468 = vmatprep.subr.bf16.mxu0 0
        %4469 = vmatpush1.bf16.msra.mxu0 0
        %4470 = vmatprep.subr.bf16.mxu0 0
        %4471 = vmatpush1.bf16.msra.mxu0 0
        %4472 = vmatprep.subr.bf16.mxu0 0
        %4473 = vmatpush1.bf16.msra.mxu0 0
        %4474 = vmatprep.mubr.bf16.mxu0 0
        %4475 = vmatmul.mubr.bf16.gmra.mrb[0].mxu0 %v4428
        %v4476 = vpop.f32.mrb[0].mxu0
        %v4477 = vadd.f32 0.0, %v4476
        %v4478 = vpop.f32.mrb[0].mxu0
        %v4479 = vpop.f32.mrb[0].mxu0
        %v4480 = vadd.f32 0.0, %v4479
        %v4481 = vpop.f32.mrb[0].mxu0
        %4482 = vmatprep.mubr.bf16.mxu0 0
        %4483 = vmatmul.mubr.bf16.gmra.mrb[0].mxu0 %v4431
        %v4484 = vpop.f32.mrb[0].mxu0
        %v4485 = vadd.f32 0.0, %v4484
        %v4486 = vpop.f32.mrb[0].mxu0
        %v4487 = vpop.f32.mrb[0].mxu0
        %v4488 = vadd.f32 0.0, %v4487
        %v4489 = vpop.f32.mrb[0].mxu0
        %4490 = vmatprep.mubr.bf16.mxu0 0
        %4491 = vmatmul.mubr.bf16.gmra.mrb[0].mxu0 %v4434
        %v4492 = vpop.f32.mrb[0].mxu0
        %v4493 = vadd.f32 0.0, %v4492
        %v4494 = vpop.f32.mrb[0].mxu0
        %v4495 = vpop.f32.mrb[0].mxu0
        %v4496 = vadd.f32 0.0, %v4495
        %v4497 = vpop.f32.mrb[0].mxu0
        %4498 = vmatprep.mubr.bf16.mxu0 0
        %4499 = vmatmul.mubr.bf16.gmra.mrb[0].mxu0 %v4437
        %v4500 = vpop.f32.mrb[0].mxu0
        %v4501 = vadd.f32 0.0, %v4500
        %v4502 = vpop.f32.mrb[0].mxu0
        %v4503 = vpop.f32.mrb[0].mxu0
        %v4504 = vadd.f32 0.0, %v4503
        %v4505 = vpop.f32.mrb[0].mxu0
        %4506 = vdwg.mxu0
        %v4507 = vadd.f32 %v4394, %v4477
        %v4508 = vadd.f32 %v4395, %v4480
        %v4509 = vadd.f32 %v4396, %v4485
        %v4510 = vadd.f32 %v4397, %v4488
        %v4511 = vadd.f32 %v4398, %v4493
        %v4512 = vadd.f32 %v4399, %v4496
        %v4513 = vadd.f32 %v4400, %v4501
        %v4514 = vadd.f32 %v4401, %v4504
        %v4515 = vld [vmem:[%s1134 + $0x8] sm:$0xff]
        %v4516 = vld [vmem:[%s1134 + $0x10] sm:$0xff]
        %v4517 = vld [vmem:[%s1134 + $0x18] sm:$0xff]
        %v4518 = vld [vmem:[%s1134 + $0x20] sm:$0xff]
        %v4519 = vld [vmem:[%s1134 + $0x28] sm:$0x1]
        %s4520 = scalar_lea.vmem %s15, 20
        %v4521 = vld [vmem:[%s4520] sm:$0xf]
        %v4523 = vshrl.u32 %v4515, 16
        %v4525 = vshll.u32 %v4515, 16
        %v4527 = vrot.slane %v4525, 1
        %v4528 = vor.u32 %v4523, %v4527
        %v4530 = vshll.u32 %v4516, 16
        %v4532 = vrot.slane %v4530, 1
        %v4533 = vsel %vm1889, %v4528, %v4532
        %v4534 = vshrl.u32 %v4516, 16
        %v4536 = vor.u32 %v4534, %v4532
        %v4538 = vshll.u32 %v4517, 16
        %v4540 = vrot.slane %v4538, 1
        %v4541 = vsel %vm1889, %v4536, %v4540
        %v4542 = vshrl.u32 %v4517, 16
        %v4544 = vor.u32 %v4542, %v4540
        %v4546 = vshll.u32 %v4518, 16
        %v4548 = vrot.slane %v4546, 1
        %v4549 = vsel %vm1889, %v4544, %v4548
        %v4550 = vshrl.u32 %v4518, 16
        %v4552 = vor.u32 %v4550, %v4548
        %v4554 = vshll.u32 %v4519, 16
        %v4556 = vrot.slane %v4554, 1
        %v4557 = vsel %vm1889, %v4552, %v4556
        %v4559 = vsel %vm731, %v4533, 0
        %v4562 = vsel %vm731, %v4541, 0
        %v4565 = vsel %vm731, %v4549, 0
        %v4568 = vsel %vm731, %v4557, 0
        %v4571 = vsel %vm744, %v4521, 0
        %4573 = vmatprep.subr.bf16.mxu0 0
        %4574 = vmatpush1.bf16.msra.mxu0 %v4571
        %4575 = vmatprep.subr.bf16.mxu0 0
        %4576 = vmatpush1.bf16.msra.mxu0 0
        %4577 = vmatprep.subr.bf16.mxu0 0
        %4578 = vmatpush1.bf16.msra.mxu0 0
        %4579 = vmatprep.subr.bf16.mxu0 0
        %4580 = vmatpush1.bf16.msra.mxu0 0
        %4581 = vmatprep.subr.bf16.mxu0 0
        %4582 = vmatpush1.bf16.msra.mxu0 0
        %4583 = vmatprep.subr.bf16.mxu0 0
        %4584 = vmatpush1.bf16.msra.mxu0 0
        %4585 = vmatprep.subr.bf16.mxu0 0
        %4586 = vmatpush1.bf16.msra.mxu0 0
        %4587 = vmatprep.subr.bf16.mxu0 0
        %4588 = vmatpush1.bf16.msra.mxu0 0
        %4589 = vmatprep.subr.bf16.mxu0 0
        %4590 = vmatpush1.bf16.msra.mxu0 0
        %4591 = vmatprep.subr.bf16.mxu0 0
        %4592 = vmatpush1.bf16.msra.mxu0 0
        %4593 = vmatprep.subr.bf16.mxu0 0
        %4594 = vmatpush1.bf16.msra.mxu0 0
        %4595 = vmatprep.subr.bf16.mxu0 0
        %4596 = vmatpush1.bf16.msra.mxu0 0
        %4597 = vmatprep.subr.bf16.mxu0 0
        %4598 = vmatpush1.bf16.msra.mxu0 0
        %4599 = vmatprep.subr.bf16.mxu0 0
        %4600 = vmatpush1.bf16.msra.mxu0 0
        %4601 = vmatprep.subr.bf16.mxu0 0
        %4602 = vmatpush1.bf16.msra.mxu0 0
        %4603 = vmatprep.subr.bf16.mxu0 0
        %4604 = vmatpush1.bf16.msra.mxu0 0
        %4605 = vmatprep.mubr.bf16.mxu0 0
        %4606 = vmatmul.mubr.bf16.gmra.mrb[0].mxu0 %v4559
        %v4607 = vpop.f32.mrb[0].mxu0
        %v4608 = vadd.f32 0.0, %v4607
        %v4609 = vpop.f32.mrb[0].mxu0
        %v4610 = vpop.f32.mrb[0].mxu0
        %v4611 = vadd.f32 0.0, %v4610
        %v4612 = vpop.f32.mrb[0].mxu0
        %4613 = vmatprep.mubr.bf16.mxu0 0
        %4614 = vmatmul.mubr.bf16.gmra.mrb[0].mxu0 %v4562
        %v4615 = vpop.f32.mrb[0].mxu0
        %v4616 = vadd.f32 0.0, %v4615
        %v4617 = vpop.f32.mrb[0].mxu0
        %v4618 = vpop.f32.mrb[0].mxu0
        %v4619 = vadd.f32 0.0, %v4618
        %v4620 = vpop.f32.mrb[0].mxu0
        %4621 = vmatprep.mubr.bf16.mxu0 0
        %4622 = vmatmul.mubr.bf16.gmra.mrb[0].mxu0 %v4565
        %v4623 = vpop.f32.mrb[0].mxu0
        %v4624 = vadd.f32 0.0, %v4623
        %v4625 = vpop.f32.mrb[0].mxu0
        %v4626 = vpop.f32.mrb[0].mxu0
        %v4627 = vadd.f32 0.0, %v4626
        %v4628 = vpop.f32.mrb[0].mxu0
        %4629 = vmatprep.mubr.bf16.mxu0 0
        %4630 = vmatmul.mubr.bf16.gmra.mrb[0].mxu0 %v4568
        %v4631 = vpop.f32.mrb[0].mxu0
        %v4632 = vadd.f32 0.0, %v4631
        %v4633 = vpop.f32.mrb[0].mxu0
        %v4634 = vpop.f32.mrb[0].mxu0
        %v4635 = vadd.f32 0.0, %v4634
        %v4636 = vpop.f32.mrb[0].mxu0
        %4637 = vdwg.mxu0
        %v4638 = vadd.f32 %v4507, %v4608
        %v4639 = vadd.f32 %v4508, %v4611
        %v4640 = vadd.f32 %v4509, %v4616
        %v4641 = vadd.f32 %v4510, %v4619
        %v4642 = vadd.f32 %v4511, %v4624
        %v4643 = vadd.f32 %v4512, %v4627
        %v4644 = vadd.f32 %v4513, %v4632
        %v4645 = vadd.f32 %v4514, %v4635
        %v4646 = vld [vmem:[%s1131 + $0x8] sm:$0xf8]
        %v4647 = vld [vmem:[%s1131 + $0x10] sm:$0xff]
        %v4648 = vld [vmem:[%s1131 + $0x18] sm:$0xff]
        %v4649 = vld [vmem:[%s1131 + $0x20] sm:$0xff]
        %v4650 = vld [vmem:[%s1131 + $0x28] sm:$0xf]
        %s4651 = scalar_lea.vmem %s15, 24
        %v4652 = vld [vmem:[%s4651] sm:$0xf]
        %v4654 = vshrl.u32 %v4646, 16
        %v4656 = vrot.slane %v4654, 3
        %v4657 = vshll.u32 %v4646, 16
        %v4659 = vrot.slane %v4657, 4
        %v4660 = vor.u32 %v4656, %v4659
        %v4662 = vshrl.u32 %v4647, 16
        %v4664 = vrot.slane %v4662, 3
        %v4665 = vshll.u32 %v4647, 16
        %v4667 = vrot.slane %v4665, 4
        %v4668 = vor.u32 %v4664, %v4667
        %v4669 = vsel %vm1313, %v4660, %v4668
        %v4671 = vshrl.u32 %v4648, 16
        %v4673 = vrot.slane %v4671, 3
        %v4674 = vshll.u32 %v4648, 16
        %v4676 = vrot.slane %v4674, 4
        %v4677 = vor.u32 %v4673, %v4676
        %v4678 = vsel %vm1313, %v4668, %v4677
        %v4680 = vshrl.u32 %v4649, 16
        %v4682 = vrot.slane %v4680, 3
        %v4683 = vshll.u32 %v4649, 16
        %v4685 = vrot.slane %v4683, 4
        %v4686 = vor.u32 %v4682, %v4685
        %v4687 = vsel %vm1313, %v4677, %v4686
        %v4689 = vshrl.u32 %v4650, 16
        %v4691 = vrot.slane %v4689, 3
        %v4692 = vshll.u32 %v4650, 16
        %v4694 = vrot.slane %v4692, 4
        %v4695 = vor.u32 %v4691, %v4694
        %v4696 = vsel %vm1313, %v4686, %v4695
        %v4698 = vsel %vm731, %v4669, 0
        %v4701 = vsel %vm731, %v4678, 0
        %v4704 = vsel %vm731, %v4687, 0
        %v4707 = vsel %vm731, %v4696, 0
        %v4710 = vsel %vm744, %v4652, 0
        %4712 = vmatprep.subr.bf16.mxu0 0
        %4713 = vmatpush1.bf16.msra.mxu0 %v4710
        %4714 = vmatprep.subr.bf16.mxu0 0
        %4715 = vmatpush1.bf16.msra.mxu0 0
        %4716 = vmatprep.subr.bf16.mxu0 0
        %4717 = vmatpush1.bf16.msra.mxu0 0
        %4718 = vmatprep.subr.bf16.mxu0 0
        %4719 = vmatpush1.bf16.msra.mxu0 0
        %4720 = vmatprep.subr.bf16.mxu0 0
        %4721 = vmatpush1.bf16.msra.mxu0 0
        %4722 = vmatprep.subr.bf16.mxu0 0
        %4723 = vmatpush1.bf16.msra.mxu0 0
        %4724 = vmatprep.subr.bf16.mxu0 0
        %4725 = vmatpush1.bf16.msra.mxu0 0
        %4726 = vmatprep.subr.bf16.mxu0 0
        %4727 = vmatpush1.bf16.msra.mxu0 0
        %4728 = vmatprep.subr.bf16.mxu0 0
        %4729 = vmatpush1.bf16.msra.mxu0 0
        %4730 = vmatprep.subr.bf16.mxu0 0
        %4731 = vmatpush1.bf16.msra.mxu0 0
        %4732 = vmatprep.subr.bf16.mxu0 0
        %4733 = vmatpush1.bf16.msra.mxu0 0
        %4734 = vmatprep.subr.bf16.mxu0 0
        %4735 = vmatpush1.bf16.msra.mxu0 0
        %4736 = vmatprep.subr.bf16.mxu0 0
        %4737 = vmatpush1.bf16.msra.mxu0 0
        %4738 = vmatprep.subr.bf16.mxu0 0
        %4739 = vmatpush1.bf16.msra.mxu0 0
        %4740 = vmatprep.subr.bf16.mxu0 0
        %4741 = vmatpush1.bf16.msra.mxu0 0
        %4742 = vmatprep.subr.bf16.mxu0 0
        %4743 = vmatpush1.bf16.msra.mxu0 0
        %4744 = vmatprep.mubr.bf16.mxu0 0
        %4745 = vmatmul.mubr.bf16.gmra.mrb[0].mxu0 %v4698
        %v4746 = vpop.f32.mrb[0].mxu0
        %v4747 = vadd.f32 0.0, %v4746
        %v4748 = vpop.f32.mrb[0].mxu0
        %v4749 = vpop.f32.mrb[0].mxu0
        %v4750 = vadd.f32 0.0, %v4749
        %v4751 = vpop.f32.mrb[0].mxu0
        %4752 = vmatprep.mubr.bf16.mxu0 0
        %4753 = vmatmul.mubr.bf16.gmra.mrb[0].mxu0 %v4701
        %v4754 = vpop.f32.mrb[0].mxu0
        %v4755 = vadd.f32 0.0, %v4754
        %v4756 = vpop.f32.mrb[0].mxu0
        %v4757 = vpop.f32.mrb[0].mxu0
        %v4758 = vadd.f32 0.0, %v4757
        %v4759 = vpop.f32.mrb[0].mxu0
        %4760 = vmatprep.mubr.bf16.mxu0 0
        %4761 = vmatmul.mubr.bf16.gmra.mrb[0].mxu0 %v4704
        %v4762 = vpop.f32.mrb[0].mxu0
        %v4763 = vadd.f32 0.0, %v4762
        %v4764 = vpop.f32.mrb[0].mxu0
        %v4765 = vpop.f32.mrb[0].mxu0
        %v4766 = vadd.f32 0.0, %v4765
        %v4767 = vpop.f32.mrb[0].mxu0
        %4768 = vmatprep.mubr.bf16.mxu0 0
        %4769 = vmatmul.mubr.bf16.gmra.mrb[0].mxu0 %v4707
        %v4770 = vpop.f32.mrb[0].mxu0
        %v4771 = vadd.f32 0.0, %v4770
        %v4772 = vpop.f32.mrb[0].mxu0
        %v4773 = vpop.f32.mrb[0].mxu0
        %v4774 = vadd.f32 0.0, %v4773
        %v4775 = vpop.f32.mrb[0].mxu0
        %4776 = vdwg.mxu0
        %v4777 = vadd.f32 %v4638, %v4747
        %v4778 = vadd.f32 %v4639, %v4750
        %v4779 = vadd.f32 %v4640, %v4755
        %v4780 = vadd.f32 %v4641, %v4758
        %v4781 = vadd.f32 %v4642, %v4763
        %v4782 = vadd.f32 %v4643, %v4766
        %v4783 = vadd.f32 %v4644, %v4771
        %v4784 = vadd.f32 %v4645, %v4774
        %v4785 = vld [vmem:[#allocation2 + $0x8] sm:$0xf0]
        %v4786 = vld [vmem:[#allocation2 + $0x10] sm:$0xff]
        %v4787 = vld [vmem:[#allocation2 + $0x18] sm:$0xff]
        %v4788 = vld [vmem:[#allocation2 + $0x20] sm:$0xff]
        %v4789 = vld [vmem:[#allocation2 + $0x28] sm:$0xf]
        %s4790 = scalar_lea.vmem %s15, 28
        %v4791 = vld [vmem:[%s4790] sm:$0xf]
        %v4797 = vrot.slane %v4785, 4
        %v4798 = vrot.slane %v4786, 4
        %v4799 = vsel %vm1530, %v4797, %v4798
        %v4800 = vrot.slane %v4787, 4
        %v4801 = vsel %vm1530, %v4798, %v4800
        %v4802 = vrot.slane %v4788, 4
        %v4803 = vsel %vm1530, %v4800, %v4802
        %v4804 = vrot.slane %v4789, 4
        %v4805 = vsel %vm1530, %v4802, %v4804
        %v4807 = vsel %vm731, %v4799, 0
        %v4810 = vsel %vm731, %v4801, 0
        %v4813 = vsel %vm731, %v4803, 0
        %v4816 = vsel %vm731, %v4805, 0
        %v4819 = vsel %vm744, %v4791, 0
        %4821 = vmatprep.subr.bf16.mxu0 0
        %4822 = vmatpush1.bf16.msra.mxu0 %v4819
        %4823 = vmatprep.subr.bf16.mxu0 0
        %4824 = vmatpush1.bf16.msra.mxu0 0
        %4825 = vmatprep.subr.bf16.mxu0 0
        %4826 = vmatpush1.bf16.msra.mxu0 0
        %4827 = vmatprep.subr.bf16.mxu0 0
        %4828 = vmatpush1.bf16.msra.mxu0 0
        %4829 = vmatprep.subr.bf16.mxu0 0
        %4830 = vmatpush1.bf16.msra.mxu0 0
        %4831 = vmatprep.subr.bf16.mxu0 0
        %4832 = vmatpush1.bf16.msra.mxu0 0
        %4833 = vmatprep.subr.bf16.mxu0 0
        %4834 = vmatpush1.bf16.msra.mxu0 0
        %4835 = vmatprep.subr.bf16.mxu0 0
        %4836 = vmatpush1.bf16.msra.mxu0 0
        %4837 = vmatprep.subr.bf16.mxu0 0
        %4838 = vmatpush1.bf16.msra.mxu0 0
        %4839 = vmatprep.subr.bf16.mxu0 0
        %4840 = vmatpush1.bf16.msra.mxu0 0
        %4841 = vmatprep.subr.bf16.mxu0 0
        %4842 = vmatpush1.bf16.msra.mxu0 0
        %4843 = vmatprep.subr.bf16.mxu0 0
        %4844 = vmatpush1.bf16.msra.mxu0 0
        %4845 = vmatprep.subr.bf16.mxu0 0
        %4846 = vmatpush1.bf16.msra.mxu0 0
        %4847 = vmatprep.subr.bf16.mxu0 0
        %4848 = vmatpush1.bf16.msra.mxu0 0
        %4849 = vmatprep.subr.bf16.mxu0 0
        %4850 = vmatpush1.bf16.msra.mxu0 0
        %4851 = vmatprep.subr.bf16.mxu0 0
        %4852 = vmatpush1.bf16.msra.mxu0 0
        %4853 = vmatprep.mubr.bf16.mxu0 0
        %4854 = vmatmul.mubr.bf16.gmra.mrb[0].mxu0 %v4807
        %v4855 = vpop.f32.mrb[0].mxu0
        %v4856 = vadd.f32 0.0, %v4855
        %v4857 = vpop.f32.mrb[0].mxu0
        %v4858 = vpop.f32.mrb[0].mxu0
        %v4859 = vadd.f32 0.0, %v4858
        %v4860 = vpop.f32.mrb[0].mxu0
        %4861 = vmatprep.mubr.bf16.mxu0 0
        %4862 = vmatmul.mubr.bf16.gmra.mrb[0].mxu0 %v4810
        %v4863 = vpop.f32.mrb[0].mxu0
        %v4864 = vadd.f32 0.0, %v4863
        %v4865 = vpop.f32.mrb[0].mxu0
        %v4866 = vpop.f32.mrb[0].mxu0
        %v4867 = vadd.f32 0.0, %v4866
        %v4868 = vpop.f32.mrb[0].mxu0
        %4869 = vmatprep.mubr.bf16.mxu0 0
        %4870 = vmatmul.mubr.bf16.gmra.mrb[0].mxu0 %v4813
        %v4871 = vpop.f32.mrb[0].mxu0
        %v4872 = vadd.f32 0.0, %v4871
        %v4873 = vpop.f32.mrb[0].mxu0
        %v4874 = vpop.f32.mrb[0].mxu0
        %v4875 = vadd.f32 0.0, %v4874
        %v4876 = vpop.f32.mrb[0].mxu0
        %4877 = vmatprep.mubr.bf16.mxu0 0
        %4878 = vmatmul.mubr.bf16.gmra.mrb[0].mxu0 %v4816
        %v4879 = vpop.f32.mrb[0].mxu0
        %v4880 = vadd.f32 0.0, %v4879
        %v4881 = vpop.f32.mrb[0].mxu0
        %v4882 = vpop.f32.mrb[0].mxu0
        %v4883 = vadd.f32 0.0, %v4882
        %v4884 = vpop.f32.mrb[0].mxu0
        %4885 = vdwg.mxu0
        %v4886 = vadd.f32 %v4777, %v4856
        %v4887 = vadd.f32 %v4778, %v4859
        %v4888 = vadd.f32 %v4779, %v4864
        %v4889 = vadd.f32 %v4780, %v4867
        %v4890 = vadd.f32 %v4781, %v4872
        %v4891 = vadd.f32 %v4782, %v4875
        %v4892 = vadd.f32 %v4783, %v4880
        %v4893 = vadd.f32 %v4784, %v4883
        %v4894 = vld [vmem:[%s1134 + $0x8] sm:$0xf0]
        %v4895 = vld [vmem:[%s1134 + $0x28] sm:$0x1f]
        %s4896 = scalar_lea.vmem %s15, 32
        %v4897 = vld [vmem:[%s4896] sm:$0xf]
        %v4899 = vshrl.u32 %v4894, 16
        %v4901 = vrot.slane %v4899, 4
        %v4902 = vshll.u32 %v4894, 16
        %v4904 = vrot.slane %v4902, 5
        %v4905 = vor.u32 %v4901, %v4904
        %v4906 = vrot.slane %v4534, 4
        %v4907 = vrot.slane %v4530, 5
        %v4908 = vor.u32 %v4906, %v4907
        %v4909 = vsel %vm1635, %v4905, %v4908
        %v4910 = vrot.slane %v4542, 4
        %v4911 = vrot.slane %v4538, 5
        %v4912 = vor.u32 %v4910, %v4911
        %v4913 = vsel %vm1635, %v4908, %v4912
        %v4914 = vrot.slane %v4550, 4
        %v4915 = vrot.slane %v4546, 5
        %v4916 = vor.u32 %v4914, %v4915
        %v4917 = vsel %vm1635, %v4912, %v4916
        %v4919 = vshrl.u32 %v4895, 16
        %v4921 = vrot.slane %v4919, 4
        %v4922 = vshll.u32 %v4895, 16
        %v4924 = vrot.slane %v4922, 5
        %v4925 = vor.u32 %v4921, %v4924
        %v4926 = vsel %vm1635, %v4916, %v4925
        %v4928 = vsel %vm731, %v4909, 0
        %v4931 = vsel %vm731, %v4913, 0
        %v4934 = vsel %vm731, %v4917, 0
        %v4937 = vsel %vm731, %v4926, 0
        %v4940 = vsel %vm744, %v4897, 0
        %4942 = vmatprep.subr.bf16.mxu0 0
        %4943 = vmatpush1.bf16.msra.mxu0 %v4940
        %4944 = vmatprep.subr.bf16.mxu0 0
        %4945 = vmatpush1.bf16.msra.mxu0 0
        %4946 = vmatprep.subr.bf16.mxu0 0
        %4947 = vmatpush1.bf16.msra.mxu0 0
        %4948 = vmatprep.subr.bf16.mxu0 0
        %4949 = vmatpush1.bf16.msra.mxu0 0
        %4950 = vmatprep.subr.bf16.mxu0 0
        %4951 = vmatpush1.bf16.msra.mxu0 0
        %4952 = vmatprep.subr.bf16.mxu0 0
        %4953 = vmatpush1.bf16.msra.mxu0 0
        %4954 = vmatprep.subr.bf16.mxu0 0
        %4955 = vmatpush1.bf16.msra.mxu0 0
        %4956 = vmatprep.subr.bf16.mxu0 0
        %4957 = vmatpush1.bf16.msra.mxu0 0
        %4958 = vmatprep.subr.bf16.mxu0 0
        %4959 = vmatpush1.bf16.msra.mxu0 0
        %4960 = vmatprep.subr.bf16.mxu0 0
        %4961 = vmatpush1.bf16.msra.mxu0 0
        %4962 = vmatprep.subr.bf16.mxu0 0
        %4963 = vmatpush1.bf16.msra.mxu0 0
        %4964 = vmatprep.subr.bf16.mxu0 0
        %4965 = vmatpush1.bf16.msra.mxu0 0
        %4966 = vmatprep.subr.bf16.mxu0 0
        %4967 = vmatpush1.bf16.msra.mxu0 0
        %4968 = vmatprep.subr.bf16.mxu0 0
        %4969 = vmatpush1.bf16.msra.mxu0 0
        %4970 = vmatprep.subr.bf16.mxu0 0
        %4971 = vmatpush1.bf16.msra.mxu0 0
        %4972 = vmatprep.subr.bf16.mxu0 0
        %4973 = vmatpush1.bf16.msra.mxu0 0
        %4974 = vmatprep.mubr.bf16.mxu0 0
        %4975 = vmatmul.mubr.bf16.gmra.mrb[0].mxu0 %v4928
        %v4976 = vpop.f32.mrb[0].mxu0
        %v4977 = vadd.f32 0.0, %v4976
        %v4978 = vpop.f32.mrb[0].mxu0
        %v4979 = vpop.f32.mrb[0].mxu0
        %v4980 = vadd.f32 0.0, %v4979
        %v4981 = vpop.f32.mrb[0].mxu0
        %4982 = vmatprep.mubr.bf16.mxu0 0
        %4983 = vmatmul.mubr.bf16.gmra.mrb[0].mxu0 %v4931
        %v4984 = vpop.f32.mrb[0].mxu0
        %v4985 = vadd.f32 0.0, %v4984
        %v4986 = vpop.f32.mrb[0].mxu0
        %v4987 = vpop.f32.mrb[0].mxu0
        %v4988 = vadd.f32 0.0, %v4987
        %v4989 = vpop.f32.mrb[0].mxu0
        %4990 = vmatprep.mubr.bf16.mxu0 0
        %4991 = vmatmul.mubr.bf16.gmra.mrb[0].mxu0 %v4934
        %v4992 = vpop.f32.mrb[0].mxu0
        %v4993 = vadd.f32 0.0, %v4992
        %v4994 = vpop.f32.mrb[0].mxu0
        %v4995 = vpop.f32.mrb[0].mxu0
        %v4996 = vadd.f32 0.0, %v4995
        %v4997 = vpop.f32.mrb[0].mxu0
        %4998 = vmatprep.mubr.bf16.mxu0 0
        %4999 = vmatmul.mubr.bf16.gmra.mrb[0].mxu0 %v4937
        %v5000 = vpop.f32.mrb[0].mxu0
        %v5001 = vadd.f32 0.0, %v5000
        %v5002 = vpop.f32.mrb[0].mxu0
        %v5003 = vpop.f32.mrb[0].mxu0
        %v5004 = vadd.f32 0.0, %v5003
        %v5005 = vpop.f32.mrb[0].mxu0
        %5006 = vdwg.mxu0
        %v5007 = vadd.f32 %v4886, %v4977
        %v5008 = vadd.f32 %v4887, %v4980
        %v5009 = vadd.f32 %v4888, %v4985
        %v5010 = vadd.f32 %v4889, %v4988
        %v5011 = vadd.f32 %v4890, %v4993
        %v5012 = vadd.f32 %v4891, %v4996
        %v5013 = vadd.f32 %v4892, %v5001
        %v5014 = vadd.f32 %v4893, %v5004
        %v5015 = vld [vmem:[%s16] sm:$0x1]
        %v5017 = vlaneseq
        %v5018 = vshrl.u32 %v5017, 7
        %v5019 = vsub.s32 0, %v5018
        %v5020 = vrot.slane %v5015, %v5019
        %v5022 = vadd.f32 %v5007, %v5020
        %v5023 = vadd.f32 %v5008, %v5020
        %v5024 = vadd.f32 %v5009, %v5020
        %v5025 = vadd.f32 %v5010, %v5020
        %v5026 = vadd.f32 %v5011, %v5020
        %v5027 = vadd.f32 %v5012, %v5020
        %v5028 = vadd.f32 %v5013, %v5020
        %v5029 = vadd.f32 %v5014, %v5020
        %v5030 = vxor.u32 %v5022, 2147483648
        %v5031 = vxor.u32 %v5023, 2147483648
        %v5032 = vxor.u32 %v5024, 2147483648
        %v5033 = vxor.u32 %v5025, 2147483648
        %v5034 = vxor.u32 %v5026, 2147483648
        %v5035 = vxor.u32 %v5027, 2147483648
        %v5036 = vxor.u32 %v5028, 2147483648
        %v5037 = vxor.u32 %v5029, 2147483648
        %v5038 = vmul.f32 %v5030, 1.442695
        %v5039 = vpow.pop %v5038
        %v5040 = vmul.f32 %v5031, 1.442695
        %v5041 = vpow.pop %v5040
        %v5042 = vmul.f32 %v5032, 1.442695
        %v5043 = vpow.pop %v5042
        %v5044 = vmul.f32 %v5033, 1.442695
        %v5045 = vpow.pop %v5044
        %v5046 = vmul.f32 %v5034, 1.442695
        %v5047 = vpow.pop %v5046
        %v5048 = vmul.f32 %v5035, 1.442695
        %v5049 = vpow.pop %v5048
        %v5050 = vmul.f32 %v5036, 1.442695
        %v5051 = vpow.pop %v5050
        %v5052 = vmul.f32 %v5037, 1.442695
        %v5053 = vpow.pop %v5052
        %v5054 = vadd.f32 %v5039, 1.0
        %v5055 = vadd.f32 %v5041, 1.0
        %v5056 = vadd.f32 %v5043, 1.0
        %v5057 = vadd.f32 %v5045, 1.0
        %v5058 = vadd.f32 %v5047, 1.0
        %v5059 = vadd.f32 %v5049, 1.0
        %v5060 = vadd.f32 %v5051, 1.0
        %v5061 = vadd.f32 %v5053, 1.0
        %v5062 = vrcp.pop %v5054
        %v5063 = vmul.f32 1.0, %v5062
        %v5064 = vrcp.pop %v5055
        %v5065 = vmul.f32 1.0, %v5064
        %v5066 = vrcp.pop %v5056
        %v5067 = vmul.f32 1.0, %v5066
        %v5068 = vrcp.pop %v5057
        %v5069 = vmul.f32 1.0, %v5068
        %v5070 = vrcp.pop %v5058
        %v5071 = vmul.f32 1.0, %v5070
        %v5072 = vrcp.pop %v5059
        %v5073 = vmul.f32 1.0, %v5072
        %v5074 = vrcp.pop %v5060
        %v5075 = vmul.f32 1.0, %v5074
        %v5076 = vrcp.pop %v5061
        %v5077 = vmul.f32 1.0, %v5076
        %v5078 = vmul.f32 %v5022, %v5063
        %v5079 = vmul.f32 %v5023, %v5065
        %v5080 = vmul.f32 %v5024, %v5067
        %v5081 = vmul.f32 %v5025, %v5069
        %v5082 = vmul.f32 %v5026, %v5071
        %v5083 = vmul.f32 %v5027, %v5073
        %v5084 = vmul.f32 %v5028, %v5075
        %v5085 = vmul.f32 %v5029, %v5077
        %v5086 = vld [vmem:[%s17] sm:$0xf]
        %v5087 = vpack.c.bf16 %v5079, %v5078
        %v5088 = vpack.c.bf16 %v5081, %v5080
        %v5089 = vpack.c.bf16 %v5083, %v5082
        %v5090 = vpack.c.bf16 %v5085, %v5084
        %v5091 = vld [vmem:[%s18] sm:$0xf]
        %5096 = vrot.lane.b32.xlu0 %v964, 120
        %v5097 = vpop.permute.xlu0 %5096
        %5098 = vrot.lane.b32.xlu0 %v965, 120
        %v5099 = vpop.permute.xlu0 %5098
        %5100 = vrot.lane.b32.xlu0 %v966, 120
        %v5101 = vpop.permute.xlu0 %5100
        %5102 = vrot.lane.b32.xlu0 %v967, 120
        %v5103 = vpop.permute.xlu0 %5102
        %v5105 = vsel %vm731, %v5097, 0
        %v5108 = vsel %vm731, %v5099, 0
        %v5111 = vsel %vm731, %v5101, 0
        %v5114 = vsel %vm731, %v5103, 0
        %v5117 = vsel %vm744, %v5091, 0
        %5119 = vmatprep.subr.bf16.mxu0 0
        %5120 = vmatpush1.bf16.msra.mxu0 %v5117
        %5121 = vmatprep.subr.bf16.mxu0 0
        %5122 = vmatpush1.bf16.msra.mxu0 0
        %5123 = vmatprep.subr.bf16.mxu0 0
        %5124 = vmatpush1.bf16.msra.mxu0 0
        %5125 = vmatprep.subr.bf16.mxu0 0
        %5126 = vmatpush1.bf16.msra.mxu0 0
        %5127 = vmatprep.subr.bf16.mxu0 0
        %5128 = vmatpush1.bf16.msra.mxu0 0
        %5129 = vmatprep.subr.bf16.mxu0 0
        %5130 = vmatpush1.bf16.msra.mxu0 0
        %5131 = vmatprep.subr.bf16.mxu0 0
        %5132 = vmatpush1.bf16.msra.mxu0 0
        %5133 = vmatprep.subr.bf16.mxu0 0
        %5134 = vmatpush1.bf16.msra.mxu0 0
        %5135 = vmatprep.subr.bf16.mxu0 0
        %5136 = vmatpush1.bf16.msra.mxu0 0
        %5137 = vmatprep.subr.bf16.mxu0 0
        %5138 = vmatpush1.bf16.msra.mxu0 0
        %5139 = vmatprep.subr.bf16.mxu0 0
        %5140 = vmatpush1.bf16.msra.mxu0 0
        %5141 = vmatprep.subr.bf16.mxu0 0
        %5142 = vmatpush1.bf16.msra.mxu0 0
        %5143 = vmatprep.subr.bf16.mxu0 0
        %5144 = vmatpush1.bf16.msra.mxu0 0
        %5145 = vmatprep.subr.bf16.mxu0 0
        %5146 = vmatpush1.bf16.msra.mxu0 0
        %5147 = vmatprep.subr.bf16.mxu0 0
        %5148 = vmatpush1.bf16.msra.mxu0 0
        %5149 = vmatprep.subr.bf16.mxu0 0
        %5150 = vmatpush1.bf16.msra.mxu0 0
        %5151 = vmatprep.mubr.bf16.mxu0 0
        %5152 = vmatmul.mubr.bf16.gmra.mrb[0].mxu0 %v5105
        %v5153 = vpop.f32.mrb[0].mxu0
        %v5154 = vadd.f32 0.0, %v5153
        %v5155 = vpop.f32.mrb[0].mxu0
        %v5156 = vpop.f32.mrb[0].mxu0
        %v5157 = vadd.f32 0.0, %v5156
        %v5158 = vpop.f32.mrb[0].mxu0
        %5159 = vmatprep.mubr.bf16.mxu0 0
        %5160 = vmatmul.mubr.bf16.gmra.mrb[0].mxu0 %v5108
        %v5161 = vpop.f32.mrb[0].mxu0
        %v5162 = vadd.f32 0.0, %v5161
        %v5163 = vpop.f32.mrb[0].mxu0
        %v5164 = vpop.f32.mrb[0].mxu0
        %v5165 = vadd.f32 0.0, %v5164
        %v5166 = vpop.f32.mrb[0].mxu0
        %5167 = vmatprep.mubr.bf16.mxu0 0
        %5168 = vmatmul.mubr.bf16.gmra.mrb[0].mxu0 %v5111
        %v5169 = vpop.f32.mrb[0].mxu0
        %v5170 = vadd.f32 0.0, %v5169
        %v5171 = vpop.f32.mrb[0].mxu0
        %v5172 = vpop.f32.mrb[0].mxu0
        %v5173 = vadd.f32 0.0, %v5172
        %v5174 = vpop.f32.mrb[0].mxu0
        %5175 = vmatprep.mubr.bf16.mxu0 0
        %5176 = vmatmul.mubr.bf16.gmra.mrb[0].mxu0 %v5114
        %v5177 = vpop.f32.mrb[0].mxu0
        %v5178 = vadd.f32 0.0, %v5177
        %v5179 = vpop.f32.mrb[0].mxu0
        %v5180 = vpop.f32.mrb[0].mxu0
        %v5181 = vadd.f32 0.0, %v5180
        %v5182 = vpop.f32.mrb[0].mxu0
        %5183 = vdwg.mxu0
        %v5185 = vsel %vm731, %v5087, 0
        %v5188 = vsel %vm731, %v5088, 0
        %v5191 = vsel %vm731, %v5089, 0
        %v5194 = vsel %vm731, %v5090, 0
        %v5197 = vsel %vm744, %v5086, 0
        %5199 = vmatprep.subr.bf16.mxu0 0
        %5200 = vmatpush1.bf16.msra.mxu0 %v5197
        %5201 = vmatprep.subr.bf16.mxu0 0
        %5202 = vmatpush1.bf16.msra.mxu0 0
        %5203 = vmatprep.subr.bf16.mxu0 0
        %5204 = vmatpush1.bf16.msra.mxu0 0
        %5205 = vmatprep.subr.bf16.mxu0 0
        %5206 = vmatpush1.bf16.msra.mxu0 0
        %5207 = vmatprep.subr.bf16.mxu0 0
        %5208 = vmatpush1.bf16.msra.mxu0 0
        %5209 = vmatprep.subr.bf16.mxu0 0
        %5210 = vmatpush1.bf16.msra.mxu0 0
        %5211 = vmatprep.subr.bf16.mxu0 0
        %5212 = vmatpush1.bf16.msra.mxu0 0
        %5213 = vmatprep.subr.bf16.mxu0 0
        %5214 = vmatpush1.bf16.msra.mxu0 0
        %5215 = vmatprep.subr.bf16.mxu0 0
        %5216 = vmatpush1.bf16.msra.mxu0 0
        %5217 = vmatprep.subr.bf16.mxu0 0
        %5218 = vmatpush1.bf16.msra.mxu0 0
        %5219 = vmatprep.subr.bf16.mxu0 0
        %5220 = vmatpush1.bf16.msra.mxu0 0
        %5221 = vmatprep.subr.bf16.mxu0 0
        %5222 = vmatpush1.bf16.msra.mxu0 0
        %5223 = vmatprep.subr.bf16.mxu0 0
        %5224 = vmatpush1.bf16.msra.mxu0 0
        %5225 = vmatprep.subr.bf16.mxu0 0
        %5226 = vmatpush1.bf16.msra.mxu0 0
        %5227 = vmatprep.subr.bf16.mxu0 0
        %5228 = vmatpush1.bf16.msra.mxu0 0
        %5229 = vmatprep.subr.bf16.mxu0 0
        %5230 = vmatpush1.bf16.msra.mxu0 0
        %5231 = vmatprep.mubr.bf16.mxu0 0
        %5232 = vmatmul.mubr.bf16.gmra.mrb[0].mxu0 %v5185
        %v5233 = vpop.f32.mrb[0].mxu0
        %v5234 = vadd.f32 %v5154, %v5233
        %v5235 = vpop.f32.mrb[0].mxu0
        %v5236 = vpop.f32.mrb[0].mxu0
        %v5237 = vadd.f32 %v5157, %v5236
        %v5238 = vpop.f32.mrb[0].mxu0
        %5239 = vmatprep.mubr.bf16.mxu0 0
        %5240 = vmatmul.mubr.bf16.gmra.mrb[0].mxu0 %v5188
        %v5241 = vpop.f32.mrb[0].mxu0
        %v5242 = vadd.f32 %v5162, %v5241
        %v5243 = vpop.f32.mrb[0].mxu0
        %v5244 = vpop.f32.mrb[0].mxu0
        %v5245 = vadd.f32 %v5165, %v5244
        %v5246 = vpop.f32.mrb[0].mxu0
        %5247 = vmatprep.mubr.bf16.mxu0 0
        %5248 = vmatmul.mubr.bf16.gmra.mrb[0].mxu0 %v5191
        %v5249 = vpop.f32.mrb[0].mxu0
        %v5250 = vadd.f32 %v5170, %v5249
        %v5251 = vpop.f32.mrb[0].mxu0
        %v5252 = vpop.f32.mrb[0].mxu0
        %v5253 = vadd.f32 %v5173, %v5252
        %v5254 = vpop.f32.mrb[0].mxu0
        %5255 = vmatprep.mubr.bf16.mxu0 0
        %5256 = vmatmul.mubr.bf16.gmra.mrb[0].mxu0 %v5194
        %v5257 = vpop.f32.mrb[0].mxu0
        %v5258 = vadd.f32 %v5178, %v5257
        %v5259 = vpop.f32.mrb[0].mxu0
        %v5260 = vpop.f32.mrb[0].mxu0
        %v5261 = vadd.f32 %v5181, %v5260
        %v5262 = vpop.f32.mrb[0].mxu0
        %5263 = vdwg.mxu0
        %v5264 = vld [vmem:[%s19] sm:$0x1]
        %v5266 = vlaneseq
        %v5267 = vshrl.u32 %v5266, 7
        %v5268 = vsub.s32 0, %v5267
        %v5269 = vrot.slane %v5264, %v5268
        %v5271 = vadd.f32 %v5234, %v5269
        %v5272 = vadd.f32 %v5237, %v5269
        %v5273 = vadd.f32 %v5242, %v5269
        %v5274 = vadd.f32 %v5245, %v5269
        %v5275 = vadd.f32 %v5250, %v5269
        %v5276 = vadd.f32 %v5253, %v5269
        %v5277 = vadd.f32 %v5258, %v5269
        %v5278 = vadd.f32 %v5261, %v5269
        %v5279 = vxor.u32 %v5271, 2147483648
        %v5280 = vxor.u32 %v5272, 2147483648
        %v5281 = vxor.u32 %v5273, 2147483648
        %v5282 = vxor.u32 %v5274, 2147483648
        %v5283 = vxor.u32 %v5275, 2147483648
        %v5284 = vxor.u32 %v5276, 2147483648
        %v5285 = vxor.u32 %v5277, 2147483648
        %v5286 = vxor.u32 %v5278, 2147483648
        %v5287 = vmul.f32 %v5279, 1.442695
        %v5288 = vpow.pop %v5287
        %v5289 = vmul.f32 %v5280, 1.442695
        %v5290 = vpow.pop %v5289
        %v5291 = vmul.f32 %v5281, 1.442695
        %v5292 = vpow.pop %v5291
        %v5293 = vmul.f32 %v5282, 1.442695
        %v5294 = vpow.pop %v5293
        %v5295 = vmul.f32 %v5283, 1.442695
        %v5296 = vpow.pop %v5295
        %v5297 = vmul.f32 %v5284, 1.442695
        %v5298 = vpow.pop %v5297
        %v5299 = vmul.f32 %v5285, 1.442695
        %v5300 = vpow.pop %v5299
        %v5301 = vmul.f32 %v5286, 1.442695
        %v5302 = vpow.pop %v5301
        %v5303 = vadd.f32 %v5288, 1.0
        %v5304 = vadd.f32 %v5290, 1.0
        %v5305 = vadd.f32 %v5292, 1.0
        %v5306 = vadd.f32 %v5294, 1.0
        %v5307 = vadd.f32 %v5296, 1.0
        %v5308 = vadd.f32 %v5298, 1.0
        %v5309 = vadd.f32 %v5300, 1.0
        %v5310 = vadd.f32 %v5302, 1.0
        %v5311 = vrcp.pop %v5303
        %v5312 = vmul.f32 1.0, %v5311
        %v5313 = vrcp.pop %v5304
        %v5314 = vmul.f32 1.0, %v5313
        %v5315 = vrcp.pop %v5305
        %v5316 = vmul.f32 1.0, %v5315
        %v5317 = vrcp.pop %v5306
        %v5318 = vmul.f32 1.0, %v5317
        %v5319 = vrcp.pop %v5307
        %v5320 = vmul.f32 1.0, %v5319
        %v5321 = vrcp.pop %v5308
        %v5322 = vmul.f32 1.0, %v5321
        %v5323 = vrcp.pop %v5309
        %v5324 = vmul.f32 1.0, %v5323
        %v5325 = vrcp.pop %v5310
        %v5326 = vmul.f32 1.0, %v5325
        %v5327 = vmul.f32 %v5271, %v5312
        %v5328 = vmul.f32 %v5272, %v5314
        %v5329 = vmul.f32 %v5273, %v5316
        %v5330 = vmul.f32 %v5274, %v5318
        %v5331 = vmul.f32 %v5275, %v5320
        %v5332 = vmul.f32 %v5276, %v5322
        %v5333 = vmul.f32 %v5277, %v5324
        %v5334 = vmul.f32 %v5278, %v5326
        %vm5335 = vcmask 130048
        %5336 = vst.msk [vmem:[%s637] sm:$0xff] %vm5335, %v5327
        %5337 = vst.msk [vmem:[%s637 + $0x8] sm:$0xff] %vm5335, %v5328
        %5338 = vst.msk [vmem:[%s637 + $0x10] sm:$0xff] %vm5335, %v5329
        %5339 = vst.msk [vmem:[%s637 + $0x18] sm:$0xff] %vm5335, %v5330
        %5340 = vst.msk [vmem:[%s637 + $0x20] sm:$0xff] %vm5335, %v5331
        %5341 = vst.msk [vmem:[%s637 + $0x28] sm:$0xff] %vm5335, %v5332
        %5342 = vst.msk [vmem:[%s637 + $0x30] sm:$0xff] %vm5335, %v5333
        %5343 = vst.msk [vmem:[%s637 + $0x38] sm:$0xff] %vm5335, %v5334
        %s5344 = sand.u32 %s472, 1
        %s5345 = scalar_lea.sflag [#allocation4], %s5344
        %s5346 = sand.u32 %s472, 1
        %s5347 = smul.addr %s5346, 64
        %s5348 = scalar_lea.vmem [#allocation3], %s5347
        // Predicated region
        $region101: #{downsampling_block_forward.1} parent=99 // pred_check
          %p5349 = pneg %p482
        $region102: #{downsampling_block_forward.1} parent=99 // pred_check_branch
          %5351 = sbr.rel (%p5349) target = $region104
        $region103: #{downsampling_block_forward.1} parent=99 // pred_region
          %s5353 = ssub.s32 1024, 1024
          %5354 = vsyncadd %s5345, %s5353
          %s5355 = smul.addr %s34, 8
          %s5356 = smul.addr %s5355, 128
          %s5357 = scalar_lea.hbm %s20, %s5356
          %s5358 = sshll.u32 %s5348, 4
          %s5359 = int_to_ptr.vmem [resolvable:$true] %s5358
          %5364 = dma.vmem_to_hbm [thread:$0]  %s5359, 1024, %s5357, %s5345, 128, 128, 8
        $region104: #{downsampling_block_forward.1} parent=99 // pred_fallthru
          _
      $region100: #{downsampling_block_forward.1} parent=5 // pred_fallthru
        _
      %p5365 = scmp.le.s32.totalorder 2, %s29
      // Predicated region
      $region105: #{downsampling_block_forward.1} parent=5 // pred_check
        %p5366 = pneg %p5365
      $region106: #{downsampling_block_forward.1} parent=5 // pred_check_branch
        %5368 = sbr.rel (%p5366) target = $region108
      $region107: #{downsampling_block_forward.1} parent=5 // pred_region
        %s5369 = ssub.s32 %s29, 2
        // Predicated region
        $region109: #{downsampling_block_forward.1} parent=107 // pred_check
          %p5370 = pneg %p488
        $region110: #{downsampling_block_forward.1} parent=107 // pred_check_branch
          %5372 = sbr.rel (%p5370) target = $region112
        $region111: #{downsampling_block_forward.1} parent=107 // pred_region
          %s5373 = sand.u32 %s473, 1
          %s5374 = scalar_lea.sflag [#allocation4], %s5373
          %s5375 = sand.u32 %s473, 1
          %s5376 = smul.addr %s5375, 64
          %s5377 = scalar_lea.vmem [#allocation3], %s5376
          %5378 = dma.done %s5374, 1024
        $region112: #{downsampling_block_forward.1} parent=107 // pred_fallthru
          _
      $region108: #{downsampling_block_forward.1} parent=5 // pred_fallthru
        _
    $region6: #{downsampling_block_forward.1} parent=1 // loop_footer
      %s33 = sadd.s32 1, %s29
    $region7: #{downsampling_block_forward.1} parent=1 // loop_footer_branch
      %28 = sbr.rel target = $region3
    $region8: #{downsampling_block_forward.1} parent=1 // loop_exit
      _
    %5379 = vsyncpa [#allocation4], 1
    %s5380 = scalar_lea.sflag [#allocation4], 1
    %5381 = vsyncpa %s5380, 1

</llo_original>
